<compile_context>
chip_gen: v5e
topology: v5e:2x2
jax: 0.10.0
libtpu: 0.0.40
codegen_flags: <defaults>
</compile_context>

<pallas_src>
import math

import jax
import jax.numpy as jnp
from jax.experimental import pallas as pl
from jax.experimental.pallas import tpu as pltpu


def _make_kernel(H, W, Cp):
    def conv3x3(dx_slabs_bf16, w_ref, b_row):
        # dx_slabs_bf16: 3 x (H+2, W, Cp) bf16 slabs (dx = 0, 1, 2)
        # w_ref:         (9*Cp, Cp) bf16, rows ordered as (dy*3 + dx)*Cp + cin
        # b_row:         (Cp,) f32
        taps = []
        for dy in range(3):
            for dx in range(3):
                taps.append(dx_slabs_bf16[dx][dy:dy + H])
        slab = jnp.concatenate(taps, axis=-1)              # (H, W, 9*Cp) bf16
        out = jnp.einsum("hwk,ko->hwo", slab, w_ref[...],
                         preferred_element_type=jnp.float32)
        return out + b_row[None, None, :]

    def kernel(xpad_ref, w1_ref, b1_ref, w2_ref, b2_ref, o_ref, mid_ref):
        # ---- conv1 + ReLU -------------------------------------------------
        # 3 sublane-shifted (dx) slabs of the padded input.  The dx=1 slab is
        # loaded in f32 so the identity (center tap == x) stays exact, then
        # every slab is cast to bf16 once and reused by its 3 dy taps.
        slab1_f32 = xpad_ref[:, 1:1 + W, :]
        identity = slab1_f32[1:1 + H]                      # == x, f32
        x_slabs = [xpad_ref[:, 0:W, :].astype(jnp.bfloat16),
                   slab1_f32.astype(jnp.bfloat16),
                   xpad_ref[:, 2:2 + W, :].astype(jnp.bfloat16)]
        h1 = jnp.maximum(conv3x3(x_slabs, w1_ref, b1_ref[0]), 0.0)

        # ---- re-pad the intermediate activation into VMEM scratch ---------
        # Zero only the 1-pixel border; the interior is fully overwritten.
        zrow = jnp.zeros((1, W + 2, Cp), jnp.float32)
        zcol = jnp.zeros((H, 1, Cp), jnp.float32)
        mid_ref[0:1, :, :] = zrow
        mid_ref[H + 1:H + 2, :, :] = zrow
        mid_ref[1:1 + H, 0:1, :] = zcol
        mid_ref[1:1 + H, W + 1:W + 2, :] = zcol
        mid_ref[1:1 + H, 1:1 + W, :] = h1

        # ---- conv2 (res_scale already folded into w2/b2) + residual -------
        m_slabs = [mid_ref[:, dx:dx + W, :].astype(jnp.bfloat16)
                   for dx in range(3)]
        h2 = conv3x3(m_slabs, w2_ref, b2_ref[0])

        o_ref[...] = (identity + h2).astype(o_ref.dtype)

    return kernel


def residual_block_nobn(x_nchw, w1, b1, w2, b2, res_scale=1.0):
    """x_nchw: (N, C, H, W); w*: (C, C, 3, 3) torch layout; b*: (C,)."""
    N, C, H, W = x_nchw.shape
    Cp = ((C + 127) // 128) * 128            # lane-dense channel dim

    # NCHW -> NHWC, spatial pad 1 (conv pad=1), channel pad C -> Cp
    x = jnp.transpose(x_nchw, (0, 2, 3, 1))
    xpad = jnp.pad(x, ((0, 0), (1, 1), (1, 1), (0, Cp - C)))

    # torch (Cout, Cin, kh, kw) -> (kh, kw, Cin, Cout) -> pad chans -> (9*Cp, Cp)
    def prep_w(w, scale):
        wt = jnp.transpose(w, (2, 3, 1, 0)).astype(jnp.float32) * scale
        wt = jnp.pad(wt, ((0, 0), (0, 0), (0, Cp - C), (0, Cp - C)))
        return wt.reshape(9 * Cp, Cp).astype(jnp.bfloat16)

    w1r = prep_w(w1, 1.0)
    w2r = prep_w(w2, float(res_scale))                     # res_scale folded in
    b1r = jnp.pad(b1.astype(jnp.float32), (0, Cp - C)).reshape(1, Cp)
    b2r = (jnp.pad(b2.astype(jnp.float32), (0, Cp - C))
           * float(res_scale)).reshape(1, Cp)

    kernel = _make_kernel(H, W, Cp)

    out_nhwc = pl.pallas_call(
        kernel,
        out_shape=jax.ShapeDtypeStruct((N, H, W, Cp), x.dtype),
        grid_spec=pltpu.PrefetchScalarGridSpec(
            num_scalar_prefetch=0,
            grid=(N,),
            in_specs=[
                pl.BlockSpec((pl.Squeezed(), H + 2, W + 2, Cp),
                             lambda n: (n, 0, 0, 0)),
                pl.BlockSpec((9 * Cp, Cp), lambda n: (0, 0)),
                pl.BlockSpec((1, Cp), lambda n: (0, 0)),
                pl.BlockSpec((9 * Cp, Cp), lambda n: (0, 0)),
                pl.BlockSpec((1, Cp), lambda n: (0, 0)),
            ],
            out_specs=pl.BlockSpec((pl.Squeezed(), H, W, Cp),
                                   lambda n: (n, 0, 0, 0)),
            scratch_shapes=[pltpu.VMEM((H + 2, W + 2, Cp), jnp.float32)],
        ),
        compiler_params=pltpu.CompilerParams(
            dimension_semantics=("parallel",),
            vmem_limit_bytes=64 * 1024 * 1024),
    )(xpad, w1r, b1r, w2r, b2r)

    # drop channel padding, back to NCHW
    return jnp.transpose(out_nhwc[..., :C], (0, 3, 1, 2))


def _reference(x_nchw, w1, b1, w2, b2, res_scale=1.0):
    """Pure-JAX reference (lax conv, NCHW) mirroring the PyTorch forward."""
    dn = jax.lax.conv_dimension_numbers(x_nchw.shape, w1.shape,
                                        ("NCHW", "OIHW", "NCHW"))
    def conv(x, w, b):
        y = jax.lax.conv_general_dilated(x, w, (1, 1), ((1, 1), (1, 1)),
                                         dimension_numbers=dn)
        return y + b[None, :, None, None]
    out = conv(jnp.maximum(conv(x_nchw, w1, b1), 0.0), w2, b2)
    return x_nchw + out * res_scale


if __name__ == "__main__":
    # ResidualBlockNoBN(num_feat=4, res_scale=1.0, pytorch_init=False)
    N, C, H, W = 2, 4, 16, 16
    res_scale = 1.0

    key = jax.random.PRNGKey(0)
    kx, k1, k2 = jax.random.split(key, 3)

    # default_init_weights: kaiming_normal_ (fan_in, gain=sqrt(2)) then *0.1,
    # bias filled with 0.
    fan_in = C * 3 * 3
    std = math.sqrt(2.0 / fan_in)
    w1 = jax.random.normal(k1, (C, C, 3, 3), jnp.float32) * std * 0.1
    w2 = jax.random.normal(k2, (C, C, 3, 3), jnp.float32) * std * 0.1
    b1 = jnp.zeros((C,), jnp.float32)
    b2 = jnp.zeros((C,), jnp.float32)

    x = jax.random.normal(kx, (N, C, H, W), jnp.float32)

    out = residual_block_nobn(x, w1, b1, w2, b2, res_scale)
    out = jax.block_until_ready(out)

    ref = _reference(x, w1, b1, w2, b2, res_scale)
    assert out.shape == (N, C, H, W)
    # bf16 MXU operands with f32 accumulation -> bf16-level tolerance.
    assert jnp.allclose(out, ref, atol=1e-2, rtol=1e-2), "mismatch vs reference"

    print("KERNEL_OK")
</pallas_src>

<mosaic_0001>
module attributes {stable_mosaic.version = 11 : i64} {
  func.func @kernel(%arg0: i32, %arg1: memref<1x18x18x128xf32, #tpu.memory_space<vmem>>, %arg2: memref<1152x128xbf16, #tpu.memory_space<vmem>>, %arg3: memref<1x128xf32, #tpu.memory_space<vmem>>, %arg4: memref<1152x128xbf16, #tpu.memory_space<vmem>>, %arg5: memref<1x128xf32, #tpu.memory_space<vmem>>, %arg6: memref<1x16x16x128xf32, #tpu.memory_space<vmem>>, %arg7: memref<18x18x128xf32, #tpu.memory_space<vmem>>) attributes {dimension_semantics = [#tpu.dimension_semantics<parallel>], iteration_bounds = array<i64: 2>, scalar_prefetch = 0 : i64, scratch_operands = 1 : i64, tpu.core_type = #tpu.core_type<tc>, window_params = [{transform_indices = @transform_0, window_bounds = array<i64: 1, 18, 18, 128>}, {pipeline_mode = #tpu.pipeline_mode<synchronous>, transform_indices = @transform_1, window_bounds = array<i64: 1152, 128>}, {pipeline_mode = #tpu.pipeline_mode<synchronous>, transform_indices = @transform_2, window_bounds = array<i64: 1, 128>}, {pipeline_mode = #tpu.pipeline_mode<synchronous>, transform_indices = @transform_3, window_bounds = array<i64: 1152, 128>}, {pipeline_mode = #tpu.pipeline_mode<synchronous>, transform_indices = @transform_4, window_bounds = array<i64: 1, 128>}, {transform_indices = @transform_5, window_bounds = array<i64: 1, 16, 16, 128>}]} {
    %c0 = arith.constant 0 : index
    %c0_0 = arith.constant 0 : index
    %c1 = arith.constant 1 : index
    %c0_1 = arith.constant 0 : index
    %0 = vector.load %arg1[%c0, %c0_0, %c1, %c0_1] : memref<1x18x18x128xf32, #tpu.memory_space<vmem>>, vector<1x18x16x128xf32>
    %1 = vector.shape_cast %0 : vector<1x18x16x128xf32> to vector<18x16x128xf32>
    %2 = vector.extract_strided_slice %1 {offsets = [1, 0, 0], sizes = [16, 16, 128], strides = [1, 1, 1]} : vector<18x16x128xf32> to vector<16x16x128xf32>
    %c0_2 = arith.constant 0 : index
    %c0_3 = arith.constant 0 : index
    %c0_4 = arith.constant 0 : index
    %c0_5 = arith.constant 0 : index
    %3 = vector.load %arg1[%c0_2, %c0_3, %c0_4, %c0_5] : memref<1x18x18x128xf32, #tpu.memory_space<vmem>>, vector<1x18x16x128xf32>
    %4 = vector.shape_cast %3 : vector<1x18x16x128xf32> to vector<18x16x128xf32>
    %5 = arith.truncf %4 : vector<18x16x128xf32> to vector<18x16x128xbf16>
    %6 = arith.truncf %1 : vector<18x16x128xf32> to vector<18x16x128xbf16>
    %c0_6 = arith.constant 0 : index
    %c0_7 = arith.constant 0 : index
    %c2 = arith.constant 2 : index
    %c0_8 = arith.constant 0 : index
    %7 = vector.load %arg1[%c0_6, %c0_7, %c2, %c0_8] : memref<1x18x18x128xf32, #tpu.memory_space<vmem>>, vector<1x18x16x128xf32>
    %8 = vector.shape_cast %7 : vector<1x18x16x128xf32> to vector<18x16x128xf32>
    %9 = arith.truncf %8 : vector<18x16x128xf32> to vector<18x16x128xbf16>
    %c0_9 = arith.constant 0 : index
    %c0_10 = arith.constant 0 : index
    %10 = vector.load %arg3[%c0_9, %c0_10] : memref<1x128xf32, #tpu.memory_space<vmem>>, vector<1x128xf32>
    %11 = vector.shape_cast %10 : vector<1x128xf32> to vector<128xf32>
    %12 = vector.extract_strided_slice %5 {offsets = [0, 0, 0], sizes = [16, 16, 128], strides = [1, 1, 1]} : vector<18x16x128xbf16> to vector<16x16x128xbf16>
    %13 = vector.extract_strided_slice %6 {offsets = [0, 0, 0], sizes = [16, 16, 128], strides = [1, 1, 1]} : vector<18x16x128xbf16> to vector<16x16x128xbf16>
    %14 = vector.extract_strided_slice %9 {offsets = [0, 0, 0], sizes = [16, 16, 128], strides = [1, 1, 1]} : vector<18x16x128xbf16> to vector<16x16x128xbf16>
    %15 = vector.extract_strided_slice %5 {offsets = [1, 0, 0], sizes = [16, 16, 128], strides = [1, 1, 1]} : vector<18x16x128xbf16> to vector<16x16x128xbf16>
    %16 = vector.extract_strided_slice %6 {offsets = [1, 0, 0], sizes = [16, 16, 128], strides = [1, 1, 1]} : vector<18x16x128xbf16> to vector<16x16x128xbf16>
    %17 = vector.extract_strided_slice %9 {offsets = [1, 0, 0], sizes = [16, 16, 128], strides = [1, 1, 1]} : vector<18x16x128xbf16> to vector<16x16x128xbf16>
    %18 = vector.extract_strided_slice %5 {offsets = [2, 0, 0], sizes = [16, 16, 128], strides = [1, 1, 1]} : vector<18x16x128xbf16> to vector<16x16x128xbf16>
    %19 = vector.extract_strided_slice %6 {offsets = [2, 0, 0], sizes = [16, 16, 128], strides = [1, 1, 1]} : vector<18x16x128xbf16> to vector<16x16x128xbf16>
    %20 = vector.extract_strided_slice %9 {offsets = [2, 0, 0], sizes = [16, 16, 128], strides = [1, 1, 1]} : vector<18x16x128xbf16> to vector<16x16x128xbf16>
    %21 = tpu.concatenate %12, %13, %14, %15, %16, %17, %18, %19, %20 in 2 : vector<16x16x128xbf16>, vector<16x16x128xbf16>, vector<16x16x128xbf16>, vector<16x16x128xbf16>, vector<16x16x128xbf16>, vector<16x16x128xbf16>, vector<16x16x128xbf16>, vector<16x16x128xbf16>, vector<16x16x128xbf16> -> vector<16x16x1152xbf16>
    %c0_11 = arith.constant 0 : index
    %c0_12 = arith.constant 0 : index
    %22 = vector.load %arg2[%c0_11, %c0_12] : memref<1152x128xbf16, #tpu.memory_space<vmem>>, vector<1152x128xbf16>
    "tpu.trace_start"() <{level = 10 : i32, message = "hwk,ko->hwo"}> : () -> ()
    %cst = arith.constant dense<0.000000e+00> : vector<16x16x128xf32>
    %23 = tpu.matmul %21, %22, %cst {dimension_numbers = #tpu.dot_dimension_numbers<[2], [0], [0, 1], [1], [0, 0, 0, 1, 1, 1], [], []>} : vector<16x16x1152xbf16>, vector<1152x128xbf16>, vector<16x16x128xf32> -> vector<16x16x128xf32>
    "tpu.trace_stop"() : () -> ()
    %24 = vector.shape_cast %11 : vector<128xf32> to vector<1x1x128xf32>
    %25 = vector.broadcast %24 : vector<1x1x128xf32> to vector<16x16x128xf32>
    %26 = arith.addf %23, %25 : vector<16x16x128xf32>
    %cst_13 = arith.constant 0.000000e+00 : f32
    %27 = vector.broadcast %cst_13 : f32 to vector<16x16x128xf32>
    %28 = arith.maximumf %26, %27 : vector<16x16x128xf32>
    %cst_14 = arith.constant 0.000000e+00 : f32
    %29 = vector.broadcast %cst_14 : f32 to vector<1x18x128xf32>
    %cst_15 = arith.constant 0.000000e+00 : f32
    %30 = vector.broadcast %cst_15 : f32 to vector<16x1x128xf32>
    %c0_16 = arith.constant 0 : index
    %c0_17 = arith.constant 0 : index
    %c0_18 = arith.constant 0 : index
    %31 = vector.load %arg7[%c0_16, %c0_17, %c0_18] : memref<18x18x128xf32, #tpu.memory_space<vmem>>, vector<1x18x128xf32>
    tpu.vector_store %arg7[%c0_16, %c0_17, %c0_18], %29 {strides = array<i32>} : memref<18x18x128xf32, #tpu.memory_space<vmem>>, vector<1x18x128xf32>,
    %c17 = arith.constant 17 : index
    %c0_19 = arith.constant 0 : index
    %c0_20 = arith.constant 0 : index
    %32 = vector.load %arg7[%c17, %c0_19, %c0_20] : memref<18x18x128xf32, #tpu.memory_space<vmem>>, vector<1x18x128xf32>
    tpu.vector_store %arg7[%c17, %c0_19, %c0_20], %29 {strides = array<i32>} : memref<18x18x128xf32, #tpu.memory_space<vmem>>, vector<1x18x128xf32>,
    %c1_21 = arith.constant 1 : index
    %c0_22 = arith.constant 0 : index
    %c0_23 = arith.constant 0 : index
    %33 = vector.load %arg7[%c1_21, %c0_22, %c0_23] : memref<18x18x128xf32, #tpu.memory_space<vmem>>, vector<16x1x128xf32>
    tpu.vector_store %arg7[%c1_21, %c0_22, %c0_23], %30 {strides = array<i32>} : memref<18x18x128xf32, #tpu.memory_space<vmem>>, vector<16x1x128xf32>,
    %c1_24 = arith.constant 1 : index
    %c17_25 = arith.constant 17 : index
    %c0_26 = arith.constant 0 : index
    %34 = vector.load %arg7[%c1_24, %c17_25, %c0_26] : memref<18x18x128xf32, #tpu.memory_space<vmem>>, vector<16x1x128xf32>
    tpu.vector_store %arg7[%c1_24, %c17_25, %c0_26], %30 {strides = array<i32>} : memref<18x18x128xf32, #tpu.memory_space<vmem>>, vector<16x1x128xf32>,
    %c1_27 = arith.constant 1 : index
    %c1_28 = arith.constant 1 : index
    %c0_29 = arith.constant 0 : index
    %35 = vector.load %arg7[%c1_27, %c1_28, %c0_29] : memref<18x18x128xf32, #tpu.memory_space<vmem>>, vector<16x16x128xf32>
    tpu.vector_store %arg7[%c1_27, %c1_28, %c0_29], %28 {strides = array<i32>} : memref<18x18x128xf32, #tpu.memory_space<vmem>>, vector<16x16x128xf32>,
    %c0_30 = arith.constant 0 : index
    %c0_31 = arith.constant 0 : index
    %c0_32 = arith.constant 0 : index
    %36 = vector.load %arg7[%c0_30, %c0_31, %c0_32] : memref<18x18x128xf32, #tpu.memory_space<vmem>>, vector<18x16x128xf32>
    %37 = arith.truncf %36 : vector<18x16x128xf32> to vector<18x16x128xbf16>
    %c0_33 = arith.constant 0 : index
    %c1_34 = arith.constant 1 : index
    %c0_35 = arith.constant 0 : index
    %38 = vector.load %arg7[%c0_33, %c1_34, %c0_35] : memref<18x18x128xf32, #tpu.memory_space<vmem>>, vector<18x16x128xf32>
    %39 = arith.truncf %38 : vector<18x16x128xf32> to vector<18x16x128xbf16>
    %c0_36 = arith.constant 0 : index
    %c2_37 = arith.constant 2 : index
    %c0_38 = arith.constant 0 : index
    %40 = vector.load %arg7[%c0_36, %c2_37, %c0_38] : memref<18x18x128xf32, #tpu.memory_space<vmem>>, vector<18x16x128xf32>
    %41 = arith.truncf %40 : vector<18x16x128xf32> to vector<18x16x128xbf16>
    %c0_39 = arith.constant 0 : index
    %c0_40 = arith.constant 0 : index
    %42 = vector.load %arg5[%c0_39, %c0_40] : memref<1x128xf32, #tpu.memory_space<vmem>>, vector<1x128xf32>
    %43 = vector.shape_cast %42 : vector<1x128xf32> to vector<128xf32>
    %44 = vector.extract_strided_slice %37 {offsets = [0, 0, 0], sizes = [16, 16, 128], strides = [1, 1, 1]} : vector<18x16x128xbf16> to vector<16x16x128xbf16>
    %45 = vector.extract_strided_slice %39 {offsets = [0, 0, 0], sizes = [16, 16, 128], strides = [1, 1, 1]} : vector<18x16x128xbf16> to vector<16x16x128xbf16>
    %46 = vector.extract_strided_slice %41 {offsets = [0, 0, 0], sizes = [16, 16, 128], strides = [1, 1, 1]} : vector<18x16x128xbf16> to vector<16x16x128xbf16>
    %47 = vector.extract_strided_slice %37 {offsets = [1, 0, 0], sizes = [16, 16, 128], strides = [1, 1, 1]} : vector<18x16x128xbf16> to vector<16x16x128xbf16>
    %48 = vector.extract_strided_slice %39 {offsets = [1, 0, 0], sizes = [16, 16, 128], strides = [1, 1, 1]} : vector<18x16x128xbf16> to vector<16x16x128xbf16>
    %49 = vector.extract_strided_slice %41 {offsets = [1, 0, 0], sizes = [16, 16, 128], strides = [1, 1, 1]} : vector<18x16x128xbf16> to vector<16x16x128xbf16>
    %50 = vector.extract_strided_slice %37 {offsets = [2, 0, 0], sizes = [16, 16, 128], strides = [1, 1, 1]} : vector<18x16x128xbf16> to vector<16x16x128xbf16>
    %51 = vector.extract_strided_slice %39 {offsets = [2, 0, 0], sizes = [16, 16, 128], strides = [1, 1, 1]} : vector<18x16x128xbf16> to vector<16x16x128xbf16>
    %52 = vector.extract_strided_slice %41 {offsets = [2, 0, 0], sizes = [16, 16, 128], strides = [1, 1, 1]} : vector<18x16x128xbf16> to vector<16x16x128xbf16>
    %53 = tpu.concatenate %44, %45, %46, %47, %48, %49, %50, %51, %52 in 2 : vector<16x16x128xbf16>, vector<16x16x128xbf16>, vector<16x16x128xbf16>, vector<16x16x128xbf16>, vector<16x16x128xbf16>, vector<16x16x128xbf16>, vector<16x16x128xbf16>, vector<16x16x128xbf16>, vector<16x16x128xbf16> -> vector<16x16x1152xbf16>
    %c0_41 = arith.constant 0 : index
    %c0_42 = arith.constant 0 : index
    %54 = vector.load %arg4[%c0_41, %c0_42] : memref<1152x128xbf16, #tpu.memory_space<vmem>>, vector<1152x128xbf16>
    "tpu.trace_start"() <{level = 10 : i32, message = "hwk,ko->hwo"}> : () -> ()
    %cst_43 = arith.constant dense<0.000000e+00> : vector<16x16x128xf32>
    %55 = tpu.matmul %53, %54, %cst_43 {dimension_numbers = #tpu.dot_dimension_numbers<[2], [0], [0, 1], [1], [0, 0, 0, 1, 1, 1], [], []>} : vector<16x16x1152xbf16>, vector<1152x128xbf16>, vector<16x16x128xf32> -> vector<16x16x128xf32>
    "tpu.trace_stop"() : () -> ()
    %56 = vector.shape_cast %43 : vector<128xf32> to vector<1x1x128xf32>
    %57 = vector.broadcast %56 : vector<1x1x128xf32> to vector<16x16x128xf32>
    %58 = arith.addf %55, %57 : vector<16x16x128xf32>
    %59 = arith.addf %2, %58 : vector<16x16x128xf32>
    %c0_44 = arith.constant 0 : index
    %c0_45 = arith.constant 0 : index
    %c0_46 = arith.constant 0 : index
    %c0_47 = arith.constant 0 : index
    %60 = vector.load %arg6[%c0_44, %c0_45, %c0_46, %c0_47] : memref<1x16x16x128xf32, #tpu.memory_space<vmem>>, vector<1x16x16x128xf32>
    %61 = vector.shape_cast %60 : vector<1x16x16x128xf32> to vector<16x16x128xf32>
    %62 = vector.shape_cast %59 : vector<16x16x128xf32> to vector<1x16x16x128xf32>
    tpu.vector_store %arg6[%c0_44, %c0_45, %c0_46, %c0_47], %62 {strides = array<i32>} : memref<1x16x16x128xf32, #tpu.memory_space<vmem>>, vector<1x16x16x128xf32>,
    return
  }
  func.func @transform_0(%arg0: i32) -> (i32, i32, i32, i32) {
    %c0_i32 = arith.constant 0 : i32
    %c0_i32_0 = arith.constant 0 : i32
    %c0_i32_1 = arith.constant 0 : i32
    %c0_i32_2 = arith.constant 0 : i32
    return %arg0, %c0_i32, %c0_i32_0, %c0_i32_1 : i32, i32, i32, i32
  }
  func.func @transform_1(%arg0: i32) -> (i32, i32) {
    %c0_i32 = arith.constant 0 : i32
    %c0_i32_0 = arith.constant 0 : i32
    %c0_i32_1 = arith.constant 0 : i32
    return %c0_i32, %c0_i32_0 : i32, i32
  }
  func.func @transform_2(%arg0: i32) -> (i32, i32) {
    %c0_i32 = arith.constant 0 : i32
    %c0_i32_0 = arith.constant 0 : i32
    %c0_i32_1 = arith.constant 0 : i32
    return %c0_i32, %c0_i32_0 : i32, i32
  }
  func.func @transform_3(%arg0: i32) -> (i32, i32) {
    %c0_i32 = arith.constant 0 : i32
    %c0_i32_0 = arith.constant 0 : i32
    %c0_i32_1 = arith.constant 0 : i32
    return %c0_i32, %c0_i32_0 : i32, i32
  }
  func.func @transform_4(%arg0: i32) -> (i32, i32) {
    %c0_i32 = arith.constant 0 : i32
    %c0_i32_0 = arith.constant 0 : i32
    %c0_i32_1 = arith.constant 0 : i32
    return %c0_i32, %c0_i32_0 : i32, i32
  }
  func.func @transform_5(%arg0: i32) -> (i32, i32, i32, i32) {
    %c0_i32 = arith.constant 0 : i32
    %c0_i32_0 = arith.constant 0 : i32
    %c0_i32_1 = arith.constant 0 : i32
    %c0_i32_2 = arith.constant 0 : i32
    return %arg0, %c0_i32, %c0_i32_0, %c0_i32_1 : i32, i32, i32, i32
  }
}

</mosaic_0001>

<llo_original>
// kernel: tpu_custom_call.1
$region0: #{tpu_custom_call.1}
  #allocation0 [shape = 'u32[]', space=smem, size = 0x4, offset = 0x4, fixed_abs, tag = 'smem constant byte address 0x4 - core index']
  #allocation1 [shape = 'u32[72,128]{1,0:T(1,128)}', space=vmem, size = 0x9000, scoped, tag = 'internal scratch']
  #allocation2 [shape = 'f32[18,18,128]{2,1,0:T(8,128)}', space=vmem, size = 0x36000, scoped, tag = 'scratch operand']
  %s0 = inlined_call_operand.vmem [shape: f32[2,18,18,128], index: 0, kind: input, shape index: {}]
  %s1 = inlined_call_operand.vmem [shape: bf16[1152,128], index: 1, kind: input, shape index: {}]
  %s2 = inlined_call_operand.vmem [shape: f32[1,128], index: 2, kind: input, shape index: {}]
  %s3 = inlined_call_operand.vmem [shape: bf16[1152,128], index: 3, kind: input, shape index: {}]
  %s4 = inlined_call_operand.vmem [shape: f32[1,128], index: 4, kind: input, shape index: {}]
  %s5 = inlined_call_operand.hbm [shape: f32[2,16,16,128], index: 5, kind: output, shape index: {}]
  %s6 = sld [smem:[#allocation0]]
  $region53: #{tpu_custom_call.1} parent=0
    _
  %s8 = ssub.s32 1, %s6
  %s9 = scalar_select 0, %s8, %s6
  $region1: #{tpu_custom_call.1} parent=0
    #allocation3 [shape = 'u8[262144]{0}', space=vmem, size = 0x40000, scoped, tag = 'output window, operand 0']
    #allocation4 [shape = 's32[2]{0}', space=sflag, size = 0x8, scoped, tag = 'scoped memory for tpu_custom_call.1']
    %10 = vsyncpa [#allocation4], 0
    %s11 = scalar_lea.sflag [#allocation4], 1
    %12 = vsyncpa %s11, 0
    loop: start=0, step=1, limit=4
    $region2: #{tpu_custom_call.1} parent=1 // loop_pre_header
      _
    $region3: #{tpu_custom_call.1} parent=1 // loop_header
      %s14 = sphi 0, %s18
      %p15 = scmp.ge.s32.totalorder %s14, 4
      %s24 = sphi 0, %s26
      %s27 = sphi 0, %s24
      %s28 = sphi 0, %s27
      %s44 = sphi 0, %s28
      %s48 = sphi 0, %s48
      %s50 = sphi 0, %s48
      %s51 = sphi 0, %s50
      %s65 = sphi 0, %s51
      %s69 = sphi 0, %s69
      %s71 = sphi 0, %s69
      %s72 = sphi 0, %s71
      %s86 = sphi 0, %s72
      %s90 = sphi 0, %s90
      %s92 = sphi 0, %s90
      %s93 = sphi 0, %s92
      %s107 = sphi 0, %s93
      %s111 = sphi 0, %s111
      %s113 = sphi 0, %s111
      %s114 = sphi 0, %s113
      %s128 = sphi 0, %s114
      %s134 = sphi 0, %s136
      %s137 = sphi 0, %s134
      %s138 = sphi 0, %s137
      %s154 = sphi 0, %s138
    $region4: #{tpu_custom_call.1} parent=1 // loop_header_branch
      %17 = sbr.rel (%p15) target = $region8
    $region5: #{tpu_custom_call.1} parent=1 // loop_body
      %s19 = ssub.s32 %s14, 1
      %s20 = ssub.s32 %s14, 2
      %s21 = sadd.s32 %s14, 1
      %s22 = ssub.s32 %s14, %s21
      %p23 = scmp.eq.s32.totalorder %s22, 0
      %s25 = sadd.s32 %s24, 1
      %s26 = scalar_select %p23, %s24, %s25
      %p29 = pneg %p23
      %p30 = scmp.eq.s32.totalorder %s14, 1
      %p31 = por %p29, %p30
      %p32 = scmp.ne.s32.totalorder %s24, %s27
      %p33 = scmp.eq.s32.totalorder %s14, 0
      %p34 = por %p32, %p33
      %p35 = scmp.ne.s32.totalorder %s24, %s27
      %p36 = scmp.eq.s32.totalorder %s19, 1
      %p37 = por %p35, %p36
      %p38 = scmp.ne.s32.totalorder %s27, %s28
      %p39 = scmp.eq.s32.totalorder %s19, 0
      %p40 = por %p38, %p39
      %p41 = scmp.ne.s32.totalorder %s27, %s28
      %p42 = scmp.eq.s32.totalorder %s20, 1
      %p43 = por %p41, %p42
      %p45 = scmp.ne.s32.totalorder %s28, %s44
      %p46 = scmp.eq.s32.totalorder %s20, 0
      %p47 = por %p45, %p46
      %s49 = sadd.s32 %s48, 1
      %p52 = scmp.eq.s32.totalorder %s14, 1
      %p53 = scmp.ne.s32.totalorder %s48, %s50
      %p54 = scmp.eq.s32.totalorder %s14, 0
      %p55 = por %p53, %p54
      %p56 = scmp.ne.s32.totalorder %s48, %s50
      %p57 = scmp.eq.s32.totalorder %s19, 1
      %p58 = por %p56, %p57
      %p59 = scmp.ne.s32.totalorder %s50, %s51
      %p60 = scmp.eq.s32.totalorder %s19, 0
      %p61 = por %p59, %p60
      %p62 = scmp.ne.s32.totalorder %s50, %s51
      %p63 = scmp.eq.s32.totalorder %s20, 1
      %p64 = por %p62, %p63
      %p66 = scmp.ne.s32.totalorder %s51, %s65
      %p67 = scmp.eq.s32.totalorder %s20, 0
      %p68 = por %p66, %p67
      %s70 = sadd.s32 %s69, 1
      %p73 = scmp.eq.s32.totalorder %s14, 1
      %p74 = scmp.ne.s32.totalorder %s69, %s71
      %p75 = scmp.eq.s32.totalorder %s14, 0
      %p76 = por %p74, %p75
      %p77 = scmp.ne.s32.totalorder %s69, %s71
      %p78 = scmp.eq.s32.totalorder %s19, 1
      %p79 = por %p77, %p78
      %p80 = scmp.ne.s32.totalorder %s71, %s72
      %p81 = scmp.eq.s32.totalorder %s19, 0
      %p82 = por %p80, %p81
      %p83 = scmp.ne.s32.totalorder %s71, %s72
      %p84 = scmp.eq.s32.totalorder %s20, 1
      %p85 = por %p83, %p84
      %p87 = scmp.ne.s32.totalorder %s72, %s86
      %p88 = scmp.eq.s32.totalorder %s20, 0
      %p89 = por %p87, %p88
      %s91 = sadd.s32 %s90, 1
      %p94 = scmp.eq.s32.totalorder %s14, 1
      %p95 = scmp.ne.s32.totalorder %s90, %s92
      %p96 = scmp.eq.s32.totalorder %s14, 0
      %p97 = por %p95, %p96
      %p98 = scmp.ne.s32.totalorder %s90, %s92
      %p99 = scmp.eq.s32.totalorder %s19, 1
      %p100 = por %p98, %p99
      %p101 = scmp.ne.s32.totalorder %s92, %s93
      %p102 = scmp.eq.s32.totalorder %s19, 0
      %p103 = por %p101, %p102
      %p104 = scmp.ne.s32.totalorder %s92, %s93
      %p105 = scmp.eq.s32.totalorder %s20, 1
      %p106 = por %p104, %p105
      %p108 = scmp.ne.s32.totalorder %s93, %s107
      %p109 = scmp.eq.s32.totalorder %s20, 0
      %p110 = por %p108, %p109
      %s112 = sadd.s32 %s111, 1
      %p115 = scmp.eq.s32.totalorder %s14, 1
      %p116 = scmp.ne.s32.totalorder %s111, %s113
      %p117 = scmp.eq.s32.totalorder %s14, 0
      %p118 = por %p116, %p117
      %p119 = scmp.ne.s32.totalorder %s111, %s113
      %p120 = scmp.eq.s32.totalorder %s19, 1
      %p121 = por %p119, %p120
      %p122 = scmp.ne.s32.totalorder %s113, %s114
      %p123 = scmp.eq.s32.totalorder %s19, 0
      %p124 = por %p122, %p123
      %p125 = scmp.ne.s32.totalorder %s113, %s114
      %p126 = scmp.eq.s32.totalorder %s20, 1
      %p127 = por %p125, %p126
      %p129 = scmp.ne.s32.totalorder %s114, %s128
      %p130 = scmp.eq.s32.totalorder %s20, 0
      %p131 = por %p129, %p130
      %s132 = ssub.s32 %s14, %s21
      %p133 = scmp.eq.s32.totalorder %s132, 0
      %s135 = sadd.s32 %s134, 1
      %s136 = scalar_select %p133, %s134, %s135
      %p139 = pneg %p133
      %p140 = scmp.eq.s32.totalorder %s14, 1
      %p141 = por %p139, %p140
      %p142 = scmp.ne.s32.totalorder %s134, %s137
      %p143 = scmp.eq.s32.totalorder %s14, 0
      %p144 = por %p142, %p143
      %p145 = scmp.ne.s32.totalorder %s134, %s137
      %p146 = scmp.eq.s32.totalorder %s19, 1
      %p147 = por %p145, %p146
      %p148 = scmp.ne.s32.totalorder %s137, %s138
      %p149 = scmp.eq.s32.totalorder %s19, 0
      %p150 = por %p148, %p149
      %p151 = scmp.ne.s32.totalorder %s137, %s138
      %p152 = scmp.eq.s32.totalorder %s20, 1
      %p153 = por %p151, %p152
      %p155 = scmp.ne.s32.totalorder %s138, %s154
      %p156 = scmp.eq.s32.totalorder %s20, 0
      %p157 = por %p155, %p156
      %p158 = scmp.le.s32.totalorder 1, %s14
      %p159 = scmp.lt.s32.totalorder %s14, 3
      %p160 = pnand %p158, %p159
      %p161 = pneg %p160
      // Predicated region
      $region9: #{tpu_custom_call.1} parent=5 // pred_check
        _
      $region10: #{tpu_custom_call.1} parent=5 // pred_check_branch
        %163 = sbr.rel (%p160) target = $region12
      $region11: #{tpu_custom_call.1} parent=5 // pred_region
        %s164 = ssub.s32 %s14, 1
        // Predicated region
        $region13: #{tpu_custom_call.1} parent=11 // pred_check
          %p165 = pneg %p61
        $region14: #{tpu_custom_call.1} parent=11 // pred_check_branch
          %167 = sbr.rel (%p165) target = $region16
        $region15: #{tpu_custom_call.1} parent=11 // pred_region
          _
        $region16: #{tpu_custom_call.1} parent=11 // pred_fallthru
          _
        // Predicated region
        $region17: #{tpu_custom_call.1} parent=11 // pred_check
          %p168 = pneg %p82
        $region18: #{tpu_custom_call.1} parent=11 // pred_check_branch
          %170 = sbr.rel (%p168) target = $region20
        $region19: #{tpu_custom_call.1} parent=11 // pred_region
          _
        $region20: #{tpu_custom_call.1} parent=11 // pred_fallthru
          _
        // Predicated region
        $region21: #{tpu_custom_call.1} parent=11 // pred_check
          %p171 = pneg %p103
        $region22: #{tpu_custom_call.1} parent=11 // pred_check_branch
          %173 = sbr.rel (%p171) target = $region24
        $region23: #{tpu_custom_call.1} parent=11 // pred_region
          _
        $region24: #{tpu_custom_call.1} parent=11 // pred_fallthru
          _
        // Predicated region
        $region25: #{tpu_custom_call.1} parent=11 // pred_check
          %p174 = pneg %p124
        $region26: #{tpu_custom_call.1} parent=11 // pred_check_branch
          %176 = sbr.rel (%p174) target = $region28
        $region27: #{tpu_custom_call.1} parent=11 // pred_region
          _
        $region28: #{tpu_custom_call.1} parent=11 // pred_fallthru
          _
      $region12: #{tpu_custom_call.1} parent=5 // pred_fallthru
        _
      %p177 = scmp.lt.s32.totalorder %s14, 2
      // Predicated region
      $region29: #{tpu_custom_call.1} parent=5 // pred_check
        %p178 = pneg %p177
      $region30: #{tpu_custom_call.1} parent=5 // pred_check_branch
        %180 = sbr.rel (%p178) target = $region32
      $region31: #{tpu_custom_call.1} parent=5 // pred_region
        // Predicated region
        $region33: #{tpu_custom_call.1} parent=31 // pred_check
          %p181 = pneg %p34
        $region34: #{tpu_custom_call.1} parent=31 // pred_check_branch
          %183 = sbr.rel (%p181) target = $region36
        $region35: #{tpu_custom_call.1} parent=31 // pred_region
          %p184 = scmp.lt.s32.totalorder %s14, 1
          %s185 = scalar_select %p184, %s14, 1
          %s186 = smul.addr %s185, 54
          %s187 = smul.addr %s186, 8
          %s188 = scalar_lea.vmem %s0, %s187
        $region36: #{tpu_custom_call.1} parent=31 // pred_fallthru
          _
      $region32: #{tpu_custom_call.1} parent=5 // pred_fallthru
        _
      %p189 = scmp.le.s32.totalorder 1, %s14
      %p190 = scmp.lt.s32.totalorder %s14, 3
      %p191 = pnand %p189, %p190
      %p192 = pneg %p191
      // Predicated region
      $region37: #{tpu_custom_call.1} parent=5 // pred_check
        _
      $region38: #{tpu_custom_call.1} parent=5 // pred_check_branch
        %194 = sbr.rel (%p191) target = $region40
      $region39: #{tpu_custom_call.1} parent=5 // pred_region
        %s195 = ssub.s32 %s14, 1
        %p196 = scmp.lt.s32.totalorder %s19, 1
        %s197 = scalar_select %p196, %s19, 1
        %s198 = smul.addr %s197, 54
        %s199 = smul.addr %s198, 8
        %s200 = scalar_lea.vmem %s0, %s199
        %p201 = pneg %p40
        %p202 = pneg %p37
        %p203 = pneg %p61
        %p204 = pneg %p58
        %p205 = pneg %p82
        %p206 = pneg %p79
        %p207 = pneg %p103
        %p208 = pneg %p100
        %p209 = pneg %p124
        %p210 = pneg %p121
        %p211 = pneg %p150
        %p212 = pneg %p147
        %s213 = sand.u32 %s137, 1
        %s214 = scalar_lea.sflag [#allocation4], %s213
        %s215 = sand.u32 %s137, 1
        %s216 = smul.addr %s215, 256
        %s217 = scalar_lea.vmem [#allocation3], %s216
        %p218 = scmp.lt.s32.totalorder %s19, 1
        %s219 = scalar_select %p218, %s19, 1
        %s220 = smul.addr %s219, 54
        %s221 = smul.addr %s220, 8
        %s222 = scalar_lea.vmem %s0, %s221
        %v223 = vld [vmem:[%s222 + $0x1] sm:$0xff]
        %v224 = vld [vmem:[%s222 + $0x9] sm:$0xff]
        %v225 = vld [vmem:[%s222 + $0x19] sm:$0xff]
        %v226 = vld [vmem:[%s222 + $0x21] sm:$0xff]
        %v227 = vld [vmem:[%s222 + $0x31] sm:$0xff]
        %v228 = vld [vmem:[%s222 + $0x39] sm:$0xff]
        %v229 = vld [vmem:[%s222 + $0x49] sm:$0xff]
        %v230 = vld [vmem:[%s222 + $0x51] sm:$0xff]
        %v231 = vld [vmem:[%s222 + $0x61] sm:$0xff]
        %v232 = vld [vmem:[%s222 + $0x69] sm:$0xff]
        %v233 = vld [vmem:[%s222 + $0x79] sm:$0xff]
        %v234 = vld [vmem:[%s222 + $0x81] sm:$0xff]
        %v235 = vld [vmem:[%s222 + $0x91] sm:$0xff]
        %v236 = vld [vmem:[%s222 + $0x99] sm:$0xff]
        %v237 = vld [vmem:[%s222 + $0xa9] sm:$0xff]
        %v238 = vld [vmem:[%s222 + $0xb1] sm:$0xff]
        %v239 = vld [vmem:[%s222 + $0xc1] sm:$0xff]
        %v240 = vld [vmem:[%s222 + $0xc9] sm:$0xff]
        %v241 = vld [vmem:[%s222 + $0xd9] sm:$0xff]
        %v242 = vld [vmem:[%s222 + $0xe1] sm:$0xff]
        %v243 = vld [vmem:[%s222 + $0xf1] sm:$0xff]
        %v244 = vld [vmem:[%s222 + $0xf9] sm:$0xff]
        %v245 = vld [vmem:[%s222 + $0x109] sm:$0xff]
        %v246 = vld [vmem:[%s222 + $0x111] sm:$0xff]
        %v247 = vld [vmem:[%s222 + $0x121] sm:$0xff]
        %v248 = vld [vmem:[%s222 + $0x129] sm:$0xff]
        %v249 = vld [vmem:[%s222 + $0x139] sm:$0xff]
        %v250 = vld [vmem:[%s222 + $0x141] sm:$0xff]
        %v251 = vld [vmem:[%s222 + $0x151] sm:$0xff]
        %v252 = vld [vmem:[%s222 + $0x159] sm:$0xff]
        %v253 = vld [vmem:[%s222 + $0x169] sm:$0xff]
        %v254 = vld [vmem:[%s222 + $0x171] sm:$0xff]
        %v255 = vld [vmem:[%s222 + $0x181] sm:$0xff]
        %v256 = vld [vmem:[%s222 + $0x189] sm:$0xff]
        %v257 = vld [vmem:[%s222 + $0x199] sm:$0xff]
        %v258 = vld [vmem:[%s222 + $0x1a1] sm:$0xff]
        %v259 = vld [vmem:[%s222] sm:$0xff]
        %v260 = vld [vmem:[%s222 + $0x8] sm:$0xff]
        %v261 = vld [vmem:[%s222 + $0x18] sm:$0xff]
        %v262 = vld [vmem:[%s222 + $0x20] sm:$0xff]
        %v263 = vld [vmem:[%s222 + $0x30] sm:$0xff]
        %v264 = vld [vmem:[%s222 + $0x38] sm:$0xff]
        %v265 = vld [vmem:[%s222 + $0x48] sm:$0xff]
        %v266 = vld [vmem:[%s222 + $0x50] sm:$0xff]
        %v267 = vld [vmem:[%s222 + $0x60] sm:$0xff]
        %v268 = vld [vmem:[%s222 + $0x68] sm:$0xff]
        %v269 = vld [vmem:[%s222 + $0x78] sm:$0xff]
        %v270 = vld [vmem:[%s222 + $0x80] sm:$0xff]
        %v271 = vld [vmem:[%s222 + $0x90] sm:$0xff]
        %v272 = vld [vmem:[%s222 + $0x98] sm:$0xff]
        %v273 = vld [vmem:[%s222 + $0xa8] sm:$0xff]
        %v274 = vld [vmem:[%s222 + $0xb0] sm:$0xff]
        %v275 = vld [vmem:[%s222 + $0xc0] sm:$0xff]
        %v276 = vld [vmem:[%s222 + $0xc8] sm:$0xff]
        %v277 = vld [vmem:[%s222 + $0xd8] sm:$0xff]
        %v278 = vld [vmem:[%s222 + $0xe0] sm:$0xff]
        %v279 = vld [vmem:[%s222 + $0xf0] sm:$0xff]
        %v280 = vld [vmem:[%s222 + $0xf8] sm:$0xff]
        %v281 = vld [vmem:[%s222 + $0x108] sm:$0xff]
        %v282 = vld [vmem:[%s222 + $0x110] sm:$0xff]
        %v283 = vld [vmem:[%s222 + $0x120] sm:$0xff]
        %v284 = vld [vmem:[%s222 + $0x128] sm:$0xff]
        %v285 = vld [vmem:[%s222 + $0x138] sm:$0xff]
        %v286 = vld [vmem:[%s222 + $0x140] sm:$0xff]
        %v287 = vld [vmem:[%s222 + $0x150] sm:$0xff]
        %v288 = vld [vmem:[%s222 + $0x158] sm:$0xff]
        %v289 = vld [vmem:[%s222 + $0x168] sm:$0xff]
        %v290 = vld [vmem:[%s222 + $0x170] sm:$0xff]
        %v291 = vld [vmem:[%s222 + $0x180] sm:$0xff]
        %v292 = vld [vmem:[%s222 + $0x188] sm:$0xff]
        %v293 = vld [vmem:[%s222 + $0x198] sm:$0xff]
        %v294 = vld [vmem:[%s222 + $0x1a0] sm:$0xff]
        %v295 = vpack.c.bf16 %v259, %v259
        %v296 = vpack.c.bf16 %v260, %v260
        %v297 = vpack.c.bf16 %v261, %v261
        %v298 = vpack.c.bf16 %v262, %v262
        %v299 = vpack.c.bf16 %v263, %v263
        %v300 = vpack.c.bf16 %v264, %v264
        %v301 = vpack.c.bf16 %v265, %v265
        %v302 = vpack.c.bf16 %v266, %v266
        %v303 = vpack.c.bf16 %v267, %v267
        %v304 = vpack.c.bf16 %v268, %v268
        %v305 = vpack.c.bf16 %v269, %v269
        %v306 = vpack.c.bf16 %v270, %v270
        %v307 = vpack.c.bf16 %v271, %v271
        %v308 = vpack.c.bf16 %v272, %v272
        %v309 = vpack.c.bf16 %v273, %v273
        %v310 = vpack.c.bf16 %v274, %v274
        %v311 = vpack.c.bf16 %v275, %v275
        %v312 = vpack.c.bf16 %v276, %v276
        %v313 = vpack.c.bf16 %v277, %v277
        %v314 = vpack.c.bf16 %v278, %v278
        %v315 = vpack.c.bf16 %v279, %v279
        %v316 = vpack.c.bf16 %v280, %v280
        %v317 = vpack.c.bf16 %v281, %v281
        %v318 = vpack.c.bf16 %v282, %v282
        %v319 = vpack.c.bf16 %v283, %v283
        %v320 = vpack.c.bf16 %v284, %v284
        %v321 = vpack.c.bf16 %v285, %v285
        %v322 = vpack.c.bf16 %v286, %v286
        %v323 = vpack.c.bf16 %v287, %v287
        %v324 = vpack.c.bf16 %v288, %v288
        %v325 = vpack.c.bf16 %v289, %v289
        %v326 = vpack.c.bf16 %v290, %v290
        %v327 = vpack.c.bf16 %v291, %v291
        %v328 = vpack.c.bf16 %v292, %v292
        %v329 = vpack.c.bf16 %v293, %v293
        %v330 = vpack.c.bf16 %v294, %v294
        %v331 = vpack.c.bf16 %v223, %v223
        %v332 = vpack.c.bf16 %v224, %v224
        %v333 = vpack.c.bf16 %v225, %v225
        %v334 = vpack.c.bf16 %v226, %v226
        %v335 = vpack.c.bf16 %v227, %v227
        %v336 = vpack.c.bf16 %v228, %v228
        %v337 = vpack.c.bf16 %v229, %v229
        %v338 = vpack.c.bf16 %v230, %v230
        %v339 = vpack.c.bf16 %v231, %v231
        %v340 = vpack.c.bf16 %v232, %v232
        %v341 = vpack.c.bf16 %v233, %v233
        %v342 = vpack.c.bf16 %v234, %v234
        %v343 = vpack.c.bf16 %v235, %v235
        %v344 = vpack.c.bf16 %v236, %v236
        %v345 = vpack.c.bf16 %v237, %v237
        %v346 = vpack.c.bf16 %v238, %v238
        %v347 = vpack.c.bf16 %v239, %v239
        %v348 = vpack.c.bf16 %v240, %v240
        %v349 = vpack.c.bf16 %v241, %v241
        %v350 = vpack.c.bf16 %v242, %v242
        %v351 = vpack.c.bf16 %v243, %v243
        %v352 = vpack.c.bf16 %v244, %v244
        %v353 = vpack.c.bf16 %v245, %v245
        %v354 = vpack.c.bf16 %v246, %v246
        %v355 = vpack.c.bf16 %v247, %v247
        %v356 = vpack.c.bf16 %v248, %v248
        %v357 = vpack.c.bf16 %v249, %v249
        %v358 = vpack.c.bf16 %v250, %v250
        %v359 = vpack.c.bf16 %v251, %v251
        %v360 = vpack.c.bf16 %v252, %v252
        %v361 = vpack.c.bf16 %v253, %v253
        %v362 = vpack.c.bf16 %v254, %v254
        %v363 = vpack.c.bf16 %v255, %v255
        %v364 = vpack.c.bf16 %v256, %v256
        %v365 = vpack.c.bf16 %v257, %v257
        %v366 = vpack.c.bf16 %v258, %v258
        %v367 = vld [vmem:[%s222 + $0x2] sm:$0xff]
        %v368 = vld [vmem:[%s222 + $0xa] sm:$0xff]
        %v369 = vld [vmem:[%s222 + $0x1a] sm:$0xff]
        %v370 = vld [vmem:[%s222 + $0x22] sm:$0xff]
        %v371 = vld [vmem:[%s222 + $0x32] sm:$0xff]
        %v372 = vld [vmem:[%s222 + $0x3a] sm:$0xff]
        %v373 = vld [vmem:[%s222 + $0x4a] sm:$0xff]
        %v374 = vld [vmem:[%s222 + $0x52] sm:$0xff]
        %v375 = vld [vmem:[%s222 + $0x62] sm:$0xff]
        %v376 = vld [vmem:[%s222 + $0x6a] sm:$0xff]
        %v377 = vld [vmem:[%s222 + $0x7a] sm:$0xff]
        %v378 = vld [vmem:[%s222 + $0x82] sm:$0xff]
        %v379 = vld [vmem:[%s222 + $0x92] sm:$0xff]
        %v380 = vld [vmem:[%s222 + $0x9a] sm:$0xff]
        %v381 = vld [vmem:[%s222 + $0xaa] sm:$0xff]
        %v382 = vld [vmem:[%s222 + $0xb2] sm:$0xff]
        %v383 = vld [vmem:[%s222 + $0xc2] sm:$0xff]
        %v384 = vld [vmem:[%s222 + $0xca] sm:$0xff]
        %v385 = vld [vmem:[%s222 + $0xda] sm:$0xff]
        %v386 = vld [vmem:[%s222 + $0xe2] sm:$0xff]
        %v387 = vld [vmem:[%s222 + $0xf2] sm:$0xff]
        %v388 = vld [vmem:[%s222 + $0xfa] sm:$0xff]
        %v389 = vld [vmem:[%s222 + $0x10a] sm:$0xff]
        %v390 = vld [vmem:[%s222 + $0x112] sm:$0xff]
        %v391 = vld [vmem:[%s222 + $0x122] sm:$0xff]
        %v392 = vld [vmem:[%s222 + $0x12a] sm:$0xff]
        %v393 = vld [vmem:[%s222 + $0x13a] sm:$0xff]
        %v394 = vld [vmem:[%s222 + $0x142] sm:$0xff]
        %v395 = vld [vmem:[%s222 + $0x152] sm:$0xff]
        %v396 = vld [vmem:[%s222 + $0x15a] sm:$0xff]
        %v397 = vld [vmem:[%s222 + $0x16a] sm:$0xff]
        %v398 = vld [vmem:[%s222 + $0x172] sm:$0xff]
        %v399 = vld [vmem:[%s222 + $0x182] sm:$0xff]
        %v400 = vld [vmem:[%s222 + $0x18a] sm:$0xff]
        %v401 = vld [vmem:[%s222 + $0x19a] sm:$0xff]
        %v402 = vld [vmem:[%s222 + $0x1a2] sm:$0xff]
        %v403 = vpack.c.bf16 %v367, %v367
        %v404 = vpack.c.bf16 %v368, %v368
        %v405 = vpack.c.bf16 %v369, %v369
        %v406 = vpack.c.bf16 %v370, %v370
        %v407 = vpack.c.bf16 %v371, %v371
        %v408 = vpack.c.bf16 %v372, %v372
        %v409 = vpack.c.bf16 %v373, %v373
        %v410 = vpack.c.bf16 %v374, %v374
        %v411 = vpack.c.bf16 %v375, %v375
        %v412 = vpack.c.bf16 %v376, %v376
        %v413 = vpack.c.bf16 %v377, %v377
        %v414 = vpack.c.bf16 %v378, %v378
        %v415 = vpack.c.bf16 %v379, %v379
        %v416 = vpack.c.bf16 %v380, %v380
        %v417 = vpack.c.bf16 %v381, %v381
        %v418 = vpack.c.bf16 %v382, %v382
        %v419 = vpack.c.bf16 %v383, %v383
        %v420 = vpack.c.bf16 %v384, %v384
        %v421 = vpack.c.bf16 %v385, %v385
        %v422 = vpack.c.bf16 %v386, %v386
        %v423 = vpack.c.bf16 %v387, %v387
        %v424 = vpack.c.bf16 %v388, %v388
        %v425 = vpack.c.bf16 %v389, %v389
        %v426 = vpack.c.bf16 %v390, %v390
        %v427 = vpack.c.bf16 %v391, %v391
        %v428 = vpack.c.bf16 %v392, %v392
        %v429 = vpack.c.bf16 %v393, %v393
        %v430 = vpack.c.bf16 %v394, %v394
        %v431 = vpack.c.bf16 %v395, %v395
        %v432 = vpack.c.bf16 %v396, %v396
        %v433 = vpack.c.bf16 %v397, %v397
        %v434 = vpack.c.bf16 %v398, %v398
        %v435 = vpack.c.bf16 %v399, %v399
        %v436 = vpack.c.bf16 %v400, %v400
        %v437 = vpack.c.bf16 %v401, %v401
        %v438 = vpack.c.bf16 %v402, %v402
        %v439 = vld [vmem:[%s2] sm:$0x1]
        %v472 = vunpack.c.l.b16 %v295
        %v473 = vunpack.c.l.b16 %v296
        %v474 = vunpack.c.l.b16 %v297
        %v475 = vunpack.c.l.b16 %v298
        %v476 = vunpack.c.l.b16 %v299
        %v477 = vunpack.c.l.b16 %v300
        %v478 = vunpack.c.l.b16 %v301
        %v479 = vunpack.c.l.b16 %v302
        %v480 = vunpack.c.l.b16 %v303
        %v481 = vunpack.c.l.b16 %v304
        %v482 = vunpack.c.l.b16 %v305
        %v483 = vunpack.c.l.b16 %v306
        %v484 = vunpack.c.l.b16 %v307
        %v485 = vunpack.c.l.b16 %v308
        %v486 = vunpack.c.l.b16 %v309
        %v487 = vunpack.c.l.b16 %v310
        %v488 = vunpack.c.l.b16 %v311
        %v489 = vunpack.c.l.b16 %v312
        %v490 = vunpack.c.l.b16 %v313
        %v491 = vunpack.c.l.b16 %v314
        %v492 = vunpack.c.l.b16 %v315
        %v493 = vunpack.c.l.b16 %v316
        %v494 = vunpack.c.l.b16 %v317
        %v495 = vunpack.c.l.b16 %v318
        %v496 = vunpack.c.l.b16 %v319
        %v497 = vunpack.c.l.b16 %v320
        %v498 = vunpack.c.l.b16 %v321
        %v499 = vunpack.c.l.b16 %v322
        %v500 = vunpack.c.l.b16 %v323
        %v501 = vunpack.c.l.b16 %v324
        %v502 = vunpack.c.l.b16 %v325
        %v503 = vunpack.c.l.b16 %v326
        %v504 = vpack.c.b16 %v473, %v472
        %v505 = vpack.c.b16 %v475, %v474
        %v506 = vpack.c.b16 %v477, %v476
        %v507 = vpack.c.b16 %v479, %v478
        %v508 = vpack.c.b16 %v481, %v480
        %v509 = vpack.c.b16 %v483, %v482
        %v510 = vpack.c.b16 %v485, %v484
        %v511 = vpack.c.b16 %v487, %v486
        %v512 = vpack.c.b16 %v489, %v488
        %v513 = vpack.c.b16 %v491, %v490
        %v514 = vpack.c.b16 %v493, %v492
        %v515 = vpack.c.b16 %v495, %v494
        %v516 = vpack.c.b16 %v497, %v496
        %v517 = vpack.c.b16 %v499, %v498
        %v518 = vpack.c.b16 %v501, %v500
        %v519 = vpack.c.b16 %v503, %v502
        %v568 = vunpack.c.l.b16 %v331
        %v569 = vunpack.c.l.b16 %v332
        %v570 = vunpack.c.l.b16 %v333
        %v571 = vunpack.c.l.b16 %v334
        %v572 = vunpack.c.l.b16 %v335
        %v573 = vunpack.c.l.b16 %v336
        %v574 = vunpack.c.l.b16 %v337
        %v575 = vunpack.c.l.b16 %v338
        %v576 = vunpack.c.l.b16 %v339
        %v577 = vunpack.c.l.b16 %v340
        %v578 = vunpack.c.l.b16 %v341
        %v579 = vunpack.c.l.b16 %v342
        %v580 = vunpack.c.l.b16 %v343
        %v581 = vunpack.c.l.b16 %v344
        %v582 = vunpack.c.l.b16 %v345
        %v583 = vunpack.c.l.b16 %v346
        %v584 = vunpack.c.l.b16 %v347
        %v585 = vunpack.c.l.b16 %v348
        %v586 = vunpack.c.l.b16 %v349
        %v587 = vunpack.c.l.b16 %v350
        %v588 = vunpack.c.l.b16 %v351
        %v589 = vunpack.c.l.b16 %v352
        %v590 = vunpack.c.l.b16 %v353
        %v591 = vunpack.c.l.b16 %v354
        %v592 = vunpack.c.l.b16 %v355
        %v593 = vunpack.c.l.b16 %v356
        %v594 = vunpack.c.l.b16 %v357
        %v595 = vunpack.c.l.b16 %v358
        %v596 = vunpack.c.l.b16 %v359
        %v597 = vunpack.c.l.b16 %v360
        %v598 = vunpack.c.l.b16 %v361
        %v599 = vunpack.c.l.b16 %v362
        %v600 = vpack.c.b16 %v569, %v568
        %v601 = vpack.c.b16 %v571, %v570
        %v602 = vpack.c.b16 %v573, %v572
        %v603 = vpack.c.b16 %v575, %v574
        %v604 = vpack.c.b16 %v577, %v576
        %v605 = vpack.c.b16 %v579, %v578
        %v606 = vpack.c.b16 %v581, %v580
        %v607 = vpack.c.b16 %v583, %v582
        %v608 = vpack.c.b16 %v585, %v584
        %v609 = vpack.c.b16 %v587, %v586
        %v610 = vpack.c.b16 %v589, %v588
        %v611 = vpack.c.b16 %v591, %v590
        %v612 = vpack.c.b16 %v593, %v592
        %v613 = vpack.c.b16 %v595, %v594
        %v614 = vpack.c.b16 %v597, %v596
        %v615 = vpack.c.b16 %v599, %v598
        %v664 = vunpack.c.l.b16 %v403
        %v665 = vunpack.c.l.b16 %v404
        %v666 = vunpack.c.l.b16 %v405
        %v667 = vunpack.c.l.b16 %v406
        %v668 = vunpack.c.l.b16 %v407
        %v669 = vunpack.c.l.b16 %v408
        %v670 = vunpack.c.l.b16 %v409
        %v671 = vunpack.c.l.b16 %v410
        %v672 = vunpack.c.l.b16 %v411
        %v673 = vunpack.c.l.b16 %v412
        %v674 = vunpack.c.l.b16 %v413
        %v675 = vunpack.c.l.b16 %v414
        %v676 = vunpack.c.l.b16 %v415
        %v677 = vunpack.c.l.b16 %v416
        %v678 = vunpack.c.l.b16 %v417
        %v679 = vunpack.c.l.b16 %v418
        %v680 = vunpack.c.l.b16 %v419
        %v681 = vunpack.c.l.b16 %v420
        %v682 = vunpack.c.l.b16 %v421
        %v683 = vunpack.c.l.b16 %v422
        %v684 = vunpack.c.l.b16 %v423
        %v685 = vunpack.c.l.b16 %v424
        %v686 = vunpack.c.l.b16 %v425
        %v687 = vunpack.c.l.b16 %v426
        %v688 = vunpack.c.l.b16 %v427
        %v689 = vunpack.c.l.b16 %v428
        %v690 = vunpack.c.l.b16 %v429
        %v691 = vunpack.c.l.b16 %v430
        %v692 = vunpack.c.l.b16 %v431
        %v693 = vunpack.c.l.b16 %v432
        %v694 = vunpack.c.l.b16 %v433
        %v695 = vunpack.c.l.b16 %v434
        %v696 = vpack.c.b16 %v665, %v664
        %v697 = vpack.c.b16 %v667, %v666
        %v698 = vpack.c.b16 %v669, %v668
        %v699 = vpack.c.b16 %v671, %v670
        %v700 = vpack.c.b16 %v673, %v672
        %v701 = vpack.c.b16 %v675, %v674
        %v702 = vpack.c.b16 %v677, %v676
        %v703 = vpack.c.b16 %v679, %v678
        %v704 = vpack.c.b16 %v681, %v680
        %v705 = vpack.c.b16 %v683, %v682
        %v706 = vpack.c.b16 %v685, %v684
        %v707 = vpack.c.b16 %v687, %v686
        %v708 = vpack.c.b16 %v689, %v688
        %v709 = vpack.c.b16 %v691, %v690
        %v710 = vpack.c.b16 %v693, %v692
        %v711 = vpack.c.b16 %v695, %v694
        %v730 = vunpack.c.l.b16 %v327
        %v731 = vunpack.c.l.b16 %v328
        %v732 = vpack.c.b16 %v731, %v730
        %v736 = vunpack.c.l.b16 %v363
        %v737 = vunpack.c.l.b16 %v364
        %v738 = vpack.c.b16 %v737, %v736
        %v742 = vunpack.c.l.b16 %v435
        %v743 = vunpack.c.l.b16 %v436
        %v744 = vpack.c.b16 %v743, %v742
        %v748 = vunpack.c.l.b16 %v329
        %v749 = vunpack.c.l.b16 %v330
        %v750 = vpack.c.b16 %v749, %v748
        %v754 = vunpack.c.l.b16 %v365
        %v755 = vunpack.c.l.b16 %v366
        %v756 = vpack.c.b16 %v755, %v754
        %v760 = vunpack.c.l.b16 %v437
        %v761 = vunpack.c.l.b16 %v438
        %v762 = vpack.c.b16 %v761, %v760
        %v764 = vld [vmem:[%s1] sm:$0xf]
        %v765 = vld [vmem:[%s1 + $0x4] sm:$0xf]
        %v766 = vld [vmem:[%s1 + $0x8] sm:$0xf]
        %v767 = vld [vmem:[%s1 + $0xc] sm:$0xf]
        %v768 = vld [vmem:[%s1 + $0x10] sm:$0xf]
        %v769 = vld [vmem:[%s1 + $0x14] sm:$0xf]
        %v770 = vld [vmem:[%s1 + $0x18] sm:$0xf]
        %v771 = vld [vmem:[%s1 + $0x1c] sm:$0xf]
        %v772 = vld [vmem:[%s1 + $0x20] sm:$0xf]
        %v773 = vld [vmem:[%s1 + $0x24] sm:$0xf]
        %v774 = vld [vmem:[%s1 + $0x28] sm:$0xf]
        %v775 = vld [vmem:[%s1 + $0x2c] sm:$0xf]
        %v776 = vld [vmem:[%s1 + $0x30] sm:$0xf]
        %v777 = vld [vmem:[%s1 + $0x34] sm:$0xf]
        %v778 = vld [vmem:[%s1 + $0x38] sm:$0xf]
        %v779 = vld [vmem:[%s1 + $0x3c] sm:$0xf]
        %v780 = vld [vmem:[%s1 + $0x40] sm:$0xf]
        %v781 = vld [vmem:[%s1 + $0x44] sm:$0xf]
        %v782 = vld [vmem:[%s1 + $0x48] sm:$0xf]
        %v783 = vld [vmem:[%s1 + $0x4c] sm:$0xf]
        %v784 = vld [vmem:[%s1 + $0x50] sm:$0xf]
        %v785 = vld [vmem:[%s1 + $0x54] sm:$0xf]
        %v786 = vld [vmem:[%s1 + $0x58] sm:$0xf]
        %v787 = vld [vmem:[%s1 + $0x5c] sm:$0xf]
        %v788 = vld [vmem:[%s1 + $0x60] sm:$0xf]
        %v789 = vld [vmem:[%s1 + $0x64] sm:$0xf]
        %v790 = vld [vmem:[%s1 + $0x68] sm:$0xf]
        %v791 = vld [vmem:[%s1 + $0x6c] sm:$0xf]
        %v792 = vld [vmem:[%s1 + $0x70] sm:$0xf]
        %v793 = vld [vmem:[%s1 + $0x74] sm:$0xf]
        %v794 = vld [vmem:[%s1 + $0x78] sm:$0xf]
        %v795 = vld [vmem:[%s1 + $0x7c] sm:$0xf]
        %v796 = vld [vmem:[%s1 + $0x80] sm:$0xf]
        %v797 = vld [vmem:[%s1 + $0x84] sm:$0xf]
        %v798 = vld [vmem:[%s1 + $0x88] sm:$0xf]
        %v799 = vld [vmem:[%s1 + $0x8c] sm:$0xf]
        %v800 = vld [vmem:[%s1 + $0x90] sm:$0xf]
        %v801 = vld [vmem:[%s1 + $0x94] sm:$0xf]
        %v802 = vld [vmem:[%s1 + $0x98] sm:$0xf]
        %v803 = vld [vmem:[%s1 + $0x9c] sm:$0xf]
        %v804 = vld [vmem:[%s1 + $0xa0] sm:$0xf]
        %v805 = vld [vmem:[%s1 + $0xa4] sm:$0xf]
        %v806 = vld [vmem:[%s1 + $0xa8] sm:$0xf]
        %v807 = vld [vmem:[%s1 + $0xac] sm:$0xf]
        %v808 = vld [vmem:[%s1 + $0xb0] sm:$0xf]
        %v809 = vld [vmem:[%s1 + $0xb4] sm:$0xf]
        %v810 = vld [vmem:[%s1 + $0xb8] sm:$0xf]
        %v811 = vld [vmem:[%s1 + $0xbc] sm:$0xf]
        %v812 = vld [vmem:[%s1 + $0xc0] sm:$0xf]
        %v813 = vld [vmem:[%s1 + $0xc4] sm:$0xf]
        %v814 = vld [vmem:[%s1 + $0xc8] sm:$0xf]
        %v815 = vld [vmem:[%s1 + $0xcc] sm:$0xf]
        %v816 = vld [vmem:[%s1 + $0xd0] sm:$0xf]
        %v817 = vld [vmem:[%s1 + $0xd4] sm:$0xf]
        %v818 = vld [vmem:[%s1 + $0xd8] sm:$0xf]
        %v819 = vld [vmem:[%s1 + $0xdc] sm:$0xf]
        %v820 = vld [vmem:[%s1 + $0xe0] sm:$0xf]
        %v821 = vld [vmem:[%s1 + $0xe4] sm:$0xf]
        %v822 = vld [vmem:[%s1 + $0xe8] sm:$0xf]
        %v823 = vld [vmem:[%s1 + $0xec] sm:$0xf]
        %v824 = vld [vmem:[%s1 + $0xf0] sm:$0xf]
        %v825 = vld [vmem:[%s1 + $0xf4] sm:$0xf]
        %v826 = vld [vmem:[%s1 + $0xf8] sm:$0xf]
        %v827 = vld [vmem:[%s1 + $0xfc] sm:$0xf]
        %v828 = vld [vmem:[%s1 + $0x100] sm:$0xf]
        %v829 = vld [vmem:[%s1 + $0x104] sm:$0xf]
        %v830 = vld [vmem:[%s1 + $0x108] sm:$0xf]
        %v831 = vld [vmem:[%s1 + $0x10c] sm:$0xf]
        %v832 = vld [vmem:[%s1 + $0x110] sm:$0xf]
        %v833 = vld [vmem:[%s1 + $0x114] sm:$0xf]
        %v834 = vld [vmem:[%s1 + $0x118] sm:$0xf]
        %v835 = vld [vmem:[%s1 + $0x11c] sm:$0xf]
        %v836 = vld [vmem:[%s1 + $0x120] sm:$0xf]
        %v837 = vld [vmem:[%s1 + $0x124] sm:$0xf]
        %v838 = vld [vmem:[%s1 + $0x128] sm:$0xf]
        %v839 = vld [vmem:[%s1 + $0x12c] sm:$0xf]
        %v840 = vld [vmem:[%s1 + $0x130] sm:$0xf]
        %v841 = vld [vmem:[%s1 + $0x134] sm:$0xf]
        %v842 = vld [vmem:[%s1 + $0x138] sm:$0xf]
        %v843 = vld [vmem:[%s1 + $0x13c] sm:$0xf]
        %v844 = vld [vmem:[%s1 + $0x140] sm:$0xf]
        %v845 = vld [vmem:[%s1 + $0x144] sm:$0xf]
        %v846 = vld [vmem:[%s1 + $0x148] sm:$0xf]
        %v847 = vld [vmem:[%s1 + $0x14c] sm:$0xf]
        %v848 = vld [vmem:[%s1 + $0x150] sm:$0xf]
        %v849 = vld [vmem:[%s1 + $0x154] sm:$0xf]
        %v850 = vld [vmem:[%s1 + $0x158] sm:$0xf]
        %v851 = vld [vmem:[%s1 + $0x15c] sm:$0xf]
        %v852 = vld [vmem:[%s1 + $0x160] sm:$0xf]
        %v853 = vld [vmem:[%s1 + $0x164] sm:$0xf]
        %v854 = vld [vmem:[%s1 + $0x168] sm:$0xf]
        %v855 = vld [vmem:[%s1 + $0x16c] sm:$0xf]
        %v856 = vld [vmem:[%s1 + $0x170] sm:$0xf]
        %v857 = vld [vmem:[%s1 + $0x174] sm:$0xf]
        %v858 = vld [vmem:[%s1 + $0x178] sm:$0xf]
        %v859 = vld [vmem:[%s1 + $0x17c] sm:$0xf]
        %v860 = vld [vmem:[%s1 + $0x180] sm:$0xf]
        %v861 = vld [vmem:[%s1 + $0x184] sm:$0xf]
        %v862 = vld [vmem:[%s1 + $0x188] sm:$0xf]
        %v863 = vld [vmem:[%s1 + $0x18c] sm:$0xf]
        %v864 = vld [vmem:[%s1 + $0x190] sm:$0xf]
        %v865 = vld [vmem:[%s1 + $0x194] sm:$0xf]
        %v866 = vld [vmem:[%s1 + $0x198] sm:$0xf]
        %v867 = vld [vmem:[%s1 + $0x19c] sm:$0xf]
        %v868 = vld [vmem:[%s1 + $0x1a0] sm:$0xf]
        %v869 = vld [vmem:[%s1 + $0x1a4] sm:$0xf]
        %v870 = vld [vmem:[%s1 + $0x1a8] sm:$0xf]
        %v871 = vld [vmem:[%s1 + $0x1ac] sm:$0xf]
        %v872 = vld [vmem:[%s1 + $0x1b0] sm:$0xf]
        %v873 = vld [vmem:[%s1 + $0x1b4] sm:$0xf]
        %v874 = vld [vmem:[%s1 + $0x1b8] sm:$0xf]
        %v875 = vld [vmem:[%s1 + $0x1bc] sm:$0xf]
        %v876 = vld [vmem:[%s1 + $0x1c0] sm:$0xf]
        %v877 = vld [vmem:[%s1 + $0x1c4] sm:$0xf]
        %v878 = vld [vmem:[%s1 + $0x1c8] sm:$0xf]
        %v879 = vld [vmem:[%s1 + $0x1cc] sm:$0xf]
        %v880 = vld [vmem:[%s1 + $0x1d0] sm:$0xf]
        %v881 = vld [vmem:[%s1 + $0x1d4] sm:$0xf]
        %v882 = vld [vmem:[%s1 + $0x1d8] sm:$0xf]
        %v883 = vld [vmem:[%s1 + $0x1dc] sm:$0xf]
        %v884 = vld [vmem:[%s1 + $0x1e0] sm:$0xf]
        %v885 = vld [vmem:[%s1 + $0x1e4] sm:$0xf]
        %v886 = vld [vmem:[%s1 + $0x1e8] sm:$0xf]
        %v887 = vld [vmem:[%s1 + $0x1ec] sm:$0xf]
        %v888 = vld [vmem:[%s1 + $0x1f0] sm:$0xf]
        %v889 = vld [vmem:[%s1 + $0x1f4] sm:$0xf]
        %v890 = vld [vmem:[%s1 + $0x1f8] sm:$0xf]
        %v891 = vld [vmem:[%s1 + $0x1fc] sm:$0xf]
        %v892 = vld [vmem:[%s1 + $0x200] sm:$0xf]
        %v893 = vld [vmem:[%s1 + $0x204] sm:$0xf]
        %v894 = vld [vmem:[%s1 + $0x208] sm:$0xf]
        %v895 = vld [vmem:[%s1 + $0x20c] sm:$0xf]
        %v896 = vld [vmem:[%s1 + $0x210] sm:$0xf]
        %v897 = vld [vmem:[%s1 + $0x214] sm:$0xf]
        %v898 = vld [vmem:[%s1 + $0x218] sm:$0xf]
        %v899 = vld [vmem:[%s1 + $0x21c] sm:$0xf]
        %v900 = vld [vmem:[%s1 + $0x220] sm:$0xf]
        %v901 = vld [vmem:[%s1 + $0x224] sm:$0xf]
        %v902 = vld [vmem:[%s1 + $0x228] sm:$0xf]
        %v903 = vld [vmem:[%s1 + $0x22c] sm:$0xf]
        %v904 = vld [vmem:[%s1 + $0x230] sm:$0xf]
        %v905 = vld [vmem:[%s1 + $0x234] sm:$0xf]
        %v906 = vld [vmem:[%s1 + $0x238] sm:$0xf]
        %v907 = vld [vmem:[%s1 + $0x23c] sm:$0xf]
        %v909 = vperm.slane %v439, 0
        %v1055 = vunpack.c.l.b16 %v764
        %v1056 = vunpack.c.l.b16 %v765
        %v1057 = vunpack.c.l.b16 %v766
        %v1058 = vunpack.c.l.b16 %v767
        %v1059 = vunpack.c.l.b16 %v768
        %v1060 = vunpack.c.l.b16 %v769
        %v1061 = vunpack.c.l.b16 %v770
        %v1062 = vunpack.c.l.b16 %v771
        %v1063 = vunpack.c.l.b16 %v772
        %v1064 = vunpack.c.l.b16 %v773
        %v1065 = vunpack.c.l.b16 %v774
        %v1066 = vunpack.c.l.b16 %v775
        %v1067 = vunpack.c.l.b16 %v776
        %v1068 = vunpack.c.l.b16 %v777
        %v1069 = vunpack.c.l.b16 %v778
        %v1070 = vunpack.c.l.b16 %v779
        %v1071 = vunpack.c.l.b16 %v780
        %v1072 = vunpack.c.l.b16 %v781
        %v1073 = vunpack.c.l.b16 %v782
        %v1074 = vunpack.c.l.b16 %v783
        %v1075 = vunpack.c.l.b16 %v784
        %v1076 = vunpack.c.l.b16 %v785
        %v1077 = vunpack.c.l.b16 %v786
        %v1078 = vunpack.c.l.b16 %v787
        %v1079 = vunpack.c.l.b16 %v788
        %v1080 = vunpack.c.l.b16 %v789
        %v1081 = vunpack.c.l.b16 %v790
        %v1082 = vunpack.c.l.b16 %v791
        %v1083 = vunpack.c.l.b16 %v792
        %v1084 = vunpack.c.l.b16 %v793
        %v1085 = vunpack.c.l.b16 %v794
        %v1086 = vunpack.c.l.b16 %v795
        %v1087 = vunpack.c.l.b16 %v796
        %v1088 = vunpack.c.l.b16 %v797
        %v1089 = vunpack.c.l.b16 %v798
        %v1090 = vunpack.c.l.b16 %v799
        %v1091 = vunpack.c.l.b16 %v800
        %v1092 = vunpack.c.l.b16 %v801
        %v1093 = vunpack.c.l.b16 %v802
        %v1094 = vunpack.c.l.b16 %v803
        %v1095 = vunpack.c.l.b16 %v804
        %v1096 = vunpack.c.l.b16 %v805
        %v1097 = vunpack.c.l.b16 %v806
        %v1098 = vunpack.c.l.b16 %v807
        %v1099 = vunpack.c.l.b16 %v808
        %v1100 = vunpack.c.l.b16 %v809
        %v1101 = vunpack.c.l.b16 %v810
        %v1102 = vunpack.c.l.b16 %v811
        %v1103 = vunpack.c.l.b16 %v812
        %v1104 = vunpack.c.l.b16 %v813
        %v1105 = vunpack.c.l.b16 %v814
        %v1106 = vunpack.c.l.b16 %v815
        %v1107 = vunpack.c.l.b16 %v816
        %v1108 = vunpack.c.l.b16 %v817
        %v1109 = vunpack.c.l.b16 %v818
        %v1110 = vunpack.c.l.b16 %v819
        %v1111 = vunpack.c.l.b16 %v820
        %v1112 = vunpack.c.l.b16 %v821
        %v1113 = vunpack.c.l.b16 %v822
        %v1114 = vunpack.c.l.b16 %v823
        %v1115 = vunpack.c.l.b16 %v824
        %v1116 = vunpack.c.l.b16 %v825
        %v1117 = vunpack.c.l.b16 %v826
        %v1118 = vunpack.c.l.b16 %v827
        %v1119 = vunpack.c.l.b16 %v828
        %v1120 = vunpack.c.l.b16 %v829
        %v1121 = vunpack.c.l.b16 %v830
        %v1122 = vunpack.c.l.b16 %v831
        %v1123 = vunpack.c.l.b16 %v832
        %v1124 = vunpack.c.l.b16 %v833
        %v1125 = vunpack.c.l.b16 %v834
        %v1126 = vunpack.c.l.b16 %v835
        %v1127 = vunpack.c.l.b16 %v836
        %v1128 = vunpack.c.l.b16 %v837
        %v1129 = vunpack.c.l.b16 %v838
        %v1130 = vunpack.c.l.b16 %v839
        %v1131 = vunpack.c.l.b16 %v840
        %v1132 = vunpack.c.l.b16 %v841
        %v1133 = vunpack.c.l.b16 %v842
        %v1134 = vunpack.c.l.b16 %v843
        %v1135 = vunpack.c.l.b16 %v844
        %v1136 = vunpack.c.l.b16 %v845
        %v1137 = vunpack.c.l.b16 %v846
        %v1138 = vunpack.c.l.b16 %v847
        %v1139 = vunpack.c.l.b16 %v848
        %v1140 = vunpack.c.l.b16 %v849
        %v1141 = vunpack.c.l.b16 %v850
        %v1142 = vunpack.c.l.b16 %v851
        %v1143 = vunpack.c.l.b16 %v852
        %v1144 = vunpack.c.l.b16 %v853
        %v1145 = vunpack.c.l.b16 %v854
        %v1146 = vunpack.c.l.b16 %v855
        %v1147 = vunpack.c.l.b16 %v856
        %v1148 = vunpack.c.l.b16 %v857
        %v1149 = vunpack.c.l.b16 %v858
        %v1150 = vunpack.c.l.b16 %v859
        %v1151 = vunpack.c.l.b16 %v860
        %v1152 = vunpack.c.l.b16 %v861
        %v1153 = vunpack.c.l.b16 %v862
        %v1154 = vunpack.c.l.b16 %v863
        %v1155 = vunpack.c.l.b16 %v864
        %v1156 = vunpack.c.l.b16 %v865
        %v1157 = vunpack.c.l.b16 %v866
        %v1158 = vunpack.c.l.b16 %v867
        %v1159 = vunpack.c.l.b16 %v868
        %v1160 = vunpack.c.l.b16 %v869
        %v1161 = vunpack.c.l.b16 %v870
        %v1162 = vunpack.c.l.b16 %v871
        %v1163 = vunpack.c.l.b16 %v872
        %v1164 = vunpack.c.l.b16 %v873
        %v1165 = vunpack.c.l.b16 %v874
        %v1166 = vunpack.c.l.b16 %v875
        %v1167 = vunpack.c.l.b16 %v876
        %v1168 = vunpack.c.l.b16 %v877
        %v1169 = vunpack.c.l.b16 %v878
        %v1170 = vunpack.c.l.b16 %v879
        %v1171 = vunpack.c.l.b16 %v880
        %v1172 = vunpack.c.l.b16 %v881
        %v1173 = vunpack.c.l.b16 %v882
        %v1174 = vunpack.c.l.b16 %v883
        %v1175 = vunpack.c.l.b16 %v884
        %v1176 = vunpack.c.l.b16 %v885
        %v1177 = vunpack.c.l.b16 %v886
        %v1178 = vunpack.c.l.b16 %v887
        %v1179 = vunpack.c.l.b16 %v888
        %v1180 = vunpack.c.l.b16 %v889
        %v1181 = vunpack.c.l.b16 %v890
        %v1182 = vunpack.c.l.b16 %v891
        %v1183 = vunpack.c.l.b16 %v892
        %v1184 = vunpack.c.l.b16 %v893
        %v1185 = vunpack.c.l.b16 %v894
        %v1186 = vunpack.c.l.b16 %v895
        %v1187 = vunpack.c.l.b16 %v896
        %v1188 = vunpack.c.l.b16 %v897
        %v1189 = vunpack.c.l.b16 %v898
        %v1190 = vunpack.c.l.b16 %v899
        %v1191 = vunpack.c.l.b16 %v900
        %v1192 = vunpack.c.l.b16 %v901
        %v1193 = vunpack.c.l.b16 %v902
        %v1194 = vunpack.c.l.b16 %v903
        %v1195 = vunpack.c.l.b16 %v904
        %v1196 = vunpack.c.l.b16 %v905
        %v1197 = vunpack.c.l.b16 %v906
        %v1198 = vunpack.c.l.b16 %v907
        %v1199 = vpack.c.b16 %v1056, %v1055
        %v1200 = vpack.c.b16 %v1058, %v1057
        %v1201 = vpack.c.b16 %v1060, %v1059
        %v1202 = vpack.c.b16 %v1062, %v1061
        %v1203 = vpack.c.b16 %v1064, %v1063
        %v1204 = vpack.c.b16 %v1066, %v1065
        %v1205 = vpack.c.b16 %v1068, %v1067
        %v1206 = vpack.c.b16 %v1070, %v1069
        %v1207 = vpack.c.b16 %v1072, %v1071
        %v1208 = vpack.c.b16 %v1074, %v1073
        %v1209 = vpack.c.b16 %v1076, %v1075
        %v1210 = vpack.c.b16 %v1078, %v1077
        %v1211 = vpack.c.b16 %v1080, %v1079
        %v1212 = vpack.c.b16 %v1082, %v1081
        %v1213 = vpack.c.b16 %v1084, %v1083
        %v1214 = vpack.c.b16 %v1086, %v1085
        %v1215 = vpack.c.b16 %v1088, %v1087
        %v1216 = vpack.c.b16 %v1090, %v1089
        %v1217 = vpack.c.b16 %v1092, %v1091
        %v1218 = vpack.c.b16 %v1094, %v1093
        %v1219 = vpack.c.b16 %v1096, %v1095
        %v1220 = vpack.c.b16 %v1098, %v1097
        %v1221 = vpack.c.b16 %v1100, %v1099
        %v1222 = vpack.c.b16 %v1102, %v1101
        %v1223 = vpack.c.b16 %v1104, %v1103
        %v1224 = vpack.c.b16 %v1106, %v1105
        %v1225 = vpack.c.b16 %v1108, %v1107
        %v1226 = vpack.c.b16 %v1110, %v1109
        %v1227 = vpack.c.b16 %v1112, %v1111
        %v1228 = vpack.c.b16 %v1114, %v1113
        %v1229 = vpack.c.b16 %v1116, %v1115
        %v1230 = vpack.c.b16 %v1118, %v1117
        %v1231 = vpack.c.b16 %v1120, %v1119
        %v1232 = vpack.c.b16 %v1122, %v1121
        %v1233 = vpack.c.b16 %v1124, %v1123
        %v1234 = vpack.c.b16 %v1126, %v1125
        %v1235 = vpack.c.b16 %v1128, %v1127
        %v1236 = vpack.c.b16 %v1130, %v1129
        %v1237 = vpack.c.b16 %v1132, %v1131
        %v1238 = vpack.c.b16 %v1134, %v1133
        %v1239 = vpack.c.b16 %v1136, %v1135
        %v1240 = vpack.c.b16 %v1138, %v1137
        %v1241 = vpack.c.b16 %v1140, %v1139
        %v1242 = vpack.c.b16 %v1142, %v1141
        %v1243 = vpack.c.b16 %v1144, %v1143
        %v1244 = vpack.c.b16 %v1146, %v1145
        %v1245 = vpack.c.b16 %v1148, %v1147
        %v1246 = vpack.c.b16 %v1150, %v1149
        %v1247 = vpack.c.b16 %v1152, %v1151
        %v1248 = vpack.c.b16 %v1154, %v1153
        %v1249 = vpack.c.b16 %v1156, %v1155
        %v1250 = vpack.c.b16 %v1158, %v1157
        %v1251 = vpack.c.b16 %v1160, %v1159
        %v1252 = vpack.c.b16 %v1162, %v1161
        %v1253 = vpack.c.b16 %v1164, %v1163
        %v1254 = vpack.c.b16 %v1166, %v1165
        %v1255 = vpack.c.b16 %v1168, %v1167
        %v1256 = vpack.c.b16 %v1170, %v1169
        %v1257 = vpack.c.b16 %v1172, %v1171
        %v1258 = vpack.c.b16 %v1174, %v1173
        %v1259 = vpack.c.b16 %v1176, %v1175
        %v1260 = vpack.c.b16 %v1178, %v1177
        %v1261 = vpack.c.b16 %v1180, %v1179
        %v1262 = vpack.c.b16 %v1182, %v1181
        %v1263 = vpack.c.b16 %v1184, %v1183
        %v1264 = vpack.c.b16 %v1186, %v1185
        %v1265 = vpack.c.b16 %v1188, %v1187
        %v1266 = vpack.c.b16 %v1190, %v1189
        %v1267 = vpack.c.b16 %v1192, %v1191
        %v1268 = vpack.c.b16 %v1194, %v1193
        %v1269 = vpack.c.b16 %v1196, %v1195
        %v1270 = vpack.c.b16 %v1198, %v1197
        %1343 = vmatpush.bf16.msra.mxu0 %v1206
        %1344 = vmatpush.bf16.msra.mxu0 %v1205
        %1345 = vmatpush.bf16.msra.mxu0 %v1204
        %1346 = vmatpush.bf16.msra.mxu0 %v1203
        %1347 = vmatpush.bf16.msra.mxu0 %v1202
        %1348 = vmatpush.bf16.msra.mxu0 %v1201
        %1349 = vmatpush.bf16.msra.mxu0 %v1200
        %1350 = vmatpush.bf16.msra.mxu0 %v1199
        %1351 = vmatmul.bf16.gmra.mxu0 %v504
        %v1352 = vpop.f32.mrf.mxu0
        %v1353 = vadd.f32 %v909, %v1352
        %v1354 = vpop.f32.mrf.mxu0
        %v1355 = vadd.f32 %v909, %v1354
        %1356 = vmatmul.bf16.gmra.mxu0 %v505
        %v1357 = vpop.f32.mrf.mxu0
        %v1358 = vadd.f32 %v909, %v1357
        %v1359 = vpop.f32.mrf.mxu0
        %v1360 = vadd.f32 %v909, %v1359
        %1361 = vmatmul.bf16.gmra.mxu0 %v506
        %v1362 = vpop.f32.mrf.mxu0
        %v1363 = vadd.f32 %v909, %v1362
        %v1364 = vpop.f32.mrf.mxu0
        %v1365 = vadd.f32 %v909, %v1364
        %1366 = vmatmul.bf16.gmra.mxu0 %v507
        %v1367 = vpop.f32.mrf.mxu0
        %v1368 = vadd.f32 %v909, %v1367
        %v1369 = vpop.f32.mrf.mxu0
        %v1370 = vadd.f32 %v909, %v1369
        %1371 = vmatmul.bf16.gmra.mxu0 %v508
        %v1372 = vpop.f32.mrf.mxu0
        %v1373 = vadd.f32 %v909, %v1372
        %v1374 = vpop.f32.mrf.mxu0
        %v1375 = vadd.f32 %v909, %v1374
        %1376 = vmatmul.bf16.gmra.mxu0 %v509
        %v1377 = vpop.f32.mrf.mxu0
        %v1378 = vadd.f32 %v909, %v1377
        %v1379 = vpop.f32.mrf.mxu0
        %v1380 = vadd.f32 %v909, %v1379
        %1381 = vmatmul.bf16.gmra.mxu0 %v510
        %v1382 = vpop.f32.mrf.mxu0
        %v1383 = vadd.f32 %v909, %v1382
        %v1384 = vpop.f32.mrf.mxu0
        %v1385 = vadd.f32 %v909, %v1384
        %1386 = vmatmul.bf16.gmra.mxu0 %v511
        %v1387 = vpop.f32.mrf.mxu0
        %v1388 = vadd.f32 %v909, %v1387
        %v1389 = vpop.f32.mrf.mxu0
        %v1390 = vadd.f32 %v909, %v1389
        %1391 = vmatmul.bf16.gmra.mxu0 %v512
        %v1392 = vpop.f32.mrf.mxu0
        %v1393 = vadd.f32 %v909, %v1392
        %v1394 = vpop.f32.mrf.mxu0
        %v1395 = vadd.f32 %v909, %v1394
        %1396 = vmatmul.bf16.gmra.mxu0 %v513
        %v1397 = vpop.f32.mrf.mxu0
        %v1398 = vadd.f32 %v909, %v1397
        %v1399 = vpop.f32.mrf.mxu0
        %v1400 = vadd.f32 %v909, %v1399
        %1401 = vmatmul.bf16.gmra.mxu0 %v514
        %v1402 = vpop.f32.mrf.mxu0
        %v1403 = vadd.f32 %v909, %v1402
        %v1404 = vpop.f32.mrf.mxu0
        %v1405 = vadd.f32 %v909, %v1404
        %1406 = vmatmul.bf16.gmra.mxu0 %v515
        %v1407 = vpop.f32.mrf.mxu0
        %v1408 = vadd.f32 %v909, %v1407
        %v1409 = vpop.f32.mrf.mxu0
        %v1410 = vadd.f32 %v909, %v1409
        %1411 = vmatmul.bf16.gmra.mxu0 %v516
        %v1412 = vpop.f32.mrf.mxu0
        %v1413 = vadd.f32 %v909, %v1412
        %v1414 = vpop.f32.mrf.mxu0
        %v1415 = vadd.f32 %v909, %v1414
        %1416 = vmatmul.bf16.gmra.mxu0 %v517
        %v1417 = vpop.f32.mrf.mxu0
        %v1418 = vadd.f32 %v909, %v1417
        %v1419 = vpop.f32.mrf.mxu0
        %v1420 = vadd.f32 %v909, %v1419
        %1421 = vmatmul.bf16.gmra.mxu0 %v518
        %v1422 = vpop.f32.mrf.mxu0
        %v1423 = vadd.f32 %v909, %v1422
        %v1424 = vpop.f32.mrf.mxu0
        %v1425 = vadd.f32 %v909, %v1424
        %1426 = vmatmul.bf16.gmra.mxu0 %v519
        %v1427 = vpop.f32.mrf.mxu0
        %v1428 = vadd.f32 %v909, %v1427
        %v1429 = vpop.f32.mrf.mxu0
        %v1430 = vadd.f32 %v909, %v1429
        %1431 = vdwg.mxu0
        %1432 = vmatpush.bf16.msra.mxu0 %v1214
        %1433 = vmatpush.bf16.msra.mxu0 %v1213
        %1434 = vmatpush.bf16.msra.mxu0 %v1212
        %1435 = vmatpush.bf16.msra.mxu0 %v1211
        %1436 = vmatpush.bf16.msra.mxu0 %v1210
        %1437 = vmatpush.bf16.msra.mxu0 %v1209
        %1438 = vmatpush.bf16.msra.mxu0 %v1208
        %1439 = vmatpush.bf16.msra.mxu0 %v1207
        %1440 = vmatmul.bf16.gmra.mxu0 %v600
        %v1441 = vpop.f32.mrf.mxu0
        %v1442 = vadd.f32 %v1353, %v1441
        %v1443 = vpop.f32.mrf.mxu0
        %v1444 = vadd.f32 %v1355, %v1443
        %1445 = vmatmul.bf16.gmra.mxu0 %v601
        %v1446 = vpop.f32.mrf.mxu0
        %v1447 = vadd.f32 %v1358, %v1446
        %v1448 = vpop.f32.mrf.mxu0
        %v1449 = vadd.f32 %v1360, %v1448
        %1450 = vmatmul.bf16.gmra.mxu0 %v602
        %v1451 = vpop.f32.mrf.mxu0
        %v1452 = vadd.f32 %v1363, %v1451
        %v1453 = vpop.f32.mrf.mxu0
        %v1454 = vadd.f32 %v1365, %v1453
        %1455 = vmatmul.bf16.gmra.mxu0 %v603
        %v1456 = vpop.f32.mrf.mxu0
        %v1457 = vadd.f32 %v1368, %v1456
        %v1458 = vpop.f32.mrf.mxu0
        %v1459 = vadd.f32 %v1370, %v1458
        %1460 = vmatmul.bf16.gmra.mxu0 %v604
        %v1461 = vpop.f32.mrf.mxu0
        %v1462 = vadd.f32 %v1373, %v1461
        %v1463 = vpop.f32.mrf.mxu0
        %v1464 = vadd.f32 %v1375, %v1463
        %1465 = vmatmul.bf16.gmra.mxu0 %v605
        %v1466 = vpop.f32.mrf.mxu0
        %v1467 = vadd.f32 %v1378, %v1466
        %v1468 = vpop.f32.mrf.mxu0
        %v1469 = vadd.f32 %v1380, %v1468
        %1470 = vmatmul.bf16.gmra.mxu0 %v606
        %v1471 = vpop.f32.mrf.mxu0
        %v1472 = vadd.f32 %v1383, %v1471
        %v1473 = vpop.f32.mrf.mxu0
        %v1474 = vadd.f32 %v1385, %v1473
        %1475 = vmatmul.bf16.gmra.mxu0 %v607
        %v1476 = vpop.f32.mrf.mxu0
        %v1477 = vadd.f32 %v1388, %v1476
        %v1478 = vpop.f32.mrf.mxu0
        %v1479 = vadd.f32 %v1390, %v1478
        %1480 = vmatmul.bf16.gmra.mxu0 %v608
        %v1481 = vpop.f32.mrf.mxu0
        %v1482 = vadd.f32 %v1393, %v1481
        %v1483 = vpop.f32.mrf.mxu0
        %v1484 = vadd.f32 %v1395, %v1483
        %1485 = vmatmul.bf16.gmra.mxu0 %v609
        %v1486 = vpop.f32.mrf.mxu0
        %v1487 = vadd.f32 %v1398, %v1486
        %v1488 = vpop.f32.mrf.mxu0
        %v1489 = vadd.f32 %v1400, %v1488
        %1490 = vmatmul.bf16.gmra.mxu0 %v610
        %v1491 = vpop.f32.mrf.mxu0
        %v1492 = vadd.f32 %v1403, %v1491
        %v1493 = vpop.f32.mrf.mxu0
        %v1494 = vadd.f32 %v1405, %v1493
        %1495 = vmatmul.bf16.gmra.mxu0 %v611
        %v1496 = vpop.f32.mrf.mxu0
        %v1497 = vadd.f32 %v1408, %v1496
        %v1498 = vpop.f32.mrf.mxu0
        %v1499 = vadd.f32 %v1410, %v1498
        %1500 = vmatmul.bf16.gmra.mxu0 %v612
        %v1501 = vpop.f32.mrf.mxu0
        %v1502 = vadd.f32 %v1413, %v1501
        %v1503 = vpop.f32.mrf.mxu0
        %v1504 = vadd.f32 %v1415, %v1503
        %1505 = vmatmul.bf16.gmra.mxu0 %v613
        %v1506 = vpop.f32.mrf.mxu0
        %v1507 = vadd.f32 %v1418, %v1506
        %v1508 = vpop.f32.mrf.mxu0
        %v1509 = vadd.f32 %v1420, %v1508
        %1510 = vmatmul.bf16.gmra.mxu0 %v614
        %v1511 = vpop.f32.mrf.mxu0
        %v1512 = vadd.f32 %v1423, %v1511
        %v1513 = vpop.f32.mrf.mxu0
        %v1514 = vadd.f32 %v1425, %v1513
        %1515 = vmatmul.bf16.gmra.mxu0 %v615
        %v1516 = vpop.f32.mrf.mxu0
        %v1517 = vadd.f32 %v1428, %v1516
        %v1518 = vpop.f32.mrf.mxu0
        %v1519 = vadd.f32 %v1430, %v1518
        %1520 = vdwg.mxu0
        %1521 = vmatpush.bf16.msra.mxu0 %v1222
        %1522 = vmatpush.bf16.msra.mxu0 %v1221
        %1523 = vmatpush.bf16.msra.mxu0 %v1220
        %1524 = vmatpush.bf16.msra.mxu0 %v1219
        %1525 = vmatpush.bf16.msra.mxu0 %v1218
        %1526 = vmatpush.bf16.msra.mxu0 %v1217
        %1527 = vmatpush.bf16.msra.mxu0 %v1216
        %1528 = vmatpush.bf16.msra.mxu0 %v1215
        %1529 = vmatmul.bf16.gmra.mxu0 %v696
        %v1530 = vpop.f32.mrf.mxu0
        %v1531 = vadd.f32 %v1442, %v1530
        %v1532 = vpop.f32.mrf.mxu0
        %v1533 = vadd.f32 %v1444, %v1532
        %1534 = vmatmul.bf16.gmra.mxu0 %v697
        %v1535 = vpop.f32.mrf.mxu0
        %v1536 = vadd.f32 %v1447, %v1535
        %v1537 = vpop.f32.mrf.mxu0
        %v1538 = vadd.f32 %v1449, %v1537
        %1539 = vmatmul.bf16.gmra.mxu0 %v698
        %v1540 = vpop.f32.mrf.mxu0
        %v1541 = vadd.f32 %v1452, %v1540
        %v1542 = vpop.f32.mrf.mxu0
        %v1543 = vadd.f32 %v1454, %v1542
        %1544 = vmatmul.bf16.gmra.mxu0 %v699
        %v1545 = vpop.f32.mrf.mxu0
        %v1546 = vadd.f32 %v1457, %v1545
        %v1547 = vpop.f32.mrf.mxu0
        %v1548 = vadd.f32 %v1459, %v1547
        %1549 = vmatmul.bf16.gmra.mxu0 %v700
        %v1550 = vpop.f32.mrf.mxu0
        %v1551 = vadd.f32 %v1462, %v1550
        %v1552 = vpop.f32.mrf.mxu0
        %v1553 = vadd.f32 %v1464, %v1552
        %1554 = vmatmul.bf16.gmra.mxu0 %v701
        %v1555 = vpop.f32.mrf.mxu0
        %v1556 = vadd.f32 %v1467, %v1555
        %v1557 = vpop.f32.mrf.mxu0
        %v1558 = vadd.f32 %v1469, %v1557
        %1559 = vmatmul.bf16.gmra.mxu0 %v702
        %v1560 = vpop.f32.mrf.mxu0
        %v1561 = vadd.f32 %v1472, %v1560
        %v1562 = vpop.f32.mrf.mxu0
        %v1563 = vadd.f32 %v1474, %v1562
        %1564 = vmatmul.bf16.gmra.mxu0 %v703
        %v1565 = vpop.f32.mrf.mxu0
        %v1566 = vadd.f32 %v1477, %v1565
        %v1567 = vpop.f32.mrf.mxu0
        %v1568 = vadd.f32 %v1479, %v1567
        %1569 = vmatmul.bf16.gmra.mxu0 %v704
        %v1570 = vpop.f32.mrf.mxu0
        %v1571 = vadd.f32 %v1482, %v1570
        %v1572 = vpop.f32.mrf.mxu0
        %v1573 = vadd.f32 %v1484, %v1572
        %1574 = vmatmul.bf16.gmra.mxu0 %v705
        %v1575 = vpop.f32.mrf.mxu0
        %v1576 = vadd.f32 %v1487, %v1575
        %v1577 = vpop.f32.mrf.mxu0
        %v1578 = vadd.f32 %v1489, %v1577
        %1579 = vmatmul.bf16.gmra.mxu0 %v706
        %v1580 = vpop.f32.mrf.mxu0
        %v1581 = vadd.f32 %v1492, %v1580
        %v1582 = vpop.f32.mrf.mxu0
        %v1583 = vadd.f32 %v1494, %v1582
        %1584 = vmatmul.bf16.gmra.mxu0 %v707
        %v1585 = vpop.f32.mrf.mxu0
        %v1586 = vadd.f32 %v1497, %v1585
        %v1587 = vpop.f32.mrf.mxu0
        %v1588 = vadd.f32 %v1499, %v1587
        %1589 = vmatmul.bf16.gmra.mxu0 %v708
        %v1590 = vpop.f32.mrf.mxu0
        %v1591 = vadd.f32 %v1502, %v1590
        %v1592 = vpop.f32.mrf.mxu0
        %v1593 = vadd.f32 %v1504, %v1592
        %1594 = vmatmul.bf16.gmra.mxu0 %v709
        %v1595 = vpop.f32.mrf.mxu0
        %v1596 = vadd.f32 %v1507, %v1595
        %v1597 = vpop.f32.mrf.mxu0
        %v1598 = vadd.f32 %v1509, %v1597
        %1599 = vmatmul.bf16.gmra.mxu0 %v710
        %v1600 = vpop.f32.mrf.mxu0
        %v1601 = vadd.f32 %v1512, %v1600
        %v1602 = vpop.f32.mrf.mxu0
        %v1603 = vadd.f32 %v1514, %v1602
        %1604 = vmatmul.bf16.gmra.mxu0 %v711
        %v1605 = vpop.f32.mrf.mxu0
        %v1606 = vadd.f32 %v1517, %v1605
        %v1607 = vpop.f32.mrf.mxu0
        %v1608 = vadd.f32 %v1519, %v1607
        %1609 = vdwg.mxu0
        %1610 = vmatpush.bf16.msra.mxu0 %v1230
        %1611 = vmatpush.bf16.msra.mxu0 %v1229
        %1612 = vmatpush.bf16.msra.mxu0 %v1228
        %1613 = vmatpush.bf16.msra.mxu0 %v1227
        %1614 = vmatpush.bf16.msra.mxu0 %v1226
        %1615 = vmatpush.bf16.msra.mxu0 %v1225
        %1616 = vmatpush.bf16.msra.mxu0 %v1224
        %1617 = vmatpush.bf16.msra.mxu0 %v1223
        %1618 = vmatmul.bf16.gmra.mxu0 %v505
        %v1619 = vpop.f32.mrf.mxu0
        %v1620 = vadd.f32 %v1531, %v1619
        %v1621 = vpop.f32.mrf.mxu0
        %v1622 = vadd.f32 %v1533, %v1621
        %1623 = vmatmul.bf16.gmra.mxu0 %v506
        %v1624 = vpop.f32.mrf.mxu0
        %v1625 = vadd.f32 %v1536, %v1624
        %v1626 = vpop.f32.mrf.mxu0
        %v1627 = vadd.f32 %v1538, %v1626
        %1628 = vmatmul.bf16.gmra.mxu0 %v507
        %v1629 = vpop.f32.mrf.mxu0
        %v1630 = vadd.f32 %v1541, %v1629
        %v1631 = vpop.f32.mrf.mxu0
        %v1632 = vadd.f32 %v1543, %v1631
        %1633 = vmatmul.bf16.gmra.mxu0 %v508
        %v1634 = vpop.f32.mrf.mxu0
        %v1635 = vadd.f32 %v1546, %v1634
        %v1636 = vpop.f32.mrf.mxu0
        %v1637 = vadd.f32 %v1548, %v1636
        %1638 = vmatmul.bf16.gmra.mxu0 %v509
        %v1639 = vpop.f32.mrf.mxu0
        %v1640 = vadd.f32 %v1551, %v1639
        %v1641 = vpop.f32.mrf.mxu0
        %v1642 = vadd.f32 %v1553, %v1641
        %1643 = vmatmul.bf16.gmra.mxu0 %v510
        %v1644 = vpop.f32.mrf.mxu0
        %v1645 = vadd.f32 %v1556, %v1644
        %v1646 = vpop.f32.mrf.mxu0
        %v1647 = vadd.f32 %v1558, %v1646
        %1648 = vmatmul.bf16.gmra.mxu0 %v511
        %v1649 = vpop.f32.mrf.mxu0
        %v1650 = vadd.f32 %v1561, %v1649
        %v1651 = vpop.f32.mrf.mxu0
        %v1652 = vadd.f32 %v1563, %v1651
        %1653 = vmatmul.bf16.gmra.mxu0 %v512
        %v1654 = vpop.f32.mrf.mxu0
        %v1655 = vadd.f32 %v1566, %v1654
        %v1656 = vpop.f32.mrf.mxu0
        %v1657 = vadd.f32 %v1568, %v1656
        %1658 = vmatmul.bf16.gmra.mxu0 %v513
        %v1659 = vpop.f32.mrf.mxu0
        %v1660 = vadd.f32 %v1571, %v1659
        %v1661 = vpop.f32.mrf.mxu0
        %v1662 = vadd.f32 %v1573, %v1661
        %1663 = vmatmul.bf16.gmra.mxu0 %v514
        %v1664 = vpop.f32.mrf.mxu0
        %v1665 = vadd.f32 %v1576, %v1664
        %v1666 = vpop.f32.mrf.mxu0
        %v1667 = vadd.f32 %v1578, %v1666
        %1668 = vmatmul.bf16.gmra.mxu0 %v515
        %v1669 = vpop.f32.mrf.mxu0
        %v1670 = vadd.f32 %v1581, %v1669
        %v1671 = vpop.f32.mrf.mxu0
        %v1672 = vadd.f32 %v1583, %v1671
        %1673 = vmatmul.bf16.gmra.mxu0 %v516
        %v1674 = vpop.f32.mrf.mxu0
        %v1675 = vadd.f32 %v1586, %v1674
        %v1676 = vpop.f32.mrf.mxu0
        %v1677 = vadd.f32 %v1588, %v1676
        %1678 = vmatmul.bf16.gmra.mxu0 %v517
        %v1679 = vpop.f32.mrf.mxu0
        %v1680 = vadd.f32 %v1591, %v1679
        %v1681 = vpop.f32.mrf.mxu0
        %v1682 = vadd.f32 %v1593, %v1681
        %1683 = vmatmul.bf16.gmra.mxu0 %v518
        %v1684 = vpop.f32.mrf.mxu0
        %v1685 = vadd.f32 %v1596, %v1684
        %v1686 = vpop.f32.mrf.mxu0
        %v1687 = vadd.f32 %v1598, %v1686
        %1688 = vmatmul.bf16.gmra.mxu0 %v519
        %v1689 = vpop.f32.mrf.mxu0
        %v1690 = vadd.f32 %v1601, %v1689
        %v1691 = vpop.f32.mrf.mxu0
        %v1692 = vadd.f32 %v1603, %v1691
        %1693 = vmatmul.bf16.gmra.mxu0 %v732
        %v1694 = vpop.f32.mrf.mxu0
        %v1695 = vadd.f32 %v1606, %v1694
        %v1696 = vpop.f32.mrf.mxu0
        %v1697 = vadd.f32 %v1608, %v1696
        %1698 = vdwg.mxu0
        %1699 = vmatpush.bf16.msra.mxu0 %v1238
        %1700 = vmatpush.bf16.msra.mxu0 %v1237
        %1701 = vmatpush.bf16.msra.mxu0 %v1236
        %1702 = vmatpush.bf16.msra.mxu0 %v1235
        %1703 = vmatpush.bf16.msra.mxu0 %v1234
        %1704 = vmatpush.bf16.msra.mxu0 %v1233
        %1705 = vmatpush.bf16.msra.mxu0 %v1232
        %1706 = vmatpush.bf16.msra.mxu0 %v1231
        %1707 = vmatmul.bf16.gmra.mxu0 %v601
        %v1708 = vpop.f32.mrf.mxu0
        %v1709 = vadd.f32 %v1620, %v1708
        %v1710 = vpop.f32.mrf.mxu0
        %v1711 = vadd.f32 %v1622, %v1710
        %1712 = vmatmul.bf16.gmra.mxu0 %v602
        %v1713 = vpop.f32.mrf.mxu0
        %v1714 = vadd.f32 %v1625, %v1713
        %v1715 = vpop.f32.mrf.mxu0
        %v1716 = vadd.f32 %v1627, %v1715
        %1717 = vmatmul.bf16.gmra.mxu0 %v603
        %v1718 = vpop.f32.mrf.mxu0
        %v1719 = vadd.f32 %v1630, %v1718
        %v1720 = vpop.f32.mrf.mxu0
        %v1721 = vadd.f32 %v1632, %v1720
        %1722 = vmatmul.bf16.gmra.mxu0 %v604
        %v1723 = vpop.f32.mrf.mxu0
        %v1724 = vadd.f32 %v1635, %v1723
        %v1725 = vpop.f32.mrf.mxu0
        %v1726 = vadd.f32 %v1637, %v1725
        %1727 = vmatmul.bf16.gmra.mxu0 %v605
        %v1728 = vpop.f32.mrf.mxu0
        %v1729 = vadd.f32 %v1640, %v1728
        %v1730 = vpop.f32.mrf.mxu0
        %v1731 = vadd.f32 %v1642, %v1730
        %1732 = vmatmul.bf16.gmra.mxu0 %v606
        %v1733 = vpop.f32.mrf.mxu0
        %v1734 = vadd.f32 %v1645, %v1733
        %v1735 = vpop.f32.mrf.mxu0
        %v1736 = vadd.f32 %v1647, %v1735
        %1737 = vmatmul.bf16.gmra.mxu0 %v607
        %v1738 = vpop.f32.mrf.mxu0
        %v1739 = vadd.f32 %v1650, %v1738
        %v1740 = vpop.f32.mrf.mxu0
        %v1741 = vadd.f32 %v1652, %v1740
        %1742 = vmatmul.bf16.gmra.mxu0 %v608
        %v1743 = vpop.f32.mrf.mxu0
        %v1744 = vadd.f32 %v1655, %v1743
        %v1745 = vpop.f32.mrf.mxu0
        %v1746 = vadd.f32 %v1657, %v1745
        %1747 = vmatmul.bf16.gmra.mxu0 %v609
        %v1748 = vpop.f32.mrf.mxu0
        %v1749 = vadd.f32 %v1660, %v1748
        %v1750 = vpop.f32.mrf.mxu0
        %v1751 = vadd.f32 %v1662, %v1750
        %1752 = vmatmul.bf16.gmra.mxu0 %v610
        %v1753 = vpop.f32.mrf.mxu0
        %v1754 = vadd.f32 %v1665, %v1753
        %v1755 = vpop.f32.mrf.mxu0
        %v1756 = vadd.f32 %v1667, %v1755
        %1757 = vmatmul.bf16.gmra.mxu0 %v611
        %v1758 = vpop.f32.mrf.mxu0
        %v1759 = vadd.f32 %v1670, %v1758
        %v1760 = vpop.f32.mrf.mxu0
        %v1761 = vadd.f32 %v1672, %v1760
        %1762 = vmatmul.bf16.gmra.mxu0 %v612
        %v1763 = vpop.f32.mrf.mxu0
        %v1764 = vadd.f32 %v1675, %v1763
        %v1765 = vpop.f32.mrf.mxu0
        %v1766 = vadd.f32 %v1677, %v1765
        %1767 = vmatmul.bf16.gmra.mxu0 %v613
        %v1768 = vpop.f32.mrf.mxu0
        %v1769 = vadd.f32 %v1680, %v1768
        %v1770 = vpop.f32.mrf.mxu0
        %v1771 = vadd.f32 %v1682, %v1770
        %1772 = vmatmul.bf16.gmra.mxu0 %v614
        %v1773 = vpop.f32.mrf.mxu0
        %v1774 = vadd.f32 %v1685, %v1773
        %v1775 = vpop.f32.mrf.mxu0
        %v1776 = vadd.f32 %v1687, %v1775
        %1777 = vmatmul.bf16.gmra.mxu0 %v615
        %v1778 = vpop.f32.mrf.mxu0
        %v1779 = vadd.f32 %v1690, %v1778
        %v1780 = vpop.f32.mrf.mxu0
        %v1781 = vadd.f32 %v1692, %v1780
        %1782 = vmatmul.bf16.gmra.mxu0 %v738
        %v1783 = vpop.f32.mrf.mxu0
        %v1784 = vadd.f32 %v1695, %v1783
        %v1785 = vpop.f32.mrf.mxu0
        %v1786 = vadd.f32 %v1697, %v1785
        %1787 = vdwg.mxu0
        %1788 = vmatpush.bf16.msra.mxu0 %v1246
        %1789 = vmatpush.bf16.msra.mxu0 %v1245
        %1790 = vmatpush.bf16.msra.mxu0 %v1244
        %1791 = vmatpush.bf16.msra.mxu0 %v1243
        %1792 = vmatpush.bf16.msra.mxu0 %v1242
        %1793 = vmatpush.bf16.msra.mxu0 %v1241
        %1794 = vmatpush.bf16.msra.mxu0 %v1240
        %1795 = vmatpush.bf16.msra.mxu0 %v1239
        %1796 = vmatmul.bf16.gmra.mxu0 %v697
        %v1797 = vpop.f32.mrf.mxu0
        %v1798 = vadd.f32 %v1709, %v1797
        %v1799 = vpop.f32.mrf.mxu0
        %v1800 = vadd.f32 %v1711, %v1799
        %1801 = vmatmul.bf16.gmra.mxu0 %v698
        %v1802 = vpop.f32.mrf.mxu0
        %v1803 = vadd.f32 %v1714, %v1802
        %v1804 = vpop.f32.mrf.mxu0
        %v1805 = vadd.f32 %v1716, %v1804
        %1806 = vmatmul.bf16.gmra.mxu0 %v699
        %v1807 = vpop.f32.mrf.mxu0
        %v1808 = vadd.f32 %v1719, %v1807
        %v1809 = vpop.f32.mrf.mxu0
        %v1810 = vadd.f32 %v1721, %v1809
        %1811 = vmatmul.bf16.gmra.mxu0 %v700
        %v1812 = vpop.f32.mrf.mxu0
        %v1813 = vadd.f32 %v1724, %v1812
        %v1814 = vpop.f32.mrf.mxu0
        %v1815 = vadd.f32 %v1726, %v1814
        %1816 = vmatmul.bf16.gmra.mxu0 %v701
        %v1817 = vpop.f32.mrf.mxu0
        %v1818 = vadd.f32 %v1729, %v1817
        %v1819 = vpop.f32.mrf.mxu0
        %v1820 = vadd.f32 %v1731, %v1819
        %1821 = vmatmul.bf16.gmra.mxu0 %v702
        %v1822 = vpop.f32.mrf.mxu0
        %v1823 = vadd.f32 %v1734, %v1822
        %v1824 = vpop.f32.mrf.mxu0
        %v1825 = vadd.f32 %v1736, %v1824
        %1826 = vmatmul.bf16.gmra.mxu0 %v703
        %v1827 = vpop.f32.mrf.mxu0
        %v1828 = vadd.f32 %v1739, %v1827
        %v1829 = vpop.f32.mrf.mxu0
        %v1830 = vadd.f32 %v1741, %v1829
        %1831 = vmatmul.bf16.gmra.mxu0 %v704
        %v1832 = vpop.f32.mrf.mxu0
        %v1833 = vadd.f32 %v1744, %v1832
        %v1834 = vpop.f32.mrf.mxu0
        %v1835 = vadd.f32 %v1746, %v1834
        %1836 = vmatmul.bf16.gmra.mxu0 %v705
        %v1837 = vpop.f32.mrf.mxu0
        %v1838 = vadd.f32 %v1749, %v1837
        %v1839 = vpop.f32.mrf.mxu0
        %v1840 = vadd.f32 %v1751, %v1839
        %1841 = vmatmul.bf16.gmra.mxu0 %v706
        %v1842 = vpop.f32.mrf.mxu0
        %v1843 = vadd.f32 %v1754, %v1842
        %v1844 = vpop.f32.mrf.mxu0
        %v1845 = vadd.f32 %v1756, %v1844
        %1846 = vmatmul.bf16.gmra.mxu0 %v707
        %v1847 = vpop.f32.mrf.mxu0
        %v1848 = vadd.f32 %v1759, %v1847
        %v1849 = vpop.f32.mrf.mxu0
        %v1850 = vadd.f32 %v1761, %v1849
        %1851 = vmatmul.bf16.gmra.mxu0 %v708
        %v1852 = vpop.f32.mrf.mxu0
        %v1853 = vadd.f32 %v1764, %v1852
        %v1854 = vpop.f32.mrf.mxu0
        %v1855 = vadd.f32 %v1766, %v1854
        %1856 = vmatmul.bf16.gmra.mxu0 %v709
        %v1857 = vpop.f32.mrf.mxu0
        %v1858 = vadd.f32 %v1769, %v1857
        %v1859 = vpop.f32.mrf.mxu0
        %v1860 = vadd.f32 %v1771, %v1859
        %1861 = vmatmul.bf16.gmra.mxu0 %v710
        %v1862 = vpop.f32.mrf.mxu0
        %v1863 = vadd.f32 %v1774, %v1862
        %v1864 = vpop.f32.mrf.mxu0
        %v1865 = vadd.f32 %v1776, %v1864
        %1866 = vmatmul.bf16.gmra.mxu0 %v711
        %v1867 = vpop.f32.mrf.mxu0
        %v1868 = vadd.f32 %v1779, %v1867
        %v1869 = vpop.f32.mrf.mxu0
        %v1870 = vadd.f32 %v1781, %v1869
        %1871 = vmatmul.bf16.gmra.mxu0 %v744
        %v1872 = vpop.f32.mrf.mxu0
        %v1873 = vadd.f32 %v1784, %v1872
        %v1874 = vpop.f32.mrf.mxu0
        %v1875 = vadd.f32 %v1786, %v1874
        %1876 = vdwg.mxu0
        %1877 = vmatpush.bf16.msra.mxu0 %v1254
        %1878 = vmatpush.bf16.msra.mxu0 %v1253
        %1879 = vmatpush.bf16.msra.mxu0 %v1252
        %1880 = vmatpush.bf16.msra.mxu0 %v1251
        %1881 = vmatpush.bf16.msra.mxu0 %v1250
        %1882 = vmatpush.bf16.msra.mxu0 %v1249
        %1883 = vmatpush.bf16.msra.mxu0 %v1248
        %1884 = vmatpush.bf16.msra.mxu0 %v1247
        %1885 = vmatmul.bf16.gmra.mxu0 %v506
        %v1886 = vpop.f32.mrf.mxu0
        %v1887 = vadd.f32 %v1798, %v1886
        %v1888 = vpop.f32.mrf.mxu0
        %v1889 = vadd.f32 %v1800, %v1888
        %1890 = vmatmul.bf16.gmra.mxu0 %v507
        %v1891 = vpop.f32.mrf.mxu0
        %v1892 = vadd.f32 %v1803, %v1891
        %v1893 = vpop.f32.mrf.mxu0
        %v1894 = vadd.f32 %v1805, %v1893
        %1895 = vmatmul.bf16.gmra.mxu0 %v508
        %v1896 = vpop.f32.mrf.mxu0
        %v1897 = vadd.f32 %v1808, %v1896
        %v1898 = vpop.f32.mrf.mxu0
        %v1899 = vadd.f32 %v1810, %v1898
        %1900 = vmatmul.bf16.gmra.mxu0 %v509
        %v1901 = vpop.f32.mrf.mxu0
        %v1902 = vadd.f32 %v1813, %v1901
        %v1903 = vpop.f32.mrf.mxu0
        %v1904 = vadd.f32 %v1815, %v1903
        %1905 = vmatmul.bf16.gmra.mxu0 %v510
        %v1906 = vpop.f32.mrf.mxu0
        %v1907 = vadd.f32 %v1818, %v1906
        %v1908 = vpop.f32.mrf.mxu0
        %v1909 = vadd.f32 %v1820, %v1908
        %1910 = vmatmul.bf16.gmra.mxu0 %v511
        %v1911 = vpop.f32.mrf.mxu0
        %v1912 = vadd.f32 %v1823, %v1911
        %v1913 = vpop.f32.mrf.mxu0
        %v1914 = vadd.f32 %v1825, %v1913
        %1915 = vmatmul.bf16.gmra.mxu0 %v512
        %v1916 = vpop.f32.mrf.mxu0
        %v1917 = vadd.f32 %v1828, %v1916
        %v1918 = vpop.f32.mrf.mxu0
        %v1919 = vadd.f32 %v1830, %v1918
        %1920 = vmatmul.bf16.gmra.mxu0 %v513
        %v1921 = vpop.f32.mrf.mxu0
        %v1922 = vadd.f32 %v1833, %v1921
        %v1923 = vpop.f32.mrf.mxu0
        %v1924 = vadd.f32 %v1835, %v1923
        %1925 = vmatmul.bf16.gmra.mxu0 %v514
        %v1926 = vpop.f32.mrf.mxu0
        %v1927 = vadd.f32 %v1838, %v1926
        %v1928 = vpop.f32.mrf.mxu0
        %v1929 = vadd.f32 %v1840, %v1928
        %1930 = vmatmul.bf16.gmra.mxu0 %v515
        %v1931 = vpop.f32.mrf.mxu0
        %v1932 = vadd.f32 %v1843, %v1931
        %v1933 = vpop.f32.mrf.mxu0
        %v1934 = vadd.f32 %v1845, %v1933
        %1935 = vmatmul.bf16.gmra.mxu0 %v516
        %v1936 = vpop.f32.mrf.mxu0
        %v1937 = vadd.f32 %v1848, %v1936
        %v1938 = vpop.f32.mrf.mxu0
        %v1939 = vadd.f32 %v1850, %v1938
        %1940 = vmatmul.bf16.gmra.mxu0 %v517
        %v1941 = vpop.f32.mrf.mxu0
        %v1942 = vadd.f32 %v1853, %v1941
        %v1943 = vpop.f32.mrf.mxu0
        %v1944 = vadd.f32 %v1855, %v1943
        %1945 = vmatmul.bf16.gmra.mxu0 %v518
        %v1946 = vpop.f32.mrf.mxu0
        %v1947 = vadd.f32 %v1858, %v1946
        %v1948 = vpop.f32.mrf.mxu0
        %v1949 = vadd.f32 %v1860, %v1948
        %1950 = vmatmul.bf16.gmra.mxu0 %v519
        %v1951 = vpop.f32.mrf.mxu0
        %v1952 = vadd.f32 %v1863, %v1951
        %v1953 = vpop.f32.mrf.mxu0
        %v1954 = vadd.f32 %v1865, %v1953
        %1955 = vmatmul.bf16.gmra.mxu0 %v732
        %v1956 = vpop.f32.mrf.mxu0
        %v1957 = vadd.f32 %v1868, %v1956
        %v1958 = vpop.f32.mrf.mxu0
        %v1959 = vadd.f32 %v1870, %v1958
        %1960 = vmatmul.bf16.gmra.mxu0 %v750
        %v1961 = vpop.f32.mrf.mxu0
        %v1962 = vadd.f32 %v1873, %v1961
        %v1963 = vpop.f32.mrf.mxu0
        %v1964 = vadd.f32 %v1875, %v1963
        %1965 = vdwg.mxu0
        %1966 = vmatpush.bf16.msra.mxu0 %v1262
        %1967 = vmatpush.bf16.msra.mxu0 %v1261
        %1968 = vmatpush.bf16.msra.mxu0 %v1260
        %1969 = vmatpush.bf16.msra.mxu0 %v1259
        %1970 = vmatpush.bf16.msra.mxu0 %v1258
        %1971 = vmatpush.bf16.msra.mxu0 %v1257
        %1972 = vmatpush.bf16.msra.mxu0 %v1256
        %1973 = vmatpush.bf16.msra.mxu0 %v1255
        %1974 = vmatmul.bf16.gmra.mxu0 %v602
        %v1975 = vpop.f32.mrf.mxu0
        %v1976 = vadd.f32 %v1887, %v1975
        %v1977 = vpop.f32.mrf.mxu0
        %v1978 = vadd.f32 %v1889, %v1977
        %1979 = vmatmul.bf16.gmra.mxu0 %v603
        %v1980 = vpop.f32.mrf.mxu0
        %v1981 = vadd.f32 %v1892, %v1980
        %v1982 = vpop.f32.mrf.mxu0
        %v1983 = vadd.f32 %v1894, %v1982
        %1984 = vmatmul.bf16.gmra.mxu0 %v604
        %v1985 = vpop.f32.mrf.mxu0
        %v1986 = vadd.f32 %v1897, %v1985
        %v1987 = vpop.f32.mrf.mxu0
        %v1988 = vadd.f32 %v1899, %v1987
        %1989 = vmatmul.bf16.gmra.mxu0 %v605
        %v1990 = vpop.f32.mrf.mxu0
        %v1991 = vadd.f32 %v1902, %v1990
        %v1992 = vpop.f32.mrf.mxu0
        %v1993 = vadd.f32 %v1904, %v1992
        %1994 = vmatmul.bf16.gmra.mxu0 %v606
        %v1995 = vpop.f32.mrf.mxu0
        %v1996 = vadd.f32 %v1907, %v1995
        %v1997 = vpop.f32.mrf.mxu0
        %v1998 = vadd.f32 %v1909, %v1997
        %1999 = vmatmul.bf16.gmra.mxu0 %v607
        %v2000 = vpop.f32.mrf.mxu0
        %v2001 = vadd.f32 %v1912, %v2000
        %v2002 = vpop.f32.mrf.mxu0
        %v2003 = vadd.f32 %v1914, %v2002
        %2004 = vmatmul.bf16.gmra.mxu0 %v608
        %v2005 = vpop.f32.mrf.mxu0
        %v2006 = vadd.f32 %v1917, %v2005
        %v2007 = vpop.f32.mrf.mxu0
        %v2008 = vadd.f32 %v1919, %v2007
        %2009 = vmatmul.bf16.gmra.mxu0 %v609
        %v2010 = vpop.f32.mrf.mxu0
        %v2011 = vadd.f32 %v1922, %v2010
        %v2012 = vpop.f32.mrf.mxu0
        %v2013 = vadd.f32 %v1924, %v2012
        %2014 = vmatmul.bf16.gmra.mxu0 %v610
        %v2015 = vpop.f32.mrf.mxu0
        %v2016 = vadd.f32 %v1927, %v2015
        %v2017 = vpop.f32.mrf.mxu0
        %v2018 = vadd.f32 %v1929, %v2017
        %2019 = vmatmul.bf16.gmra.mxu0 %v611
        %v2020 = vpop.f32.mrf.mxu0
        %v2021 = vadd.f32 %v1932, %v2020
        %v2022 = vpop.f32.mrf.mxu0
        %v2023 = vadd.f32 %v1934, %v2022
        %2024 = vmatmul.bf16.gmra.mxu0 %v612
        %v2025 = vpop.f32.mrf.mxu0
        %v2026 = vadd.f32 %v1937, %v2025
        %v2027 = vpop.f32.mrf.mxu0
        %v2028 = vadd.f32 %v1939, %v2027
        %2029 = vmatmul.bf16.gmra.mxu0 %v613
        %v2030 = vpop.f32.mrf.mxu0
        %v2031 = vadd.f32 %v1942, %v2030
        %v2032 = vpop.f32.mrf.mxu0
        %v2033 = vadd.f32 %v1944, %v2032
        %2034 = vmatmul.bf16.gmra.mxu0 %v614
        %v2035 = vpop.f32.mrf.mxu0
        %v2036 = vadd.f32 %v1947, %v2035
        %v2037 = vpop.f32.mrf.mxu0
        %v2038 = vadd.f32 %v1949, %v2037
        %2039 = vmatmul.bf16.gmra.mxu0 %v615
        %v2040 = vpop.f32.mrf.mxu0
        %v2041 = vadd.f32 %v1952, %v2040
        %v2042 = vpop.f32.mrf.mxu0
        %v2043 = vadd.f32 %v1954, %v2042
        %2044 = vmatmul.bf16.gmra.mxu0 %v738
        %v2045 = vpop.f32.mrf.mxu0
        %v2046 = vadd.f32 %v1957, %v2045
        %v2047 = vpop.f32.mrf.mxu0
        %v2048 = vadd.f32 %v1959, %v2047
        %2049 = vmatmul.bf16.gmra.mxu0 %v756
        %v2050 = vpop.f32.mrf.mxu0
        %v2051 = vadd.f32 %v1962, %v2050
        %v2052 = vpop.f32.mrf.mxu0
        %v2053 = vadd.f32 %v1964, %v2052
        %2054 = vdwg.mxu0
        %2055 = vmatpush.bf16.msra.mxu0 %v1270
        %2056 = vmatpush.bf16.msra.mxu0 %v1269
        %2057 = vmatpush.bf16.msra.mxu0 %v1268
        %2058 = vmatpush.bf16.msra.mxu0 %v1267
        %2059 = vmatpush.bf16.msra.mxu0 %v1266
        %2060 = vmatpush.bf16.msra.mxu0 %v1265
        %2061 = vmatpush.bf16.msra.mxu0 %v1264
        %2062 = vmatpush.bf16.msra.mxu0 %v1263
        %2063 = vmatmul.bf16.gmra.mxu0 %v698
        %v2064 = vpop.f32.mrf.mxu0
        %v2065 = vadd.f32 %v1976, %v2064
        %v2066 = vpop.f32.mrf.mxu0
        %v2067 = vadd.f32 %v1978, %v2066
        %2068 = vmatmul.bf16.gmra.mxu0 %v699
        %v2069 = vpop.f32.mrf.mxu0
        %v2070 = vadd.f32 %v1981, %v2069
        %v2071 = vpop.f32.mrf.mxu0
        %v2072 = vadd.f32 %v1983, %v2071
        %2073 = vmatmul.bf16.gmra.mxu0 %v700
        %v2074 = vpop.f32.mrf.mxu0
        %v2075 = vadd.f32 %v1986, %v2074
        %v2076 = vpop.f32.mrf.mxu0
        %v2077 = vadd.f32 %v1988, %v2076
        %2078 = vmatmul.bf16.gmra.mxu0 %v701
        %v2079 = vpop.f32.mrf.mxu0
        %v2080 = vadd.f32 %v1991, %v2079
        %v2081 = vpop.f32.mrf.mxu0
        %v2082 = vadd.f32 %v1993, %v2081
        %2083 = vmatmul.bf16.gmra.mxu0 %v702
        %v2084 = vpop.f32.mrf.mxu0
        %v2085 = vadd.f32 %v1996, %v2084
        %v2086 = vpop.f32.mrf.mxu0
        %v2087 = vadd.f32 %v1998, %v2086
        %2088 = vmatmul.bf16.gmra.mxu0 %v703
        %v2089 = vpop.f32.mrf.mxu0
        %v2090 = vadd.f32 %v2001, %v2089
        %v2091 = vpop.f32.mrf.mxu0
        %v2092 = vadd.f32 %v2003, %v2091
        %2093 = vmatmul.bf16.gmra.mxu0 %v704
        %v2094 = vpop.f32.mrf.mxu0
        %v2095 = vadd.f32 %v2006, %v2094
        %v2096 = vpop.f32.mrf.mxu0
        %v2097 = vadd.f32 %v2008, %v2096
        %2098 = vmatmul.bf16.gmra.mxu0 %v705
        %v2099 = vpop.f32.mrf.mxu0
        %v2100 = vadd.f32 %v2011, %v2099
        %v2101 = vpop.f32.mrf.mxu0
        %v2102 = vadd.f32 %v2013, %v2101
        %2103 = vmatmul.bf16.gmra.mxu0 %v706
        %v2104 = vpop.f32.mrf.mxu0
        %v2105 = vadd.f32 %v2016, %v2104
        %v2106 = vpop.f32.mrf.mxu0
        %v2107 = vadd.f32 %v2018, %v2106
        %2108 = vmatmul.bf16.gmra.mxu0 %v707
        %v2109 = vpop.f32.mrf.mxu0
        %v2110 = vadd.f32 %v2021, %v2109
        %v2111 = vpop.f32.mrf.mxu0
        %v2112 = vadd.f32 %v2023, %v2111
        %2113 = vmatmul.bf16.gmra.mxu0 %v708
        %v2114 = vpop.f32.mrf.mxu0
        %v2115 = vadd.f32 %v2026, %v2114
        %v2116 = vpop.f32.mrf.mxu0
        %v2117 = vadd.f32 %v2028, %v2116
        %2118 = vmatmul.bf16.gmra.mxu0 %v709
        %v2119 = vpop.f32.mrf.mxu0
        %v2120 = vadd.f32 %v2031, %v2119
        %v2121 = vpop.f32.mrf.mxu0
        %v2122 = vadd.f32 %v2033, %v2121
        %2123 = vmatmul.bf16.gmra.mxu0 %v710
        %v2124 = vpop.f32.mrf.mxu0
        %v2125 = vadd.f32 %v2036, %v2124
        %v2126 = vpop.f32.mrf.mxu0
        %v2127 = vadd.f32 %v2038, %v2126
        %2128 = vmatmul.bf16.gmra.mxu0 %v711
        %v2129 = vpop.f32.mrf.mxu0
        %v2130 = vadd.f32 %v2041, %v2129
        %v2131 = vpop.f32.mrf.mxu0
        %v2132 = vadd.f32 %v2043, %v2131
        %2133 = vmatmul.bf16.gmra.mxu0 %v744
        %v2134 = vpop.f32.mrf.mxu0
        %v2135 = vadd.f32 %v2046, %v2134
        %v2136 = vpop.f32.mrf.mxu0
        %v2137 = vadd.f32 %v2048, %v2136
        %2138 = vmatmul.bf16.gmra.mxu0 %v762
        %v2139 = vpop.f32.mrf.mxu0
        %v2140 = vadd.f32 %v2051, %v2139
        %v2141 = vpop.f32.mrf.mxu0
        %v2142 = vadd.f32 %v2053, %v2141
        %2143 = vdwg.mxu0
        %v2144 = vmax.f32 %v2065, 0.0
        %v2145 = vmax.f32 %v2067, 0.0
        %v2146 = vmax.f32 %v2070, 0.0
        %v2147 = vmax.f32 %v2072, 0.0
        %v2148 = vmax.f32 %v2075, 0.0
        %v2149 = vmax.f32 %v2077, 0.0
        %v2150 = vmax.f32 %v2080, 0.0
        %v2151 = vmax.f32 %v2082, 0.0
        %v2152 = vmax.f32 %v2085, 0.0
        %v2153 = vmax.f32 %v2087, 0.0
        %v2154 = vmax.f32 %v2090, 0.0
        %v2155 = vmax.f32 %v2092, 0.0
        %v2156 = vmax.f32 %v2095, 0.0
        %v2157 = vmax.f32 %v2097, 0.0
        %v2158 = vmax.f32 %v2100, 0.0
        %v2159 = vmax.f32 %v2102, 0.0
        %v2160 = vmax.f32 %v2105, 0.0
        %v2161 = vmax.f32 %v2107, 0.0
        %v2162 = vmax.f32 %v2110, 0.0
        %v2163 = vmax.f32 %v2112, 0.0
        %v2164 = vmax.f32 %v2115, 0.0
        %v2165 = vmax.f32 %v2117, 0.0
        %v2166 = vmax.f32 %v2120, 0.0
        %v2167 = vmax.f32 %v2122, 0.0
        %v2168 = vmax.f32 %v2125, 0.0
        %v2169 = vmax.f32 %v2127, 0.0
        %v2170 = vmax.f32 %v2130, 0.0
        %v2171 = vmax.f32 %v2132, 0.0
        %v2172 = vmax.f32 %v2135, 0.0
        %v2173 = vmax.f32 %v2137, 0.0
        %v2174 = vmax.f32 %v2140, 0.0
        %v2175 = vmax.f32 %v2142, 0.0
        %2176 = vst [vmem:[#allocation2] sm:$0xff] 0.0
        %2177 = vst [vmem:[#allocation2 + $0x8] sm:$0xff] 0.0
        %2178 = vst [vmem:[#allocation2 + $0x10] sm:$0x3] 0.0
        %s2179 = scalar_lea.vmem [#allocation2], 408
        %2180 = vst [vmem:[%s2179] sm:$0xff] 0.0
        %2181 = vst [vmem:[%s2179 + $0x8] sm:$0xff] 0.0
        %2182 = vst [vmem:[%s2179 + $0x10] sm:$0x3] 0.0
        %s2183 = scalar_lea.vmem [#allocation2], 24
        %2184 = vst [vmem:[%s2183] sm:$0x1] 0.0
        %2185 = vst [vmem:[%s2183 + $0x18] sm:$0x1] 0.0
        %2186 = vst [vmem:[%s2183 + $0x30] sm:$0x1] 0.0
        %2187 = vst [vmem:[%s2183 + $0x48] sm:$0x1] 0.0
        %2188 = vst [vmem:[%s2183 + $0x60] sm:$0x1] 0.0
        %2189 = vst [vmem:[%s2183 + $0x78] sm:$0x1] 0.0
        %2190 = vst [vmem:[%s2183 + $0x90] sm:$0x1] 0.0
        %2191 = vst [vmem:[%s2183 + $0xa8] sm:$0x1] 0.0
        %2192 = vst [vmem:[%s2183 + $0xc0] sm:$0x1] 0.0
        %2193 = vst [vmem:[%s2183 + $0xd8] sm:$0x1] 0.0
        %2194 = vst [vmem:[%s2183 + $0xf0] sm:$0x1] 0.0
        %2195 = vst [vmem:[%s2183 + $0x108] sm:$0x1] 0.0
        %2196 = vst [vmem:[%s2183 + $0x120] sm:$0x1] 0.0
        %2197 = vst [vmem:[%s2183 + $0x138] sm:$0x1] 0.0
        %2198 = vst [vmem:[%s2183 + $0x150] sm:$0x1] 0.0
        %2199 = vst [vmem:[%s2183 + $0x168] sm:$0x1] 0.0
        %2200 = vst [vmem:[%s2183 + $0x11] sm:$0x1] 0.0
        %2201 = vst [vmem:[%s2183 + $0x29] sm:$0x1] 0.0
        %2202 = vst [vmem:[%s2183 + $0x41] sm:$0x1] 0.0
        %2203 = vst [vmem:[%s2183 + $0x59] sm:$0x1] 0.0
        %2204 = vst [vmem:[%s2183 + $0x71] sm:$0x1] 0.0
        %2205 = vst [vmem:[%s2183 + $0x89] sm:$0x1] 0.0
        %2206 = vst [vmem:[%s2183 + $0xa1] sm:$0x1] 0.0
        %2207 = vst [vmem:[%s2183 + $0xb9] sm:$0x1] 0.0
        %2208 = vst [vmem:[%s2183 + $0xd1] sm:$0x1] 0.0
        %2209 = vst [vmem:[%s2183 + $0xe9] sm:$0x1] 0.0
        %2210 = vst [vmem:[%s2183 + $0x101] sm:$0x1] 0.0
        %2211 = vst [vmem:[%s2183 + $0x119] sm:$0x1] 0.0
        %2212 = vst [vmem:[%s2183 + $0x131] sm:$0x1] 0.0
        %2213 = vst [vmem:[%s2183 + $0x149] sm:$0x1] 0.0
        %2214 = vst [vmem:[%s2183 + $0x161] sm:$0x1] 0.0
        %2215 = vst [vmem:[%s2183 + $0x179] sm:$0x1] 0.0
        %2216 = vst [vmem:[%s2183 + $0x1] sm:$0xff] %v2144
        %2217 = vst [vmem:[%s2183 + $0x9] sm:$0xff] %v2145
        %2218 = vst [vmem:[%s2183 + $0x19] sm:$0xff] %v2146
        %2219 = vst [vmem:[%s2183 + $0x21] sm:$0xff] %v2147
        %2220 = vst [vmem:[%s2183 + $0x31] sm:$0xff] %v2148
        %2221 = vst [vmem:[%s2183 + $0x39] sm:$0xff] %v2149
        %2222 = vst [vmem:[%s2183 + $0x49] sm:$0xff] %v2150
        %2223 = vst [vmem:[%s2183 + $0x51] sm:$0xff] %v2151
        %2224 = vst [vmem:[%s2183 + $0x61] sm:$0xff] %v2152
        %2225 = vst [vmem:[%s2183 + $0x69] sm:$0xff] %v2153
        %2226 = vst [vmem:[%s2183 + $0x79] sm:$0xff] %v2154
        %2227 = vst [vmem:[%s2183 + $0x81] sm:$0xff] %v2155
        %2228 = vst [vmem:[%s2183 + $0x91] sm:$0xff] %v2156
        %2229 = vst [vmem:[%s2183 + $0x99] sm:$0xff] %v2157
        %2230 = vst [vmem:[%s2183 + $0xa9] sm:$0xff] %v2158
        %2231 = vst [vmem:[%s2183 + $0xb1] sm:$0xff] %v2159
        %2232 = vst [vmem:[%s2183 + $0xc1] sm:$0xff] %v2160
        %2233 = vst [vmem:[%s2183 + $0xc9] sm:$0xff] %v2161
        %2234 = vst [vmem:[%s2183 + $0xd9] sm:$0xff] %v2162
        %2235 = vst [vmem:[%s2183 + $0xe1] sm:$0xff] %v2163
        %2236 = vst [vmem:[%s2183 + $0xf1] sm:$0xff] %v2164
        %2237 = vst [vmem:[%s2183 + $0xf9] sm:$0xff] %v2165
        %2238 = vst [vmem:[%s2183 + $0x109] sm:$0xff] %v2166
        %2239 = vst [vmem:[%s2183 + $0x111] sm:$0xff] %v2167
        %2240 = vst [vmem:[%s2183 + $0x121] sm:$0xff] %v2168
        %2241 = vst [vmem:[%s2183 + $0x129] sm:$0xff] %v2169
        %2242 = vst [vmem:[%s2183 + $0x139] sm:$0xff] %v2170
        %2243 = vst [vmem:[%s2183 + $0x141] sm:$0xff] %v2171
        %2244 = vst [vmem:[%s2183 + $0x151] sm:$0xff] %v2172
        %2245 = vst [vmem:[%s2183 + $0x159] sm:$0xff] %v2173
        %2246 = vst [vmem:[%s2183 + $0x169] sm:$0xff] %v2174
        %2247 = vst [vmem:[%s2183 + $0x171] sm:$0xff] %v2175
        %v2248 = vld [vmem:[#allocation2] sm:$0xff]
        %v2249 = vld [vmem:[#allocation2 + $0x8] sm:$0xff]
        %v2250 = vld [vmem:[#allocation2 + $0x18] sm:$0xff]
        %v2251 = vld [vmem:[#allocation2 + $0x20] sm:$0xff]
        %v2252 = vld [vmem:[#allocation2 + $0x30] sm:$0xff]
        %v2253 = vld [vmem:[#allocation2 + $0x38] sm:$0xff]
        %v2254 = vld [vmem:[#allocation2 + $0x48] sm:$0xff]
        %v2255 = vld [vmem:[#allocation2 + $0x50] sm:$0xff]
        %v2256 = vld [vmem:[#allocation2 + $0x60] sm:$0xff]
        %v2257 = vld [vmem:[#allocation2 + $0x68] sm:$0xff]
        %v2258 = vld [vmem:[#allocation2 + $0x78] sm:$0xff]
        %v2259 = vld [vmem:[#allocation2 + $0x80] sm:$0xff]
        %v2260 = vld [vmem:[#allocation2 + $0x90] sm:$0xff]
        %v2261 = vld [vmem:[#allocation2 + $0x98] sm:$0xff]
        %v2262 = vld [vmem:[#allocation2 + $0xa8] sm:$0xff]
        %v2263 = vld [vmem:[#allocation2 + $0xb0] sm:$0xff]
        %v2264 = vld [vmem:[#allocation2 + $0xc0] sm:$0xff]
        %v2265 = vld [vmem:[#allocation2 + $0xc8] sm:$0xff]
        %v2266 = vld [vmem:[#allocation2 + $0xd8] sm:$0xff]
        %v2267 = vld [vmem:[#allocation2 + $0xe0] sm:$0xff]
        %v2268 = vld [vmem:[#allocation2 + $0xf0] sm:$0xff]
        %v2269 = vld [vmem:[#allocation2 + $0xf8] sm:$0xff]
        %v2270 = vld [vmem:[#allocation2 + $0x108] sm:$0xff]
        %v2271 = vld [vmem:[#allocation2 + $0x110] sm:$0xff]
        %v2272 = vld [vmem:[#allocation2 + $0x120] sm:$0xff]
        %v2273 = vld [vmem:[#allocation2 + $0x128] sm:$0xff]
        %v2274 = vld [vmem:[#allocation2 + $0x138] sm:$0xff]
        %v2275 = vld [vmem:[#allocation2 + $0x140] sm:$0xff]
        %v2276 = vld [vmem:[#allocation2 + $0x150] sm:$0xff]
        %v2277 = vld [vmem:[#allocation2 + $0x158] sm:$0xff]
        %v2278 = vld [vmem:[#allocation2 + $0x168] sm:$0xff]
        %v2279 = vld [vmem:[#allocation2 + $0x170] sm:$0xff]
        %v2280 = vld [vmem:[#allocation2 + $0x180] sm:$0xff]
        %v2281 = vld [vmem:[#allocation2 + $0x188] sm:$0xff]
        %v2282 = vld [vmem:[#allocation2 + $0x198] sm:$0xff]
        %v2283 = vld [vmem:[#allocation2 + $0x1a0] sm:$0xff]
        %v2284 = vpack.c.bf16 %v2248, %v2248
        %v2285 = vpack.c.bf16 %v2249, %v2249
        %v2286 = vpack.c.bf16 %v2250, %v2250
        %v2287 = vpack.c.bf16 %v2251, %v2251
        %v2288 = vpack.c.bf16 %v2252, %v2252
        %v2289 = vpack.c.bf16 %v2253, %v2253
        %v2290 = vpack.c.bf16 %v2254, %v2254
        %v2291 = vpack.c.bf16 %v2255, %v2255
        %v2292 = vpack.c.bf16 %v2256, %v2256
        %v2293 = vpack.c.bf16 %v2257, %v2257
        %v2294 = vpack.c.bf16 %v2258, %v2258
        %v2295 = vpack.c.bf16 %v2259, %v2259
        %v2296 = vpack.c.bf16 %v2260, %v2260
        %v2297 = vpack.c.bf16 %v2261, %v2261
        %v2298 = vpack.c.bf16 %v2262, %v2262
        %v2299 = vpack.c.bf16 %v2263, %v2263
        %v2300 = vpack.c.bf16 %v2264, %v2264
        %v2301 = vpack.c.bf16 %v2265, %v2265
        %v2302 = vpack.c.bf16 %v2266, %v2266
        %v2303 = vpack.c.bf16 %v2267, %v2267
        %v2304 = vpack.c.bf16 %v2268, %v2268
        %v2305 = vpack.c.bf16 %v2269, %v2269
        %v2306 = vpack.c.bf16 %v2270, %v2270
        %v2307 = vpack.c.bf16 %v2271, %v2271
        %v2308 = vpack.c.bf16 %v2272, %v2272
        %v2309 = vpack.c.bf16 %v2273, %v2273
        %v2310 = vpack.c.bf16 %v2274, %v2274
        %v2311 = vpack.c.bf16 %v2275, %v2275
        %v2312 = vpack.c.bf16 %v2276, %v2276
        %v2313 = vpack.c.bf16 %v2277, %v2277
        %v2314 = vpack.c.bf16 %v2278, %v2278
        %v2315 = vpack.c.bf16 %v2279, %v2279
        %v2316 = vpack.c.bf16 %v2280, %v2280
        %v2317 = vpack.c.bf16 %v2281, %v2281
        %v2318 = vpack.c.bf16 %v2282, %v2282
        %v2319 = vpack.c.bf16 %v2283, %v2283
        %v2320 = vld [vmem:[#allocation2 + $0x1] sm:$0xff]
        %v2321 = vld [vmem:[#allocation2 + $0x9] sm:$0xff]
        %v2322 = vld [vmem:[#allocation2 + $0x19] sm:$0xff]
        %v2323 = vld [vmem:[#allocation2 + $0x21] sm:$0xff]
        %v2324 = vld [vmem:[#allocation2 + $0x31] sm:$0xff]
        %v2325 = vld [vmem:[#allocation2 + $0x39] sm:$0xff]
        %v2326 = vld [vmem:[#allocation2 + $0x49] sm:$0xff]
        %v2327 = vld [vmem:[#allocation2 + $0x51] sm:$0xff]
        %v2328 = vld [vmem:[#allocation2 + $0x61] sm:$0xff]
        %v2329 = vld [vmem:[#allocation2 + $0x69] sm:$0xff]
        %v2330 = vld [vmem:[#allocation2 + $0x79] sm:$0xff]
        %v2331 = vld [vmem:[#allocation2 + $0x81] sm:$0xff]
        %v2332 = vld [vmem:[#allocation2 + $0x91] sm:$0xff]
        %v2333 = vld [vmem:[#allocation2 + $0x99] sm:$0xff]
        %v2334 = vld [vmem:[#allocation2 + $0xa9] sm:$0xff]
        %v2335 = vld [vmem:[#allocation2 + $0xb1] sm:$0xff]
        %v2336 = vld [vmem:[#allocation2 + $0xc1] sm:$0xff]
        %v2337 = vld [vmem:[#allocation2 + $0xc9] sm:$0xff]
        %v2338 = vld [vmem:[#allocation2 + $0xd9] sm:$0xff]
        %v2339 = vld [vmem:[#allocation2 + $0xe1] sm:$0xff]
        %v2340 = vld [vmem:[#allocation2 + $0xf1] sm:$0xff]
        %v2341 = vld [vmem:[#allocation2 + $0xf9] sm:$0xff]
        %v2342 = vld [vmem:[#allocation2 + $0x109] sm:$0xff]
        %v2343 = vld [vmem:[#allocation2 + $0x111] sm:$0xff]
        %v2344 = vld [vmem:[#allocation2 + $0x121] sm:$0xff]
        %v2345 = vld [vmem:[#allocation2 + $0x129] sm:$0xff]
        %v2346 = vld [vmem:[#allocation2 + $0x139] sm:$0xff]
        %v2347 = vld [vmem:[#allocation2 + $0x141] sm:$0xff]
        %v2348 = vld [vmem:[#allocation2 + $0x151] sm:$0xff]
        %v2349 = vld [vmem:[#allocation2 + $0x159] sm:$0xff]
        %v2350 = vld [vmem:[#allocation2 + $0x169] sm:$0xff]
        %v2351 = vld [vmem:[#allocation2 + $0x171] sm:$0xff]
        %v2352 = vld [vmem:[#allocation2 + $0x181] sm:$0xff]
        %v2353 = vld [vmem:[#allocation2 + $0x189] sm:$0xff]
        %v2354 = vld [vmem:[#allocation2 + $0x199] sm:$0xff]
        %v2355 = vld [vmem:[#allocation2 + $0x1a1] sm:$0xff]
        %v2356 = vpack.c.bf16 %v2320, %v2320
        %v2357 = vpack.c.bf16 %v2321, %v2321
        %v2358 = vpack.c.bf16 %v2322, %v2322
        %v2359 = vpack.c.bf16 %v2323, %v2323
        %v2360 = vpack.c.bf16 %v2324, %v2324
        %v2361 = vpack.c.bf16 %v2325, %v2325
        %v2362 = vpack.c.bf16 %v2326, %v2326
        %v2363 = vpack.c.bf16 %v2327, %v2327
        %v2364 = vpack.c.bf16 %v2328, %v2328
        %v2365 = vpack.c.bf16 %v2329, %v2329
        %v2366 = vpack.c.bf16 %v2330, %v2330
        %v2367 = vpack.c.bf16 %v2331, %v2331
        %v2368 = vpack.c.bf16 %v2332, %v2332
        %v2369 = vpack.c.bf16 %v2333, %v2333
        %v2370 = vpack.c.bf16 %v2334, %v2334
        %v2371 = vpack.c.bf16 %v2335, %v2335
        %v2372 = vpack.c.bf16 %v2336, %v2336
        %v2373 = vpack.c.bf16 %v2337, %v2337
        %v2374 = vpack.c.bf16 %v2338, %v2338
        %v2375 = vpack.c.bf16 %v2339, %v2339
        %v2376 = vpack.c.bf16 %v2340, %v2340
        %v2377 = vpack.c.bf16 %v2341, %v2341
        %v2378 = vpack.c.bf16 %v2342, %v2342
        %v2379 = vpack.c.bf16 %v2343, %v2343
        %v2380 = vpack.c.bf16 %v2344, %v2344
        %v2381 = vpack.c.bf16 %v2345, %v2345
        %v2382 = vpack.c.bf16 %v2346, %v2346
        %v2383 = vpack.c.bf16 %v2347, %v2347
        %v2384 = vpack.c.bf16 %v2348, %v2348
        %v2385 = vpack.c.bf16 %v2349, %v2349
        %v2386 = vpack.c.bf16 %v2350, %v2350
        %v2387 = vpack.c.bf16 %v2351, %v2351
        %v2388 = vpack.c.bf16 %v2352, %v2352
        %v2389 = vpack.c.bf16 %v2353, %v2353
        %v2390 = vpack.c.bf16 %v2354, %v2354
        %v2391 = vpack.c.bf16 %v2355, %v2355
        %v2392 = vld [vmem:[#allocation2 + $0x2] sm:$0xff]
        %v2393 = vld [vmem:[#allocation2 + $0xa] sm:$0xff]
        %v2394 = vld [vmem:[#allocation2 + $0x1a] sm:$0xff]
        %v2395 = vld [vmem:[#allocation2 + $0x22] sm:$0xff]
        %v2396 = vld [vmem:[#allocation2 + $0x32] sm:$0xff]
        %v2397 = vld [vmem:[#allocation2 + $0x3a] sm:$0xff]
        %v2398 = vld [vmem:[#allocation2 + $0x4a] sm:$0xff]
        %v2399 = vld [vmem:[#allocation2 + $0x52] sm:$0xff]
        %v2400 = vld [vmem:[#allocation2 + $0x62] sm:$0xff]
        %v2401 = vld [vmem:[#allocation2 + $0x6a] sm:$0xff]
        %v2402 = vld [vmem:[#allocation2 + $0x7a] sm:$0xff]
        %v2403 = vld [vmem:[#allocation2 + $0x82] sm:$0xff]
        %v2404 = vld [vmem:[#allocation2 + $0x92] sm:$0xff]
        %v2405 = vld [vmem:[#allocation2 + $0x9a] sm:$0xff]
        %v2406 = vld [vmem:[#allocation2 + $0xaa] sm:$0xff]
        %v2407 = vld [vmem:[#allocation2 + $0xb2] sm:$0xff]
        %v2408 = vld [vmem:[#allocation2 + $0xc2] sm:$0xff]
        %v2409 = vld [vmem:[#allocation2 + $0xca] sm:$0xff]
        %v2410 = vld [vmem:[#allocation2 + $0xda] sm:$0xff]
        %v2411 = vld [vmem:[#allocation2 + $0xe2] sm:$0xff]
        %v2412 = vld [vmem:[#allocation2 + $0xf2] sm:$0xff]
        %v2413 = vld [vmem:[#allocation2 + $0xfa] sm:$0xff]
        %v2414 = vld [vmem:[#allocation2 + $0x10a] sm:$0xff]
        %v2415 = vld [vmem:[#allocation2 + $0x112] sm:$0xff]
        %v2416 = vld [vmem:[#allocation2 + $0x122] sm:$0xff]
        %v2417 = vld [vmem:[#allocation2 + $0x12a] sm:$0xff]
        %v2418 = vld [vmem:[#allocation2 + $0x13a] sm:$0xff]
        %v2419 = vld [vmem:[#allocation2 + $0x142] sm:$0xff]
        %v2420 = vld [vmem:[#allocation2 + $0x152] sm:$0xff]
        %v2421 = vld [vmem:[#allocation2 + $0x15a] sm:$0xff]
        %v2422 = vld [vmem:[#allocation2 + $0x16a] sm:$0xff]
        %v2423 = vld [vmem:[#allocation2 + $0x172] sm:$0xff]
        %v2424 = vld [vmem:[#allocation2 + $0x182] sm:$0xff]
        %v2425 = vld [vmem:[#allocation2 + $0x18a] sm:$0xff]
        %v2426 = vld [vmem:[#allocation2 + $0x19a] sm:$0xff]
        %v2427 = vld [vmem:[#allocation2 + $0x1a2] sm:$0xff]
        %v2428 = vpack.c.bf16 %v2392, %v2392
        %v2429 = vpack.c.bf16 %v2393, %v2393
        %v2430 = vpack.c.bf16 %v2394, %v2394
        %v2431 = vpack.c.bf16 %v2395, %v2395
        %v2432 = vpack.c.bf16 %v2396, %v2396
        %v2433 = vpack.c.bf16 %v2397, %v2397
        %v2434 = vpack.c.bf16 %v2398, %v2398
        %v2435 = vpack.c.bf16 %v2399, %v2399
        %v2436 = vpack.c.bf16 %v2400, %v2400
        %v2437 = vpack.c.bf16 %v2401, %v2401
        %v2438 = vpack.c.bf16 %v2402, %v2402
        %v2439 = vpack.c.bf16 %v2403, %v2403
        %v2440 = vpack.c.bf16 %v2404, %v2404
        %v2441 = vpack.c.bf16 %v2405, %v2405
        %v2442 = vpack.c.bf16 %v2406, %v2406
        %v2443 = vpack.c.bf16 %v2407, %v2407
        %v2444 = vpack.c.bf16 %v2408, %v2408
        %v2445 = vpack.c.bf16 %v2409, %v2409
        %v2446 = vpack.c.bf16 %v2410, %v2410
        %v2447 = vpack.c.bf16 %v2411, %v2411
        %v2448 = vpack.c.bf16 %v2412, %v2412
        %v2449 = vpack.c.bf16 %v2413, %v2413
        %v2450 = vpack.c.bf16 %v2414, %v2414
        %v2451 = vpack.c.bf16 %v2415, %v2415
        %v2452 = vpack.c.bf16 %v2416, %v2416
        %v2453 = vpack.c.bf16 %v2417, %v2417
        %v2454 = vpack.c.bf16 %v2418, %v2418
        %v2455 = vpack.c.bf16 %v2419, %v2419
        %v2456 = vpack.c.bf16 %v2420, %v2420
        %v2457 = vpack.c.bf16 %v2421, %v2421
        %v2458 = vpack.c.bf16 %v2422, %v2422
        %v2459 = vpack.c.bf16 %v2423, %v2423
        %v2460 = vpack.c.bf16 %v2424, %v2424
        %v2461 = vpack.c.bf16 %v2425, %v2425
        %v2462 = vpack.c.bf16 %v2426, %v2426
        %v2463 = vpack.c.bf16 %v2427, %v2427
        %v2464 = vld [vmem:[%s4] sm:$0x1]
        %v2497 = vunpack.c.l.b16 %v2284
        %v2498 = vunpack.c.l.b16 %v2285
        %v2499 = vunpack.c.l.b16 %v2286
        %v2500 = vunpack.c.l.b16 %v2287
        %v2501 = vunpack.c.l.b16 %v2288
        %v2502 = vunpack.c.l.b16 %v2289
        %v2503 = vunpack.c.l.b16 %v2290
        %v2504 = vunpack.c.l.b16 %v2291
        %v2505 = vunpack.c.l.b16 %v2292
        %v2506 = vunpack.c.l.b16 %v2293
        %v2507 = vunpack.c.l.b16 %v2294
        %v2508 = vunpack.c.l.b16 %v2295
        %v2509 = vunpack.c.l.b16 %v2296
        %v2510 = vunpack.c.l.b16 %v2297
        %v2511 = vunpack.c.l.b16 %v2298
        %v2512 = vunpack.c.l.b16 %v2299
        %v2513 = vunpack.c.l.b16 %v2300
        %v2514 = vunpack.c.l.b16 %v2301
        %v2515 = vunpack.c.l.b16 %v2302
        %v2516 = vunpack.c.l.b16 %v2303
        %v2517 = vunpack.c.l.b16 %v2304
        %v2518 = vunpack.c.l.b16 %v2305
        %v2519 = vunpack.c.l.b16 %v2306
        %v2520 = vunpack.c.l.b16 %v2307
        %v2521 = vunpack.c.l.b16 %v2308
        %v2522 = vunpack.c.l.b16 %v2309
        %v2523 = vunpack.c.l.b16 %v2310
        %v2524 = vunpack.c.l.b16 %v2311
        %v2525 = vunpack.c.l.b16 %v2312
        %v2526 = vunpack.c.l.b16 %v2313
        %v2527 = vunpack.c.l.b16 %v2314
        %v2528 = vunpack.c.l.b16 %v2315
        %v2529 = vpack.c.b16 %v2498, %v2497
        %v2530 = vpack.c.b16 %v2500, %v2499
        %v2531 = vpack.c.b16 %v2502, %v2501
        %v2532 = vpack.c.b16 %v2504, %v2503
        %v2533 = vpack.c.b16 %v2506, %v2505
        %v2534 = vpack.c.b16 %v2508, %v2507
        %v2535 = vpack.c.b16 %v2510, %v2509
        %v2536 = vpack.c.b16 %v2512, %v2511
        %v2537 = vpack.c.b16 %v2514, %v2513
        %v2538 = vpack.c.b16 %v2516, %v2515
        %v2539 = vpack.c.b16 %v2518, %v2517
        %v2540 = vpack.c.b16 %v2520, %v2519
        %v2541 = vpack.c.b16 %v2522, %v2521
        %v2542 = vpack.c.b16 %v2524, %v2523
        %v2543 = vpack.c.b16 %v2526, %v2525
        %v2544 = vpack.c.b16 %v2528, %v2527
        %v2593 = vunpack.c.l.b16 %v2356
        %v2594 = vunpack.c.l.b16 %v2357
        %v2595 = vunpack.c.l.b16 %v2358
        %v2596 = vunpack.c.l.b16 %v2359
        %v2597 = vunpack.c.l.b16 %v2360
        %v2598 = vunpack.c.l.b16 %v2361
        %v2599 = vunpack.c.l.b16 %v2362
        %v2600 = vunpack.c.l.b16 %v2363
        %v2601 = vunpack.c.l.b16 %v2364
        %v2602 = vunpack.c.l.b16 %v2365
        %v2603 = vunpack.c.l.b16 %v2366
        %v2604 = vunpack.c.l.b16 %v2367
        %v2605 = vunpack.c.l.b16 %v2368
        %v2606 = vunpack.c.l.b16 %v2369
        %v2607 = vunpack.c.l.b16 %v2370
        %v2608 = vunpack.c.l.b16 %v2371
        %v2609 = vunpack.c.l.b16 %v2372
        %v2610 = vunpack.c.l.b16 %v2373
        %v2611 = vunpack.c.l.b16 %v2374
        %v2612 = vunpack.c.l.b16 %v2375
        %v2613 = vunpack.c.l.b16 %v2376
        %v2614 = vunpack.c.l.b16 %v2377
        %v2615 = vunpack.c.l.b16 %v2378
        %v2616 = vunpack.c.l.b16 %v2379
        %v2617 = vunpack.c.l.b16 %v2380
        %v2618 = vunpack.c.l.b16 %v2381
        %v2619 = vunpack.c.l.b16 %v2382
        %v2620 = vunpack.c.l.b16 %v2383
        %v2621 = vunpack.c.l.b16 %v2384
        %v2622 = vunpack.c.l.b16 %v2385
        %v2623 = vunpack.c.l.b16 %v2386
        %v2624 = vunpack.c.l.b16 %v2387
        %v2625 = vpack.c.b16 %v2594, %v2593
        %v2626 = vpack.c.b16 %v2596, %v2595
        %v2627 = vpack.c.b16 %v2598, %v2597
        %v2628 = vpack.c.b16 %v2600, %v2599
        %v2629 = vpack.c.b16 %v2602, %v2601
        %v2630 = vpack.c.b16 %v2604, %v2603
        %v2631 = vpack.c.b16 %v2606, %v2605
        %v2632 = vpack.c.b16 %v2608, %v2607
        %v2633 = vpack.c.b16 %v2610, %v2609
        %v2634 = vpack.c.b16 %v2612, %v2611
        %v2635 = vpack.c.b16 %v2614, %v2613
        %v2636 = vpack.c.b16 %v2616, %v2615
        %v2637 = vpack.c.b16 %v2618, %v2617
        %v2638 = vpack.c.b16 %v2620, %v2619
        %v2639 = vpack.c.b16 %v2622, %v2621
        %v2640 = vpack.c.b16 %v2624, %v2623
        %v2689 = vunpack.c.l.b16 %v2428
        %v2690 = vunpack.c.l.b16 %v2429
        %v2691 = vunpack.c.l.b16 %v2430
        %v2692 = vunpack.c.l.b16 %v2431
        %v2693 = vunpack.c.l.b16 %v2432
        %v2694 = vunpack.c.l.b16 %v2433
        %v2695 = vunpack.c.l.b16 %v2434
        %v2696 = vunpack.c.l.b16 %v2435
        %v2697 = vunpack.c.l.b16 %v2436
        %v2698 = vunpack.c.l.b16 %v2437
        %v2699 = vunpack.c.l.b16 %v2438
        %v2700 = vunpack.c.l.b16 %v2439
        %v2701 = vunpack.c.l.b16 %v2440
        %v2702 = vunpack.c.l.b16 %v2441
        %v2703 = vunpack.c.l.b16 %v2442
        %v2704 = vunpack.c.l.b16 %v2443
        %v2705 = vunpack.c.l.b16 %v2444
        %v2706 = vunpack.c.l.b16 %v2445
        %v2707 = vunpack.c.l.b16 %v2446
        %v2708 = vunpack.c.l.b16 %v2447
        %v2709 = vunpack.c.l.b16 %v2448
        %v2710 = vunpack.c.l.b16 %v2449
        %v2711 = vunpack.c.l.b16 %v2450
        %v2712 = vunpack.c.l.b16 %v2451
        %v2713 = vunpack.c.l.b16 %v2452
        %v2714 = vunpack.c.l.b16 %v2453
        %v2715 = vunpack.c.l.b16 %v2454
        %v2716 = vunpack.c.l.b16 %v2455
        %v2717 = vunpack.c.l.b16 %v2456
        %v2718 = vunpack.c.l.b16 %v2457
        %v2719 = vunpack.c.l.b16 %v2458
        %v2720 = vunpack.c.l.b16 %v2459
        %v2721 = vpack.c.b16 %v2690, %v2689
        %v2722 = vpack.c.b16 %v2692, %v2691
        %v2723 = vpack.c.b16 %v2694, %v2693
        %v2724 = vpack.c.b16 %v2696, %v2695
        %v2725 = vpack.c.b16 %v2698, %v2697
        %v2726 = vpack.c.b16 %v2700, %v2699
        %v2727 = vpack.c.b16 %v2702, %v2701
        %v2728 = vpack.c.b16 %v2704, %v2703
        %v2729 = vpack.c.b16 %v2706, %v2705
        %v2730 = vpack.c.b16 %v2708, %v2707
        %v2731 = vpack.c.b16 %v2710, %v2709
        %v2732 = vpack.c.b16 %v2712, %v2711
        %v2733 = vpack.c.b16 %v2714, %v2713
        %v2734 = vpack.c.b16 %v2716, %v2715
        %v2735 = vpack.c.b16 %v2718, %v2717
        %v2736 = vpack.c.b16 %v2720, %v2719
        %v2755 = vunpack.c.l.b16 %v2316
        %v2756 = vunpack.c.l.b16 %v2317
        %v2757 = vpack.c.b16 %v2756, %v2755
        %v2761 = vunpack.c.l.b16 %v2388
        %v2762 = vunpack.c.l.b16 %v2389
        %v2763 = vpack.c.b16 %v2762, %v2761
        %v2767 = vunpack.c.l.b16 %v2460
        %v2768 = vunpack.c.l.b16 %v2461
        %v2769 = vpack.c.b16 %v2768, %v2767
        %v2773 = vunpack.c.l.b16 %v2318
        %v2774 = vunpack.c.l.b16 %v2319
        %v2775 = vpack.c.b16 %v2774, %v2773
        %v2779 = vunpack.c.l.b16 %v2390
        %v2780 = vunpack.c.l.b16 %v2391
        %v2781 = vpack.c.b16 %v2780, %v2779
        %v2785 = vunpack.c.l.b16 %v2462
        %v2786 = vunpack.c.l.b16 %v2463
        %v2787 = vpack.c.b16 %v2786, %v2785
        %v2789 = vld [vmem:[%s3] sm:$0xf]
        %v2790 = vld [vmem:[%s3 + $0x4] sm:$0xf]
        %v2791 = vld [vmem:[%s3 + $0x8] sm:$0xf]
        %v2792 = vld [vmem:[%s3 + $0xc] sm:$0xf]
        %v2793 = vld [vmem:[%s3 + $0x10] sm:$0xf]
        %v2794 = vld [vmem:[%s3 + $0x14] sm:$0xf]
        %v2795 = vld [vmem:[%s3 + $0x18] sm:$0xf]
        %v2796 = vld [vmem:[%s3 + $0x1c] sm:$0xf]
        %v2797 = vld [vmem:[%s3 + $0x20] sm:$0xf]
        %v2798 = vld [vmem:[%s3 + $0x24] sm:$0xf]
        %v2799 = vld [vmem:[%s3 + $0x28] sm:$0xf]
        %v2800 = vld [vmem:[%s3 + $0x2c] sm:$0xf]
        %v2801 = vld [vmem:[%s3 + $0x30] sm:$0xf]
        %v2802 = vld [vmem:[%s3 + $0x34] sm:$0xf]
        %v2803 = vld [vmem:[%s3 + $0x38] sm:$0xf]
        %v2804 = vld [vmem:[%s3 + $0x3c] sm:$0xf]
        %v2805 = vld [vmem:[%s3 + $0x40] sm:$0xf]
        %v2806 = vld [vmem:[%s3 + $0x44] sm:$0xf]
        %v2807 = vld [vmem:[%s3 + $0x48] sm:$0xf]
        %v2808 = vld [vmem:[%s3 + $0x4c] sm:$0xf]
        %v2809 = vld [vmem:[%s3 + $0x50] sm:$0xf]
        %v2810 = vld [vmem:[%s3 + $0x54] sm:$0xf]
        %v2811 = vld [vmem:[%s3 + $0x58] sm:$0xf]
        %v2812 = vld [vmem:[%s3 + $0x5c] sm:$0xf]
        %v2813 = vld [vmem:[%s3 + $0x60] sm:$0xf]
        %v2814 = vld [vmem:[%s3 + $0x64] sm:$0xf]
        %v2815 = vld [vmem:[%s3 + $0x68] sm:$0xf]
        %v2816 = vld [vmem:[%s3 + $0x6c] sm:$0xf]
        %v2817 = vld [vmem:[%s3 + $0x70] sm:$0xf]
        %v2818 = vld [vmem:[%s3 + $0x74] sm:$0xf]
        %v2819 = vld [vmem:[%s3 + $0x78] sm:$0xf]
        %v2820 = vld [vmem:[%s3 + $0x7c] sm:$0xf]
        %v2821 = vld [vmem:[%s3 + $0x80] sm:$0xf]
        %v2822 = vld [vmem:[%s3 + $0x84] sm:$0xf]
        %v2823 = vld [vmem:[%s3 + $0x88] sm:$0xf]
        %v2824 = vld [vmem:[%s3 + $0x8c] sm:$0xf]
        %v2825 = vld [vmem:[%s3 + $0x90] sm:$0xf]
        %v2826 = vld [vmem:[%s3 + $0x94] sm:$0xf]
        %v2827 = vld [vmem:[%s3 + $0x98] sm:$0xf]
        %v2828 = vld [vmem:[%s3 + $0x9c] sm:$0xf]
        %v2829 = vld [vmem:[%s3 + $0xa0] sm:$0xf]
        %v2830 = vld [vmem:[%s3 + $0xa4] sm:$0xf]
        %v2831 = vld [vmem:[%s3 + $0xa8] sm:$0xf]
        %v2832 = vld [vmem:[%s3 + $0xac] sm:$0xf]
        %v2833 = vld [vmem:[%s3 + $0xb0] sm:$0xf]
        %v2834 = vld [vmem:[%s3 + $0xb4] sm:$0xf]
        %v2835 = vld [vmem:[%s3 + $0xb8] sm:$0xf]
        %v2836 = vld [vmem:[%s3 + $0xbc] sm:$0xf]
        %v2837 = vld [vmem:[%s3 + $0xc0] sm:$0xf]
        %v2838 = vld [vmem:[%s3 + $0xc4] sm:$0xf]
        %v2839 = vld [vmem:[%s3 + $0xc8] sm:$0xf]
        %v2840 = vld [vmem:[%s3 + $0xcc] sm:$0xf]
        %v2841 = vld [vmem:[%s3 + $0xd0] sm:$0xf]
        %v2842 = vld [vmem:[%s3 + $0xd4] sm:$0xf]
        %v2843 = vld [vmem:[%s3 + $0xd8] sm:$0xf]
        %v2844 = vld [vmem:[%s3 + $0xdc] sm:$0xf]
        %v2845 = vld [vmem:[%s3 + $0xe0] sm:$0xf]
        %v2846 = vld [vmem:[%s3 + $0xe4] sm:$0xf]
        %v2847 = vld [vmem:[%s3 + $0xe8] sm:$0xf]
        %v2848 = vld [vmem:[%s3 + $0xec] sm:$0xf]
        %v2849 = vld [vmem:[%s3 + $0xf0] sm:$0xf]
        %v2850 = vld [vmem:[%s3 + $0xf4] sm:$0xf]
        %v2851 = vld [vmem:[%s3 + $0xf8] sm:$0xf]
        %v2852 = vld [vmem:[%s3 + $0xfc] sm:$0xf]
        %v2853 = vld [vmem:[%s3 + $0x100] sm:$0xf]
        %v2854 = vld [vmem:[%s3 + $0x104] sm:$0xf]
        %v2855 = vld [vmem:[%s3 + $0x108] sm:$0xf]
        %v2856 = vld [vmem:[%s3 + $0x10c] sm:$0xf]
        %v2857 = vld [vmem:[%s3 + $0x110] sm:$0xf]
        %v2858 = vld [vmem:[%s3 + $0x114] sm:$0xf]
        %v2859 = vld [vmem:[%s3 + $0x118] sm:$0xf]
        %v2860 = vld [vmem:[%s3 + $0x11c] sm:$0xf]
        %v2861 = vld [vmem:[%s3 + $0x120] sm:$0xf]
        %v2862 = vld [vmem:[%s3 + $0x124] sm:$0xf]
        %v2863 = vld [vmem:[%s3 + $0x128] sm:$0xf]
        %v2864 = vld [vmem:[%s3 + $0x12c] sm:$0xf]
        %v2865 = vld [vmem:[%s3 + $0x130] sm:$0xf]
        %v2866 = vld [vmem:[%s3 + $0x134] sm:$0xf]
        %v2867 = vld [vmem:[%s3 + $0x138] sm:$0xf]
        %v2868 = vld [vmem:[%s3 + $0x13c] sm:$0xf]
        %v2869 = vld [vmem:[%s3 + $0x140] sm:$0xf]
        %v2870 = vld [vmem:[%s3 + $0x144] sm:$0xf]
        %v2871 = vld [vmem:[%s3 + $0x148] sm:$0xf]
        %v2872 = vld [vmem:[%s3 + $0x14c] sm:$0xf]
        %v2873 = vld [vmem:[%s3 + $0x150] sm:$0xf]
        %v2874 = vld [vmem:[%s3 + $0x154] sm:$0xf]
        %v2875 = vld [vmem:[%s3 + $0x158] sm:$0xf]
        %v2876 = vld [vmem:[%s3 + $0x15c] sm:$0xf]
        %v2877 = vld [vmem:[%s3 + $0x160] sm:$0xf]
        %v2878 = vld [vmem:[%s3 + $0x164] sm:$0xf]
        %v2879 = vld [vmem:[%s3 + $0x168] sm:$0xf]
        %v2880 = vld [vmem:[%s3 + $0x16c] sm:$0xf]
        %v2881 = vld [vmem:[%s3 + $0x170] sm:$0xf]
        %v2882 = vld [vmem:[%s3 + $0x174] sm:$0xf]
        %v2883 = vld [vmem:[%s3 + $0x178] sm:$0xf]
        %v2884 = vld [vmem:[%s3 + $0x17c] sm:$0xf]
        %v2885 = vld [vmem:[%s3 + $0x180] sm:$0xf]
        %v2886 = vld [vmem:[%s3 + $0x184] sm:$0xf]
        %v2887 = vld [vmem:[%s3 + $0x188] sm:$0xf]
        %v2888 = vld [vmem:[%s3 + $0x18c] sm:$0xf]
        %v2889 = vld [vmem:[%s3 + $0x190] sm:$0xf]
        %v2890 = vld [vmem:[%s3 + $0x194] sm:$0xf]
        %v2891 = vld [vmem:[%s3 + $0x198] sm:$0xf]
        %v2892 = vld [vmem:[%s3 + $0x19c] sm:$0xf]
        %v2893 = vld [vmem:[%s3 + $0x1a0] sm:$0xf]
        %v2894 = vld [vmem:[%s3 + $0x1a4] sm:$0xf]
        %v2895 = vld [vmem:[%s3 + $0x1a8] sm:$0xf]
        %v2896 = vld [vmem:[%s3 + $0x1ac] sm:$0xf]
        %v2897 = vld [vmem:[%s3 + $0x1b0] sm:$0xf]
        %v2898 = vld [vmem:[%s3 + $0x1b4] sm:$0xf]
        %v2899 = vld [vmem:[%s3 + $0x1b8] sm:$0xf]
        %v2900 = vld [vmem:[%s3 + $0x1bc] sm:$0xf]
        %v2901 = vld [vmem:[%s3 + $0x1c0] sm:$0xf]
        %v2902 = vld [vmem:[%s3 + $0x1c4] sm:$0xf]
        %v2903 = vld [vmem:[%s3 + $0x1c8] sm:$0xf]
        %v2904 = vld [vmem:[%s3 + $0x1cc] sm:$0xf]
        %v2905 = vld [vmem:[%s3 + $0x1d0] sm:$0xf]
        %v2906 = vld [vmem:[%s3 + $0x1d4] sm:$0xf]
        %v2907 = vld [vmem:[%s3 + $0x1d8] sm:$0xf]
        %v2908 = vld [vmem:[%s3 + $0x1dc] sm:$0xf]
        %v2909 = vld [vmem:[%s3 + $0x1e0] sm:$0xf]
        %v2910 = vld [vmem:[%s3 + $0x1e4] sm:$0xf]
        %v2911 = vld [vmem:[%s3 + $0x1e8] sm:$0xf]
        %v2912 = vld [vmem:[%s3 + $0x1ec] sm:$0xf]
        %v2913 = vld [vmem:[%s3 + $0x1f0] sm:$0xf]
        %v2914 = vld [vmem:[%s3 + $0x1f4] sm:$0xf]
        %v2915 = vld [vmem:[%s3 + $0x1f8] sm:$0xf]
        %v2916 = vld [vmem:[%s3 + $0x1fc] sm:$0xf]
        %v2917 = vld [vmem:[%s3 + $0x200] sm:$0xf]
        %v2918 = vld [vmem:[%s3 + $0x204] sm:$0xf]
        %v2919 = vld [vmem:[%s3 + $0x208] sm:$0xf]
        %v2920 = vld [vmem:[%s3 + $0x20c] sm:$0xf]
        %v2921 = vld [vmem:[%s3 + $0x210] sm:$0xf]
        %v2922 = vld [vmem:[%s3 + $0x214] sm:$0xf]
        %v2923 = vld [vmem:[%s3 + $0x218] sm:$0xf]
        %v2924 = vld [vmem:[%s3 + $0x21c] sm:$0xf]
        %v2925 = vld [vmem:[%s3 + $0x220] sm:$0xf]
        %v2926 = vld [vmem:[%s3 + $0x224] sm:$0xf]
        %v2927 = vld [vmem:[%s3 + $0x228] sm:$0xf]
        %v2928 = vld [vmem:[%s3 + $0x22c] sm:$0xf]
        %v2929 = vld [vmem:[%s3 + $0x230] sm:$0xf]
        %v2930 = vld [vmem:[%s3 + $0x234] sm:$0xf]
        %v2931 = vld [vmem:[%s3 + $0x238] sm:$0xf]
        %v2932 = vld [vmem:[%s3 + $0x23c] sm:$0xf]
        %v2934 = vperm.slane %v2464, 0
        %v3080 = vunpack.c.l.b16 %v2789
        %v3081 = vunpack.c.l.b16 %v2790
        %v3082 = vunpack.c.l.b16 %v2791
        %v3083 = vunpack.c.l.b16 %v2792
        %v3084 = vunpack.c.l.b16 %v2793
        %v3085 = vunpack.c.l.b16 %v2794
        %v3086 = vunpack.c.l.b16 %v2795
        %v3087 = vunpack.c.l.b16 %v2796
        %v3088 = vunpack.c.l.b16 %v2797
        %v3089 = vunpack.c.l.b16 %v2798
        %v3090 = vunpack.c.l.b16 %v2799
        %v3091 = vunpack.c.l.b16 %v2800
        %v3092 = vunpack.c.l.b16 %v2801
        %v3093 = vunpack.c.l.b16 %v2802
        %v3094 = vunpack.c.l.b16 %v2803
        %v3095 = vunpack.c.l.b16 %v2804
        %v3096 = vunpack.c.l.b16 %v2805
        %v3097 = vunpack.c.l.b16 %v2806
        %v3098 = vunpack.c.l.b16 %v2807
        %v3099 = vunpack.c.l.b16 %v2808
        %v3100 = vunpack.c.l.b16 %v2809
        %v3101 = vunpack.c.l.b16 %v2810
        %v3102 = vunpack.c.l.b16 %v2811
        %v3103 = vunpack.c.l.b16 %v2812
        %v3104 = vunpack.c.l.b16 %v2813
        %v3105 = vunpack.c.l.b16 %v2814
        %v3106 = vunpack.c.l.b16 %v2815
        %v3107 = vunpack.c.l.b16 %v2816
        %v3108 = vunpack.c.l.b16 %v2817
        %v3109 = vunpack.c.l.b16 %v2818
        %v3110 = vunpack.c.l.b16 %v2819
        %v3111 = vunpack.c.l.b16 %v2820
        %v3112 = vunpack.c.l.b16 %v2821
        %v3113 = vunpack.c.l.b16 %v2822
        %v3114 = vunpack.c.l.b16 %v2823
        %v3115 = vunpack.c.l.b16 %v2824
        %v3116 = vunpack.c.l.b16 %v2825
        %v3117 = vunpack.c.l.b16 %v2826
        %v3118 = vunpack.c.l.b16 %v2827
        %v3119 = vunpack.c.l.b16 %v2828
        %v3120 = vunpack.c.l.b16 %v2829
        %v3121 = vunpack.c.l.b16 %v2830
        %v3122 = vunpack.c.l.b16 %v2831
        %v3123 = vunpack.c.l.b16 %v2832
        %v3124 = vunpack.c.l.b16 %v2833
        %v3125 = vunpack.c.l.b16 %v2834
        %v3126 = vunpack.c.l.b16 %v2835
        %v3127 = vunpack.c.l.b16 %v2836
        %v3128 = vunpack.c.l.b16 %v2837
        %v3129 = vunpack.c.l.b16 %v2838
        %v3130 = vunpack.c.l.b16 %v2839
        %v3131 = vunpack.c.l.b16 %v2840
        %v3132 = vunpack.c.l.b16 %v2841
        %v3133 = vunpack.c.l.b16 %v2842
        %v3134 = vunpack.c.l.b16 %v2843
        %v3135 = vunpack.c.l.b16 %v2844
        %v3136 = vunpack.c.l.b16 %v2845
        %v3137 = vunpack.c.l.b16 %v2846
        %v3138 = vunpack.c.l.b16 %v2847
        %v3139 = vunpack.c.l.b16 %v2848
        %v3140 = vunpack.c.l.b16 %v2849
        %v3141 = vunpack.c.l.b16 %v2850
        %v3142 = vunpack.c.l.b16 %v2851
        %v3143 = vunpack.c.l.b16 %v2852
        %v3144 = vunpack.c.l.b16 %v2853
        %v3145 = vunpack.c.l.b16 %v2854
        %v3146 = vunpack.c.l.b16 %v2855
        %v3147 = vunpack.c.l.b16 %v2856
        %v3148 = vunpack.c.l.b16 %v2857
        %v3149 = vunpack.c.l.b16 %v2858
        %v3150 = vunpack.c.l.b16 %v2859
        %v3151 = vunpack.c.l.b16 %v2860
        %v3152 = vunpack.c.l.b16 %v2861
        %v3153 = vunpack.c.l.b16 %v2862
        %v3154 = vunpack.c.l.b16 %v2863
        %v3155 = vunpack.c.l.b16 %v2864
        %v3156 = vunpack.c.l.b16 %v2865
        %v3157 = vunpack.c.l.b16 %v2866
        %v3158 = vunpack.c.l.b16 %v2867
        %v3159 = vunpack.c.l.b16 %v2868
        %v3160 = vunpack.c.l.b16 %v2869
        %v3161 = vunpack.c.l.b16 %v2870
        %v3162 = vunpack.c.l.b16 %v2871
        %v3163 = vunpack.c.l.b16 %v2872
        %v3164 = vunpack.c.l.b16 %v2873
        %v3165 = vunpack.c.l.b16 %v2874
        %v3166 = vunpack.c.l.b16 %v2875
        %v3167 = vunpack.c.l.b16 %v2876
        %v3168 = vunpack.c.l.b16 %v2877
        %v3169 = vunpack.c.l.b16 %v2878
        %v3170 = vunpack.c.l.b16 %v2879
        %v3171 = vunpack.c.l.b16 %v2880
        %v3172 = vunpack.c.l.b16 %v2881
        %v3173 = vunpack.c.l.b16 %v2882
        %v3174 = vunpack.c.l.b16 %v2883
        %v3175 = vunpack.c.l.b16 %v2884
        %v3176 = vunpack.c.l.b16 %v2885
        %v3177 = vunpack.c.l.b16 %v2886
        %v3178 = vunpack.c.l.b16 %v2887
        %v3179 = vunpack.c.l.b16 %v2888
        %v3180 = vunpack.c.l.b16 %v2889
        %v3181 = vunpack.c.l.b16 %v2890
        %v3182 = vunpack.c.l.b16 %v2891
        %v3183 = vunpack.c.l.b16 %v2892
        %v3184 = vunpack.c.l.b16 %v2893
        %v3185 = vunpack.c.l.b16 %v2894
        %v3186 = vunpack.c.l.b16 %v2895
        %v3187 = vunpack.c.l.b16 %v2896
        %v3188 = vunpack.c.l.b16 %v2897
        %v3189 = vunpack.c.l.b16 %v2898
        %v3190 = vunpack.c.l.b16 %v2899
        %v3191 = vunpack.c.l.b16 %v2900
        %v3192 = vunpack.c.l.b16 %v2901
        %v3193 = vunpack.c.l.b16 %v2902
        %v3194 = vunpack.c.l.b16 %v2903
        %v3195 = vunpack.c.l.b16 %v2904
        %v3196 = vunpack.c.l.b16 %v2905
        %v3197 = vunpack.c.l.b16 %v2906
        %v3198 = vunpack.c.l.b16 %v2907
        %v3199 = vunpack.c.l.b16 %v2908
        %v3200 = vunpack.c.l.b16 %v2909
        %v3201 = vunpack.c.l.b16 %v2910
        %v3202 = vunpack.c.l.b16 %v2911
        %v3203 = vunpack.c.l.b16 %v2912
        %v3204 = vunpack.c.l.b16 %v2913
        %v3205 = vunpack.c.l.b16 %v2914
        %v3206 = vunpack.c.l.b16 %v2915
        %v3207 = vunpack.c.l.b16 %v2916
        %v3208 = vunpack.c.l.b16 %v2917
        %v3209 = vunpack.c.l.b16 %v2918
        %v3210 = vunpack.c.l.b16 %v2919
        %v3211 = vunpack.c.l.b16 %v2920
        %v3212 = vunpack.c.l.b16 %v2921
        %v3213 = vunpack.c.l.b16 %v2922
        %v3214 = vunpack.c.l.b16 %v2923
        %v3215 = vunpack.c.l.b16 %v2924
        %v3216 = vunpack.c.l.b16 %v2925
        %v3217 = vunpack.c.l.b16 %v2926
        %v3218 = vunpack.c.l.b16 %v2927
        %v3219 = vunpack.c.l.b16 %v2928
        %v3220 = vunpack.c.l.b16 %v2929
        %v3221 = vunpack.c.l.b16 %v2930
        %v3222 = vunpack.c.l.b16 %v2931
        %v3223 = vunpack.c.l.b16 %v2932
        %v3224 = vpack.c.b16 %v3081, %v3080
        %v3225 = vpack.c.b16 %v3083, %v3082
        %v3226 = vpack.c.b16 %v3085, %v3084
        %v3227 = vpack.c.b16 %v3087, %v3086
        %v3228 = vpack.c.b16 %v3089, %v3088
        %v3229 = vpack.c.b16 %v3091, %v3090
        %v3230 = vpack.c.b16 %v3093, %v3092
        %v3231 = vpack.c.b16 %v3095, %v3094
        %v3232 = vpack.c.b16 %v3097, %v3096
        %v3233 = vpack.c.b16 %v3099, %v3098
        %v3234 = vpack.c.b16 %v3101, %v3100
        %v3235 = vpack.c.b16 %v3103, %v3102
        %v3236 = vpack.c.b16 %v3105, %v3104
        %v3237 = vpack.c.b16 %v3107, %v3106
        %v3238 = vpack.c.b16 %v3109, %v3108
        %v3239 = vpack.c.b16 %v3111, %v3110
        %v3240 = vpack.c.b16 %v3113, %v3112
        %v3241 = vpack.c.b16 %v3115, %v3114
        %v3242 = vpack.c.b16 %v3117, %v3116
        %v3243 = vpack.c.b16 %v3119, %v3118
        %v3244 = vpack.c.b16 %v3121, %v3120
        %v3245 = vpack.c.b16 %v3123, %v3122
        %v3246 = vpack.c.b16 %v3125, %v3124
        %v3247 = vpack.c.b16 %v3127, %v3126
        %v3248 = vpack.c.b16 %v3129, %v3128
        %v3249 = vpack.c.b16 %v3131, %v3130
        %v3250 = vpack.c.b16 %v3133, %v3132
        %v3251 = vpack.c.b16 %v3135, %v3134
        %v3252 = vpack.c.b16 %v3137, %v3136
        %v3253 = vpack.c.b16 %v3139, %v3138
        %v3254 = vpack.c.b16 %v3141, %v3140
        %v3255 = vpack.c.b16 %v3143, %v3142
        %v3256 = vpack.c.b16 %v3145, %v3144
        %v3257 = vpack.c.b16 %v3147, %v3146
        %v3258 = vpack.c.b16 %v3149, %v3148
        %v3259 = vpack.c.b16 %v3151, %v3150
        %v3260 = vpack.c.b16 %v3153, %v3152
        %v3261 = vpack.c.b16 %v3155, %v3154
        %v3262 = vpack.c.b16 %v3157, %v3156
        %v3263 = vpack.c.b16 %v3159, %v3158
        %v3264 = vpack.c.b16 %v3161, %v3160
        %v3265 = vpack.c.b16 %v3163, %v3162
        %v3266 = vpack.c.b16 %v3165, %v3164
        %v3267 = vpack.c.b16 %v3167, %v3166
        %v3268 = vpack.c.b16 %v3169, %v3168
        %v3269 = vpack.c.b16 %v3171, %v3170
        %v3270 = vpack.c.b16 %v3173, %v3172
        %v3271 = vpack.c.b16 %v3175, %v3174
        %v3272 = vpack.c.b16 %v3177, %v3176
        %v3273 = vpack.c.b16 %v3179, %v3178
        %v3274 = vpack.c.b16 %v3181, %v3180
        %v3275 = vpack.c.b16 %v3183, %v3182
        %v3276 = vpack.c.b16 %v3185, %v3184
        %v3277 = vpack.c.b16 %v3187, %v3186
        %v3278 = vpack.c.b16 %v3189, %v3188
        %v3279 = vpack.c.b16 %v3191, %v3190
        %v3280 = vpack.c.b16 %v3193, %v3192
        %v3281 = vpack.c.b16 %v3195, %v3194
        %v3282 = vpack.c.b16 %v3197, %v3196
        %v3283 = vpack.c.b16 %v3199, %v3198
        %v3284 = vpack.c.b16 %v3201, %v3200
        %v3285 = vpack.c.b16 %v3203, %v3202
        %v3286 = vpack.c.b16 %v3205, %v3204
        %v3287 = vpack.c.b16 %v3207, %v3206
        %v3288 = vpack.c.b16 %v3209, %v3208
        %v3289 = vpack.c.b16 %v3211, %v3210
        %v3290 = vpack.c.b16 %v3213, %v3212
        %v3291 = vpack.c.b16 %v3215, %v3214
        %v3292 = vpack.c.b16 %v3217, %v3216
        %v3293 = vpack.c.b16 %v3219, %v3218
        %v3294 = vpack.c.b16 %v3221, %v3220
        %v3295 = vpack.c.b16 %v3223, %v3222
        %3368 = vmatpush.bf16.msra.mxu0 %v3231
        %3369 = vmatpush.bf16.msra.mxu0 %v3230
        %3370 = vmatpush.bf16.msra.mxu0 %v3229
        %3371 = vmatpush.bf16.msra.mxu0 %v3228
        %3372 = vmatpush.bf16.msra.mxu0 %v3227
        %3373 = vmatpush.bf16.msra.mxu0 %v3226
        %3374 = vmatpush.bf16.msra.mxu0 %v3225
        %3375 = vmatpush.bf16.msra.mxu0 %v3224
        %3376 = vmatmul.bf16.gmra.mxu0 %v2529
        %v3377 = vpop.f32.mrf.mxu0
        %v3378 = vadd.f32 %v2934, %v3377
        %v3379 = vpop.f32.mrf.mxu0
        %v3380 = vadd.f32 %v2934, %v3379
        %3381 = vmatmul.bf16.gmra.mxu0 %v2530
        %v3382 = vpop.f32.mrf.mxu0
        %v3383 = vadd.f32 %v2934, %v3382
        %v3384 = vpop.f32.mrf.mxu0
        %v3385 = vadd.f32 %v2934, %v3384
        %3386 = vmatmul.bf16.gmra.mxu0 %v2531
        %v3387 = vpop.f32.mrf.mxu0
        %v3388 = vadd.f32 %v2934, %v3387
        %v3389 = vpop.f32.mrf.mxu0
        %v3390 = vadd.f32 %v2934, %v3389
        %3391 = vmatmul.bf16.gmra.mxu0 %v2532
        %v3392 = vpop.f32.mrf.mxu0
        %v3393 = vadd.f32 %v2934, %v3392
        %v3394 = vpop.f32.mrf.mxu0
        %v3395 = vadd.f32 %v2934, %v3394
        %3396 = vmatmul.bf16.gmra.mxu0 %v2533
        %v3397 = vpop.f32.mrf.mxu0
        %v3398 = vadd.f32 %v2934, %v3397
        %v3399 = vpop.f32.mrf.mxu0
        %v3400 = vadd.f32 %v2934, %v3399
        %3401 = vmatmul.bf16.gmra.mxu0 %v2534
        %v3402 = vpop.f32.mrf.mxu0
        %v3403 = vadd.f32 %v2934, %v3402
        %v3404 = vpop.f32.mrf.mxu0
        %v3405 = vadd.f32 %v2934, %v3404
        %3406 = vmatmul.bf16.gmra.mxu0 %v2535
        %v3407 = vpop.f32.mrf.mxu0
        %v3408 = vadd.f32 %v2934, %v3407
        %v3409 = vpop.f32.mrf.mxu0
        %v3410 = vadd.f32 %v2934, %v3409
        %3411 = vmatmul.bf16.gmra.mxu0 %v2536
        %v3412 = vpop.f32.mrf.mxu0
        %v3413 = vadd.f32 %v2934, %v3412
        %v3414 = vpop.f32.mrf.mxu0
        %v3415 = vadd.f32 %v2934, %v3414
        %3416 = vmatmul.bf16.gmra.mxu0 %v2537
        %v3417 = vpop.f32.mrf.mxu0
        %v3418 = vadd.f32 %v2934, %v3417
        %v3419 = vpop.f32.mrf.mxu0
        %v3420 = vadd.f32 %v2934, %v3419
        %3421 = vmatmul.bf16.gmra.mxu0 %v2538
        %v3422 = vpop.f32.mrf.mxu0
        %v3423 = vadd.f32 %v2934, %v3422
        %v3424 = vpop.f32.mrf.mxu0
        %v3425 = vadd.f32 %v2934, %v3424
        %3426 = vmatmul.bf16.gmra.mxu0 %v2539
        %v3427 = vpop.f32.mrf.mxu0
        %v3428 = vadd.f32 %v2934, %v3427
        %v3429 = vpop.f32.mrf.mxu0
        %v3430 = vadd.f32 %v2934, %v3429
        %3431 = vmatmul.bf16.gmra.mxu0 %v2540
        %v3432 = vpop.f32.mrf.mxu0
        %v3433 = vadd.f32 %v2934, %v3432
        %v3434 = vpop.f32.mrf.mxu0
        %v3435 = vadd.f32 %v2934, %v3434
        %3436 = vmatmul.bf16.gmra.mxu0 %v2541
        %v3437 = vpop.f32.mrf.mxu0
        %v3438 = vadd.f32 %v2934, %v3437
        %v3439 = vpop.f32.mrf.mxu0
        %v3440 = vadd.f32 %v2934, %v3439
        %3441 = vmatmul.bf16.gmra.mxu0 %v2542
        %v3442 = vpop.f32.mrf.mxu0
        %v3443 = vadd.f32 %v2934, %v3442
        %v3444 = vpop.f32.mrf.mxu0
        %v3445 = vadd.f32 %v2934, %v3444
        %3446 = vmatmul.bf16.gmra.mxu0 %v2543
        %v3447 = vpop.f32.mrf.mxu0
        %v3448 = vadd.f32 %v2934, %v3447
        %v3449 = vpop.f32.mrf.mxu0
        %v3450 = vadd.f32 %v2934, %v3449
        %3451 = vmatmul.bf16.gmra.mxu0 %v2544
        %v3452 = vpop.f32.mrf.mxu0
        %v3453 = vadd.f32 %v2934, %v3452
        %v3454 = vpop.f32.mrf.mxu0
        %v3455 = vadd.f32 %v2934, %v3454
        %3456 = vdwg.mxu0
        %3457 = vmatpush.bf16.msra.mxu0 %v3239
        %3458 = vmatpush.bf16.msra.mxu0 %v3238
        %3459 = vmatpush.bf16.msra.mxu0 %v3237
        %3460 = vmatpush.bf16.msra.mxu0 %v3236
        %3461 = vmatpush.bf16.msra.mxu0 %v3235
        %3462 = vmatpush.bf16.msra.mxu0 %v3234
        %3463 = vmatpush.bf16.msra.mxu0 %v3233
        %3464 = vmatpush.bf16.msra.mxu0 %v3232
        %3465 = vmatmul.bf16.gmra.mxu0 %v2625
        %v3466 = vpop.f32.mrf.mxu0
        %v3467 = vadd.f32 %v3378, %v3466
        %v3468 = vpop.f32.mrf.mxu0
        %v3469 = vadd.f32 %v3380, %v3468
        %3470 = vmatmul.bf16.gmra.mxu0 %v2626
        %v3471 = vpop.f32.mrf.mxu0
        %v3472 = vadd.f32 %v3383, %v3471
        %v3473 = vpop.f32.mrf.mxu0
        %v3474 = vadd.f32 %v3385, %v3473
        %3475 = vmatmul.bf16.gmra.mxu0 %v2627
        %v3476 = vpop.f32.mrf.mxu0
        %v3477 = vadd.f32 %v3388, %v3476
        %v3478 = vpop.f32.mrf.mxu0
        %v3479 = vadd.f32 %v3390, %v3478
        %3480 = vmatmul.bf16.gmra.mxu0 %v2628
        %v3481 = vpop.f32.mrf.mxu0
        %v3482 = vadd.f32 %v3393, %v3481
        %v3483 = vpop.f32.mrf.mxu0
        %v3484 = vadd.f32 %v3395, %v3483
        %3485 = vmatmul.bf16.gmra.mxu0 %v2629
        %v3486 = vpop.f32.mrf.mxu0
        %v3487 = vadd.f32 %v3398, %v3486
        %v3488 = vpop.f32.mrf.mxu0
        %v3489 = vadd.f32 %v3400, %v3488
        %3490 = vmatmul.bf16.gmra.mxu0 %v2630
        %v3491 = vpop.f32.mrf.mxu0
        %v3492 = vadd.f32 %v3403, %v3491
        %v3493 = vpop.f32.mrf.mxu0
        %v3494 = vadd.f32 %v3405, %v3493
        %3495 = vmatmul.bf16.gmra.mxu0 %v2631
        %v3496 = vpop.f32.mrf.mxu0
        %v3497 = vadd.f32 %v3408, %v3496
        %v3498 = vpop.f32.mrf.mxu0
        %v3499 = vadd.f32 %v3410, %v3498
        %3500 = vmatmul.bf16.gmra.mxu0 %v2632
        %v3501 = vpop.f32.mrf.mxu0
        %v3502 = vadd.f32 %v3413, %v3501
        %v3503 = vpop.f32.mrf.mxu0
        %v3504 = vadd.f32 %v3415, %v3503
        %3505 = vmatmul.bf16.gmra.mxu0 %v2633
        %v3506 = vpop.f32.mrf.mxu0
        %v3507 = vadd.f32 %v3418, %v3506
        %v3508 = vpop.f32.mrf.mxu0
        %v3509 = vadd.f32 %v3420, %v3508
        %3510 = vmatmul.bf16.gmra.mxu0 %v2634
        %v3511 = vpop.f32.mrf.mxu0
        %v3512 = vadd.f32 %v3423, %v3511
        %v3513 = vpop.f32.mrf.mxu0
        %v3514 = vadd.f32 %v3425, %v3513
        %3515 = vmatmul.bf16.gmra.mxu0 %v2635
        %v3516 = vpop.f32.mrf.mxu0
        %v3517 = vadd.f32 %v3428, %v3516
        %v3518 = vpop.f32.mrf.mxu0
        %v3519 = vadd.f32 %v3430, %v3518
        %3520 = vmatmul.bf16.gmra.mxu0 %v2636
        %v3521 = vpop.f32.mrf.mxu0
        %v3522 = vadd.f32 %v3433, %v3521
        %v3523 = vpop.f32.mrf.mxu0
        %v3524 = vadd.f32 %v3435, %v3523
        %3525 = vmatmul.bf16.gmra.mxu0 %v2637
        %v3526 = vpop.f32.mrf.mxu0
        %v3527 = vadd.f32 %v3438, %v3526
        %v3528 = vpop.f32.mrf.mxu0
        %v3529 = vadd.f32 %v3440, %v3528
        %3530 = vmatmul.bf16.gmra.mxu0 %v2638
        %v3531 = vpop.f32.mrf.mxu0
        %v3532 = vadd.f32 %v3443, %v3531
        %v3533 = vpop.f32.mrf.mxu0
        %v3534 = vadd.f32 %v3445, %v3533
        %3535 = vmatmul.bf16.gmra.mxu0 %v2639
        %v3536 = vpop.f32.mrf.mxu0
        %v3537 = vadd.f32 %v3448, %v3536
        %v3538 = vpop.f32.mrf.mxu0
        %v3539 = vadd.f32 %v3450, %v3538
        %3540 = vmatmul.bf16.gmra.mxu0 %v2640
        %v3541 = vpop.f32.mrf.mxu0
        %v3542 = vadd.f32 %v3453, %v3541
        %v3543 = vpop.f32.mrf.mxu0
        %v3544 = vadd.f32 %v3455, %v3543
        %3545 = vdwg.mxu0
        %3546 = vmatpush.bf16.msra.mxu0 %v3247
        %3547 = vmatpush.bf16.msra.mxu0 %v3246
        %3548 = vmatpush.bf16.msra.mxu0 %v3245
        %3549 = vmatpush.bf16.msra.mxu0 %v3244
        %3550 = vmatpush.bf16.msra.mxu0 %v3243
        %3551 = vmatpush.bf16.msra.mxu0 %v3242
        %3552 = vmatpush.bf16.msra.mxu0 %v3241
        %3553 = vmatpush.bf16.msra.mxu0 %v3240
        %3554 = vmatmul.bf16.gmra.mxu0 %v2721
        %v3555 = vpop.f32.mrf.mxu0
        %v3556 = vadd.f32 %v3467, %v3555
        %v3557 = vpop.f32.mrf.mxu0
        %v3558 = vadd.f32 %v3469, %v3557
        %3559 = vmatmul.bf16.gmra.mxu0 %v2722
        %v3560 = vpop.f32.mrf.mxu0
        %v3561 = vadd.f32 %v3472, %v3560
        %v3562 = vpop.f32.mrf.mxu0
        %v3563 = vadd.f32 %v3474, %v3562
        %3564 = vmatmul.bf16.gmra.mxu0 %v2723
        %v3565 = vpop.f32.mrf.mxu0
        %v3566 = vadd.f32 %v3477, %v3565
        %v3567 = vpop.f32.mrf.mxu0
        %v3568 = vadd.f32 %v3479, %v3567
        %3569 = vmatmul.bf16.gmra.mxu0 %v2724
        %v3570 = vpop.f32.mrf.mxu0
        %v3571 = vadd.f32 %v3482, %v3570
        %v3572 = vpop.f32.mrf.mxu0
        %v3573 = vadd.f32 %v3484, %v3572
        %3574 = vmatmul.bf16.gmra.mxu0 %v2725
        %v3575 = vpop.f32.mrf.mxu0
        %v3576 = vadd.f32 %v3487, %v3575
        %v3577 = vpop.f32.mrf.mxu0
        %v3578 = vadd.f32 %v3489, %v3577
        %3579 = vmatmul.bf16.gmra.mxu0 %v2726
        %v3580 = vpop.f32.mrf.mxu0
        %v3581 = vadd.f32 %v3492, %v3580
        %v3582 = vpop.f32.mrf.mxu0
        %v3583 = vadd.f32 %v3494, %v3582
        %3584 = vmatmul.bf16.gmra.mxu0 %v2727
        %v3585 = vpop.f32.mrf.mxu0
        %v3586 = vadd.f32 %v3497, %v3585
        %v3587 = vpop.f32.mrf.mxu0
        %v3588 = vadd.f32 %v3499, %v3587
        %3589 = vmatmul.bf16.gmra.mxu0 %v2728
        %v3590 = vpop.f32.mrf.mxu0
        %v3591 = vadd.f32 %v3502, %v3590
        %v3592 = vpop.f32.mrf.mxu0
        %v3593 = vadd.f32 %v3504, %v3592
        %3594 = vmatmul.bf16.gmra.mxu0 %v2729
        %v3595 = vpop.f32.mrf.mxu0
        %v3596 = vadd.f32 %v3507, %v3595
        %v3597 = vpop.f32.mrf.mxu0
        %v3598 = vadd.f32 %v3509, %v3597
        %3599 = vmatmul.bf16.gmra.mxu0 %v2730
        %v3600 = vpop.f32.mrf.mxu0
        %v3601 = vadd.f32 %v3512, %v3600
        %v3602 = vpop.f32.mrf.mxu0
        %v3603 = vadd.f32 %v3514, %v3602
        %3604 = vmatmul.bf16.gmra.mxu0 %v2731
        %v3605 = vpop.f32.mrf.mxu0
        %v3606 = vadd.f32 %v3517, %v3605
        %v3607 = vpop.f32.mrf.mxu0
        %v3608 = vadd.f32 %v3519, %v3607
        %3609 = vmatmul.bf16.gmra.mxu0 %v2732
        %v3610 = vpop.f32.mrf.mxu0
        %v3611 = vadd.f32 %v3522, %v3610
        %v3612 = vpop.f32.mrf.mxu0
        %v3613 = vadd.f32 %v3524, %v3612
        %3614 = vmatmul.bf16.gmra.mxu0 %v2733
        %v3615 = vpop.f32.mrf.mxu0
        %v3616 = vadd.f32 %v3527, %v3615
        %v3617 = vpop.f32.mrf.mxu0
        %v3618 = vadd.f32 %v3529, %v3617
        %3619 = vmatmul.bf16.gmra.mxu0 %v2734
        %v3620 = vpop.f32.mrf.mxu0
        %v3621 = vadd.f32 %v3532, %v3620
        %v3622 = vpop.f32.mrf.mxu0
        %v3623 = vadd.f32 %v3534, %v3622
        %3624 = vmatmul.bf16.gmra.mxu0 %v2735
        %v3625 = vpop.f32.mrf.mxu0
        %v3626 = vadd.f32 %v3537, %v3625
        %v3627 = vpop.f32.mrf.mxu0
        %v3628 = vadd.f32 %v3539, %v3627
        %3629 = vmatmul.bf16.gmra.mxu0 %v2736
        %v3630 = vpop.f32.mrf.mxu0
        %v3631 = vadd.f32 %v3542, %v3630
        %v3632 = vpop.f32.mrf.mxu0
        %v3633 = vadd.f32 %v3544, %v3632
        %3634 = vdwg.mxu0
        %3635 = vmatpush.bf16.msra.mxu0 %v3255
        %3636 = vmatpush.bf16.msra.mxu0 %v3254
        %3637 = vmatpush.bf16.msra.mxu0 %v3253
        %3638 = vmatpush.bf16.msra.mxu0 %v3252
        %3639 = vmatpush.bf16.msra.mxu0 %v3251
        %3640 = vmatpush.bf16.msra.mxu0 %v3250
        %3641 = vmatpush.bf16.msra.mxu0 %v3249
        %3642 = vmatpush.bf16.msra.mxu0 %v3248
        %3643 = vmatmul.bf16.gmra.mxu0 %v2530
        %v3644 = vpop.f32.mrf.mxu0
        %v3645 = vadd.f32 %v3556, %v3644
        %v3646 = vpop.f32.mrf.mxu0
        %v3647 = vadd.f32 %v3558, %v3646
        %3648 = vmatmul.bf16.gmra.mxu0 %v2531
        %v3649 = vpop.f32.mrf.mxu0
        %v3650 = vadd.f32 %v3561, %v3649
        %v3651 = vpop.f32.mrf.mxu0
        %v3652 = vadd.f32 %v3563, %v3651
        %3653 = vmatmul.bf16.gmra.mxu0 %v2532
        %v3654 = vpop.f32.mrf.mxu0
        %v3655 = vadd.f32 %v3566, %v3654
        %v3656 = vpop.f32.mrf.mxu0
        %v3657 = vadd.f32 %v3568, %v3656
        %3658 = vmatmul.bf16.gmra.mxu0 %v2533
        %v3659 = vpop.f32.mrf.mxu0
        %v3660 = vadd.f32 %v3571, %v3659
        %v3661 = vpop.f32.mrf.mxu0
        %v3662 = vadd.f32 %v3573, %v3661
        %3663 = vmatmul.bf16.gmra.mxu0 %v2534
        %v3664 = vpop.f32.mrf.mxu0
        %v3665 = vadd.f32 %v3576, %v3664
        %v3666 = vpop.f32.mrf.mxu0
        %v3667 = vadd.f32 %v3578, %v3666
        %3668 = vmatmul.bf16.gmra.mxu0 %v2535
        %v3669 = vpop.f32.mrf.mxu0
        %v3670 = vadd.f32 %v3581, %v3669
        %v3671 = vpop.f32.mrf.mxu0
        %v3672 = vadd.f32 %v3583, %v3671
        %3673 = vmatmul.bf16.gmra.mxu0 %v2536
        %v3674 = vpop.f32.mrf.mxu0
        %v3675 = vadd.f32 %v3586, %v3674
        %v3676 = vpop.f32.mrf.mxu0
        %v3677 = vadd.f32 %v3588, %v3676
        %3678 = vmatmul.bf16.gmra.mxu0 %v2537
        %v3679 = vpop.f32.mrf.mxu0
        %v3680 = vadd.f32 %v3591, %v3679
        %v3681 = vpop.f32.mrf.mxu0
        %v3682 = vadd.f32 %v3593, %v3681
        %3683 = vmatmul.bf16.gmra.mxu0 %v2538
        %v3684 = vpop.f32.mrf.mxu0
        %v3685 = vadd.f32 %v3596, %v3684
        %v3686 = vpop.f32.mrf.mxu0
        %v3687 = vadd.f32 %v3598, %v3686
        %3688 = vmatmul.bf16.gmra.mxu0 %v2539
        %v3689 = vpop.f32.mrf.mxu0
        %v3690 = vadd.f32 %v3601, %v3689
        %v3691 = vpop.f32.mrf.mxu0
        %v3692 = vadd.f32 %v3603, %v3691
        %3693 = vmatmul.bf16.gmra.mxu0 %v2540
        %v3694 = vpop.f32.mrf.mxu0
        %v3695 = vadd.f32 %v3606, %v3694
        %v3696 = vpop.f32.mrf.mxu0
        %v3697 = vadd.f32 %v3608, %v3696
        %3698 = vmatmul.bf16.gmra.mxu0 %v2541
        %v3699 = vpop.f32.mrf.mxu0
        %v3700 = vadd.f32 %v3611, %v3699
        %v3701 = vpop.f32.mrf.mxu0
        %v3702 = vadd.f32 %v3613, %v3701
        %3703 = vmatmul.bf16.gmra.mxu0 %v2542
        %v3704 = vpop.f32.mrf.mxu0
        %v3705 = vadd.f32 %v3616, %v3704
        %v3706 = vpop.f32.mrf.mxu0
        %v3707 = vadd.f32 %v3618, %v3706
        %3708 = vmatmul.bf16.gmra.mxu0 %v2543
        %v3709 = vpop.f32.mrf.mxu0
        %v3710 = vadd.f32 %v3621, %v3709
        %v3711 = vpop.f32.mrf.mxu0
        %v3712 = vadd.f32 %v3623, %v3711
        %3713 = vmatmul.bf16.gmra.mxu0 %v2544
        %v3714 = vpop.f32.mrf.mxu0
        %v3715 = vadd.f32 %v3626, %v3714
        %v3716 = vpop.f32.mrf.mxu0
        %v3717 = vadd.f32 %v3628, %v3716
        %3718 = vmatmul.bf16.gmra.mxu0 %v2757
        %v3719 = vpop.f32.mrf.mxu0
        %v3720 = vadd.f32 %v3631, %v3719
        %v3721 = vpop.f32.mrf.mxu0
        %v3722 = vadd.f32 %v3633, %v3721
        %3723 = vdwg.mxu0
        %3724 = vmatpush.bf16.msra.mxu0 %v3263
        %3725 = vmatpush.bf16.msra.mxu0 %v3262
        %3726 = vmatpush.bf16.msra.mxu0 %v3261
        %3727 = vmatpush.bf16.msra.mxu0 %v3260
        %3728 = vmatpush.bf16.msra.mxu0 %v3259
        %3729 = vmatpush.bf16.msra.mxu0 %v3258
        %3730 = vmatpush.bf16.msra.mxu0 %v3257
        %3731 = vmatpush.bf16.msra.mxu0 %v3256
        %3732 = vmatmul.bf16.gmra.mxu0 %v2626
        %v3733 = vpop.f32.mrf.mxu0
        %v3734 = vadd.f32 %v3645, %v3733
        %v3735 = vpop.f32.mrf.mxu0
        %v3736 = vadd.f32 %v3647, %v3735
        %3737 = vmatmul.bf16.gmra.mxu0 %v2627
        %v3738 = vpop.f32.mrf.mxu0
        %v3739 = vadd.f32 %v3650, %v3738
        %v3740 = vpop.f32.mrf.mxu0
        %v3741 = vadd.f32 %v3652, %v3740
        %3742 = vmatmul.bf16.gmra.mxu0 %v2628
        %v3743 = vpop.f32.mrf.mxu0
        %v3744 = vadd.f32 %v3655, %v3743
        %v3745 = vpop.f32.mrf.mxu0
        %v3746 = vadd.f32 %v3657, %v3745
        %3747 = vmatmul.bf16.gmra.mxu0 %v2629
        %v3748 = vpop.f32.mrf.mxu0
        %v3749 = vadd.f32 %v3660, %v3748
        %v3750 = vpop.f32.mrf.mxu0
        %v3751 = vadd.f32 %v3662, %v3750
        %3752 = vmatmul.bf16.gmra.mxu0 %v2630
        %v3753 = vpop.f32.mrf.mxu0
        %v3754 = vadd.f32 %v3665, %v3753
        %v3755 = vpop.f32.mrf.mxu0
        %v3756 = vadd.f32 %v3667, %v3755
        %3757 = vmatmul.bf16.gmra.mxu0 %v2631
        %v3758 = vpop.f32.mrf.mxu0
        %v3759 = vadd.f32 %v3670, %v3758
        %v3760 = vpop.f32.mrf.mxu0
        %v3761 = vadd.f32 %v3672, %v3760
        %3762 = vmatmul.bf16.gmra.mxu0 %v2632
        %v3763 = vpop.f32.mrf.mxu0
        %v3764 = vadd.f32 %v3675, %v3763
        %v3765 = vpop.f32.mrf.mxu0
        %v3766 = vadd.f32 %v3677, %v3765
        %3767 = vmatmul.bf16.gmra.mxu0 %v2633
        %v3768 = vpop.f32.mrf.mxu0
        %v3769 = vadd.f32 %v3680, %v3768
        %v3770 = vpop.f32.mrf.mxu0
        %v3771 = vadd.f32 %v3682, %v3770
        %3772 = vmatmul.bf16.gmra.mxu0 %v2634
        %v3773 = vpop.f32.mrf.mxu0
        %v3774 = vadd.f32 %v3685, %v3773
        %v3775 = vpop.f32.mrf.mxu0
        %v3776 = vadd.f32 %v3687, %v3775
        %3777 = vmatmul.bf16.gmra.mxu0 %v2635
        %v3778 = vpop.f32.mrf.mxu0
        %v3779 = vadd.f32 %v3690, %v3778
        %v3780 = vpop.f32.mrf.mxu0
        %v3781 = vadd.f32 %v3692, %v3780
        %3782 = vmatmul.bf16.gmra.mxu0 %v2636
        %v3783 = vpop.f32.mrf.mxu0
        %v3784 = vadd.f32 %v3695, %v3783
        %v3785 = vpop.f32.mrf.mxu0
        %v3786 = vadd.f32 %v3697, %v3785
        %3787 = vmatmul.bf16.gmra.mxu0 %v2637
        %v3788 = vpop.f32.mrf.mxu0
        %v3789 = vadd.f32 %v3700, %v3788
        %v3790 = vpop.f32.mrf.mxu0
        %v3791 = vadd.f32 %v3702, %v3790
        %3792 = vmatmul.bf16.gmra.mxu0 %v2638
        %v3793 = vpop.f32.mrf.mxu0
        %v3794 = vadd.f32 %v3705, %v3793
        %v3795 = vpop.f32.mrf.mxu0
        %v3796 = vadd.f32 %v3707, %v3795
        %3797 = vmatmul.bf16.gmra.mxu0 %v2639
        %v3798 = vpop.f32.mrf.mxu0
        %v3799 = vadd.f32 %v3710, %v3798
        %v3800 = vpop.f32.mrf.mxu0
        %v3801 = vadd.f32 %v3712, %v3800
        %3802 = vmatmul.bf16.gmra.mxu0 %v2640
        %v3803 = vpop.f32.mrf.mxu0
        %v3804 = vadd.f32 %v3715, %v3803
        %v3805 = vpop.f32.mrf.mxu0
        %v3806 = vadd.f32 %v3717, %v3805
        %3807 = vmatmul.bf16.gmra.mxu0 %v2763
        %v3808 = vpop.f32.mrf.mxu0
        %v3809 = vadd.f32 %v3720, %v3808
        %v3810 = vpop.f32.mrf.mxu0
        %v3811 = vadd.f32 %v3722, %v3810
        %3812 = vdwg.mxu0
        %3813 = vmatpush.bf16.msra.mxu0 %v3271
        %3814 = vmatpush.bf16.msra.mxu0 %v3270
        %3815 = vmatpush.bf16.msra.mxu0 %v3269
        %3816 = vmatpush.bf16.msra.mxu0 %v3268
        %3817 = vmatpush.bf16.msra.mxu0 %v3267
        %3818 = vmatpush.bf16.msra.mxu0 %v3266
        %3819 = vmatpush.bf16.msra.mxu0 %v3265
        %3820 = vmatpush.bf16.msra.mxu0 %v3264
        %3821 = vmatmul.bf16.gmra.mxu0 %v2722
        %v3822 = vpop.f32.mrf.mxu0
        %v3823 = vadd.f32 %v3734, %v3822
        %v3824 = vpop.f32.mrf.mxu0
        %v3825 = vadd.f32 %v3736, %v3824
        %3826 = vmatmul.bf16.gmra.mxu0 %v2723
        %v3827 = vpop.f32.mrf.mxu0
        %v3828 = vadd.f32 %v3739, %v3827
        %v3829 = vpop.f32.mrf.mxu0
        %v3830 = vadd.f32 %v3741, %v3829
        %3831 = vmatmul.bf16.gmra.mxu0 %v2724
        %v3832 = vpop.f32.mrf.mxu0
        %v3833 = vadd.f32 %v3744, %v3832
        %v3834 = vpop.f32.mrf.mxu0
        %v3835 = vadd.f32 %v3746, %v3834
        %3836 = vmatmul.bf16.gmra.mxu0 %v2725
        %v3837 = vpop.f32.mrf.mxu0
        %v3838 = vadd.f32 %v3749, %v3837
        %v3839 = vpop.f32.mrf.mxu0
        %v3840 = vadd.f32 %v3751, %v3839
        %3841 = vmatmul.bf16.gmra.mxu0 %v2726
        %v3842 = vpop.f32.mrf.mxu0
        %v3843 = vadd.f32 %v3754, %v3842
        %v3844 = vpop.f32.mrf.mxu0
        %v3845 = vadd.f32 %v3756, %v3844
        %3846 = vmatmul.bf16.gmra.mxu0 %v2727
        %v3847 = vpop.f32.mrf.mxu0
        %v3848 = vadd.f32 %v3759, %v3847
        %v3849 = vpop.f32.mrf.mxu0
        %v3850 = vadd.f32 %v3761, %v3849
        %3851 = vmatmul.bf16.gmra.mxu0 %v2728
        %v3852 = vpop.f32.mrf.mxu0
        %v3853 = vadd.f32 %v3764, %v3852
        %v3854 = vpop.f32.mrf.mxu0
        %v3855 = vadd.f32 %v3766, %v3854
        %3856 = vmatmul.bf16.gmra.mxu0 %v2729
        %v3857 = vpop.f32.mrf.mxu0
        %v3858 = vadd.f32 %v3769, %v3857
        %v3859 = vpop.f32.mrf.mxu0
        %v3860 = vadd.f32 %v3771, %v3859
        %3861 = vmatmul.bf16.gmra.mxu0 %v2730
        %v3862 = vpop.f32.mrf.mxu0
        %v3863 = vadd.f32 %v3774, %v3862
        %v3864 = vpop.f32.mrf.mxu0
        %v3865 = vadd.f32 %v3776, %v3864
        %3866 = vmatmul.bf16.gmra.mxu0 %v2731
        %v3867 = vpop.f32.mrf.mxu0
        %v3868 = vadd.f32 %v3779, %v3867
        %v3869 = vpop.f32.mrf.mxu0
        %v3870 = vadd.f32 %v3781, %v3869
        %3871 = vmatmul.bf16.gmra.mxu0 %v2732
        %v3872 = vpop.f32.mrf.mxu0
        %v3873 = vadd.f32 %v3784, %v3872
        %v3874 = vpop.f32.mrf.mxu0
        %v3875 = vadd.f32 %v3786, %v3874
        %3876 = vmatmul.bf16.gmra.mxu0 %v2733
        %v3877 = vpop.f32.mrf.mxu0
        %v3878 = vadd.f32 %v3789, %v3877
        %v3879 = vpop.f32.mrf.mxu0
        %v3880 = vadd.f32 %v3791, %v3879
        %3881 = vmatmul.bf16.gmra.mxu0 %v2734
        %v3882 = vpop.f32.mrf.mxu0
        %v3883 = vadd.f32 %v3794, %v3882
        %v3884 = vpop.f32.mrf.mxu0
        %v3885 = vadd.f32 %v3796, %v3884
        %3886 = vmatmul.bf16.gmra.mxu0 %v2735
        %v3887 = vpop.f32.mrf.mxu0
        %v3888 = vadd.f32 %v3799, %v3887
        %v3889 = vpop.f32.mrf.mxu0
        %v3890 = vadd.f32 %v3801, %v3889
        %3891 = vmatmul.bf16.gmra.mxu0 %v2736
        %v3892 = vpop.f32.mrf.mxu0
        %v3893 = vadd.f32 %v3804, %v3892
        %v3894 = vpop.f32.mrf.mxu0
        %v3895 = vadd.f32 %v3806, %v3894
        %3896 = vmatmul.bf16.gmra.mxu0 %v2769
        %v3897 = vpop.f32.mrf.mxu0
        %v3898 = vadd.f32 %v3809, %v3897
        %v3899 = vpop.f32.mrf.mxu0
        %v3900 = vadd.f32 %v3811, %v3899
        %3901 = vdwg.mxu0
        %3902 = vmatpush.bf16.msra.mxu0 %v3279
        %3903 = vmatpush.bf16.msra.mxu0 %v3278
        %3904 = vmatpush.bf16.msra.mxu0 %v3277
        %3905 = vmatpush.bf16.msra.mxu0 %v3276
        %3906 = vmatpush.bf16.msra.mxu0 %v3275
        %3907 = vmatpush.bf16.msra.mxu0 %v3274
        %3908 = vmatpush.bf16.msra.mxu0 %v3273
        %3909 = vmatpush.bf16.msra.mxu0 %v3272
        %3910 = vmatmul.bf16.gmra.mxu0 %v2531
        %v3911 = vpop.f32.mrf.mxu0
        %v3912 = vadd.f32 %v3823, %v3911
        %v3913 = vpop.f32.mrf.mxu0
        %v3914 = vadd.f32 %v3825, %v3913
        %3915 = vmatmul.bf16.gmra.mxu0 %v2532
        %v3916 = vpop.f32.mrf.mxu0
        %v3917 = vadd.f32 %v3828, %v3916
        %v3918 = vpop.f32.mrf.mxu0
        %v3919 = vadd.f32 %v3830, %v3918
        %3920 = vmatmul.bf16.gmra.mxu0 %v2533
        %v3921 = vpop.f32.mrf.mxu0
        %v3922 = vadd.f32 %v3833, %v3921
        %v3923 = vpop.f32.mrf.mxu0
        %v3924 = vadd.f32 %v3835, %v3923
        %3925 = vmatmul.bf16.gmra.mxu0 %v2534
        %v3926 = vpop.f32.mrf.mxu0
        %v3927 = vadd.f32 %v3838, %v3926
        %v3928 = vpop.f32.mrf.mxu0
        %v3929 = vadd.f32 %v3840, %v3928
        %3930 = vmatmul.bf16.gmra.mxu0 %v2535
        %v3931 = vpop.f32.mrf.mxu0
        %v3932 = vadd.f32 %v3843, %v3931
        %v3933 = vpop.f32.mrf.mxu0
        %v3934 = vadd.f32 %v3845, %v3933
        %3935 = vmatmul.bf16.gmra.mxu0 %v2536
        %v3936 = vpop.f32.mrf.mxu0
        %v3937 = vadd.f32 %v3848, %v3936
        %v3938 = vpop.f32.mrf.mxu0
        %v3939 = vadd.f32 %v3850, %v3938
        %3940 = vmatmul.bf16.gmra.mxu0 %v2537
        %v3941 = vpop.f32.mrf.mxu0
        %v3942 = vadd.f32 %v3853, %v3941
        %v3943 = vpop.f32.mrf.mxu0
        %v3944 = vadd.f32 %v3855, %v3943
        %3945 = vmatmul.bf16.gmra.mxu0 %v2538
        %v3946 = vpop.f32.mrf.mxu0
        %v3947 = vadd.f32 %v3858, %v3946
        %v3948 = vpop.f32.mrf.mxu0
        %v3949 = vadd.f32 %v3860, %v3948
        %3950 = vmatmul.bf16.gmra.mxu0 %v2539
        %v3951 = vpop.f32.mrf.mxu0
        %v3952 = vadd.f32 %v3863, %v3951
        %v3953 = vpop.f32.mrf.mxu0
        %v3954 = vadd.f32 %v3865, %v3953
        %3955 = vmatmul.bf16.gmra.mxu0 %v2540
        %v3956 = vpop.f32.mrf.mxu0
        %v3957 = vadd.f32 %v3868, %v3956
        %v3958 = vpop.f32.mrf.mxu0
        %v3959 = vadd.f32 %v3870, %v3958
        %3960 = vmatmul.bf16.gmra.mxu0 %v2541
        %v3961 = vpop.f32.mrf.mxu0
        %v3962 = vadd.f32 %v3873, %v3961
        %v3963 = vpop.f32.mrf.mxu0
        %v3964 = vadd.f32 %v3875, %v3963
        %3965 = vmatmul.bf16.gmra.mxu0 %v2542
        %v3966 = vpop.f32.mrf.mxu0
        %v3967 = vadd.f32 %v3878, %v3966
        %v3968 = vpop.f32.mrf.mxu0
        %v3969 = vadd.f32 %v3880, %v3968
        %3970 = vmatmul.bf16.gmra.mxu0 %v2543
        %v3971 = vpop.f32.mrf.mxu0
        %v3972 = vadd.f32 %v3883, %v3971
        %v3973 = vpop.f32.mrf.mxu0
        %v3974 = vadd.f32 %v3885, %v3973
        %3975 = vmatmul.bf16.gmra.mxu0 %v2544
        %v3976 = vpop.f32.mrf.mxu0
        %v3977 = vadd.f32 %v3888, %v3976
        %v3978 = vpop.f32.mrf.mxu0
        %v3979 = vadd.f32 %v3890, %v3978
        %3980 = vmatmul.bf16.gmra.mxu0 %v2757
        %v3981 = vpop.f32.mrf.mxu0
        %v3982 = vadd.f32 %v3893, %v3981
        %v3983 = vpop.f32.mrf.mxu0
        %v3984 = vadd.f32 %v3895, %v3983
        %3985 = vmatmul.bf16.gmra.mxu0 %v2775
        %v3986 = vpop.f32.mrf.mxu0
        %v3987 = vadd.f32 %v3898, %v3986
        %v3988 = vpop.f32.mrf.mxu0
        %v3989 = vadd.f32 %v3900, %v3988
        %3990 = vdwg.mxu0
        %3991 = vmatpush.bf16.msra.mxu0 %v3287
        %3992 = vmatpush.bf16.msra.mxu0 %v3286
        %3993 = vmatpush.bf16.msra.mxu0 %v3285
        %3994 = vmatpush.bf16.msra.mxu0 %v3284
        %3995 = vmatpush.bf16.msra.mxu0 %v3283
        %3996 = vmatpush.bf16.msra.mxu0 %v3282
        %3997 = vmatpush.bf16.msra.mxu0 %v3281
        %3998 = vmatpush.bf16.msra.mxu0 %v3280
        %3999 = vmatmul.bf16.gmra.mxu0 %v2627
        %v4000 = vpop.f32.mrf.mxu0
        %v4001 = vadd.f32 %v3912, %v4000
        %v4002 = vpop.f32.mrf.mxu0
        %v4003 = vadd.f32 %v3914, %v4002
        %4004 = vmatmul.bf16.gmra.mxu0 %v2628
        %v4005 = vpop.f32.mrf.mxu0
        %v4006 = vadd.f32 %v3917, %v4005
        %v4007 = vpop.f32.mrf.mxu0
        %v4008 = vadd.f32 %v3919, %v4007
        %4009 = vmatmul.bf16.gmra.mxu0 %v2629
        %v4010 = vpop.f32.mrf.mxu0
        %v4011 = vadd.f32 %v3922, %v4010
        %v4012 = vpop.f32.mrf.mxu0
        %v4013 = vadd.f32 %v3924, %v4012
        %4014 = vmatmul.bf16.gmra.mxu0 %v2630
        %v4015 = vpop.f32.mrf.mxu0
        %v4016 = vadd.f32 %v3927, %v4015
        %v4017 = vpop.f32.mrf.mxu0
        %v4018 = vadd.f32 %v3929, %v4017
        %4019 = vmatmul.bf16.gmra.mxu0 %v2631
        %v4020 = vpop.f32.mrf.mxu0
        %v4021 = vadd.f32 %v3932, %v4020
        %v4022 = vpop.f32.mrf.mxu0
        %v4023 = vadd.f32 %v3934, %v4022
        %4024 = vmatmul.bf16.gmra.mxu0 %v2632
        %v4025 = vpop.f32.mrf.mxu0
        %v4026 = vadd.f32 %v3937, %v4025
        %v4027 = vpop.f32.mrf.mxu0
        %v4028 = vadd.f32 %v3939, %v4027
        %4029 = vmatmul.bf16.gmra.mxu0 %v2633
        %v4030 = vpop.f32.mrf.mxu0
        %v4031 = vadd.f32 %v3942, %v4030
        %v4032 = vpop.f32.mrf.mxu0
        %v4033 = vadd.f32 %v3944, %v4032
        %4034 = vmatmul.bf16.gmra.mxu0 %v2634
        %v4035 = vpop.f32.mrf.mxu0
        %v4036 = vadd.f32 %v3947, %v4035
        %v4037 = vpop.f32.mrf.mxu0
        %v4038 = vadd.f32 %v3949, %v4037
        %4039 = vmatmul.bf16.gmra.mxu0 %v2635
        %v4040 = vpop.f32.mrf.mxu0
        %v4041 = vadd.f32 %v3952, %v4040
        %v4042 = vpop.f32.mrf.mxu0
        %v4043 = vadd.f32 %v3954, %v4042
        %4044 = vmatmul.bf16.gmra.mxu0 %v2636
        %v4045 = vpop.f32.mrf.mxu0
        %v4046 = vadd.f32 %v3957, %v4045
        %v4047 = vpop.f32.mrf.mxu0
        %v4048 = vadd.f32 %v3959, %v4047
        %4049 = vmatmul.bf16.gmra.mxu0 %v2637
        %v4050 = vpop.f32.mrf.mxu0
        %v4051 = vadd.f32 %v3962, %v4050
        %v4052 = vpop.f32.mrf.mxu0
        %v4053 = vadd.f32 %v3964, %v4052
        %4054 = vmatmul.bf16.gmra.mxu0 %v2638
        %v4055 = vpop.f32.mrf.mxu0
        %v4056 = vadd.f32 %v3967, %v4055
        %v4057 = vpop.f32.mrf.mxu0
        %v4058 = vadd.f32 %v3969, %v4057
        %4059 = vmatmul.bf16.gmra.mxu0 %v2639
        %v4060 = vpop.f32.mrf.mxu0
        %v4061 = vadd.f32 %v3972, %v4060
        %v4062 = vpop.f32.mrf.mxu0
        %v4063 = vadd.f32 %v3974, %v4062
        %4064 = vmatmul.bf16.gmra.mxu0 %v2640
        %v4065 = vpop.f32.mrf.mxu0
        %v4066 = vadd.f32 %v3977, %v4065
        %v4067 = vpop.f32.mrf.mxu0
        %v4068 = vadd.f32 %v3979, %v4067
        %4069 = vmatmul.bf16.gmra.mxu0 %v2763
        %v4070 = vpop.f32.mrf.mxu0
        %v4071 = vadd.f32 %v3982, %v4070
        %v4072 = vpop.f32.mrf.mxu0
        %v4073 = vadd.f32 %v3984, %v4072
        %4074 = vmatmul.bf16.gmra.mxu0 %v2781
        %v4075 = vpop.f32.mrf.mxu0
        %v4076 = vadd.f32 %v3987, %v4075
        %v4077 = vpop.f32.mrf.mxu0
        %v4078 = vadd.f32 %v3989, %v4077
        %4079 = vdwg.mxu0
        %4080 = vmatpush.bf16.msra.mxu0 %v3295
        %4081 = vmatpush.bf16.msra.mxu0 %v3294
        %4082 = vmatpush.bf16.msra.mxu0 %v3293
        %4083 = vmatpush.bf16.msra.mxu0 %v3292
        %4084 = vmatpush.bf16.msra.mxu0 %v3291
        %4085 = vmatpush.bf16.msra.mxu0 %v3290
        %4086 = vmatpush.bf16.msra.mxu0 %v3289
        %4087 = vmatpush.bf16.msra.mxu0 %v3288
        %4088 = vmatmul.bf16.gmra.mxu0 %v2723
        %v4089 = vpop.f32.mrf.mxu0
        %v4090 = vadd.f32 %v4001, %v4089
        %v4091 = vpop.f32.mrf.mxu0
        %v4092 = vadd.f32 %v4003, %v4091
        %4093 = vmatmul.bf16.gmra.mxu0 %v2724
        %v4094 = vpop.f32.mrf.mxu0
        %v4095 = vadd.f32 %v4006, %v4094
        %v4096 = vpop.f32.mrf.mxu0
        %v4097 = vadd.f32 %v4008, %v4096
        %4098 = vmatmul.bf16.gmra.mxu0 %v2725
        %v4099 = vpop.f32.mrf.mxu0
        %v4100 = vadd.f32 %v4011, %v4099
        %v4101 = vpop.f32.mrf.mxu0
        %v4102 = vadd.f32 %v4013, %v4101
        %4103 = vmatmul.bf16.gmra.mxu0 %v2726
        %v4104 = vpop.f32.mrf.mxu0
        %v4105 = vadd.f32 %v4016, %v4104
        %v4106 = vpop.f32.mrf.mxu0
        %v4107 = vadd.f32 %v4018, %v4106
        %4108 = vmatmul.bf16.gmra.mxu0 %v2727
        %v4109 = vpop.f32.mrf.mxu0
        %v4110 = vadd.f32 %v4021, %v4109
        %v4111 = vpop.f32.mrf.mxu0
        %v4112 = vadd.f32 %v4023, %v4111
        %4113 = vmatmul.bf16.gmra.mxu0 %v2728
        %v4114 = vpop.f32.mrf.mxu0
        %v4115 = vadd.f32 %v4026, %v4114
        %v4116 = vpop.f32.mrf.mxu0
        %v4117 = vadd.f32 %v4028, %v4116
        %4118 = vmatmul.bf16.gmra.mxu0 %v2729
        %v4119 = vpop.f32.mrf.mxu0
        %v4120 = vadd.f32 %v4031, %v4119
        %v4121 = vpop.f32.mrf.mxu0
        %v4122 = vadd.f32 %v4033, %v4121
        %4123 = vmatmul.bf16.gmra.mxu0 %v2730
        %v4124 = vpop.f32.mrf.mxu0
        %v4125 = vadd.f32 %v4036, %v4124
        %v4126 = vpop.f32.mrf.mxu0
        %v4127 = vadd.f32 %v4038, %v4126
        %4128 = vmatmul.bf16.gmra.mxu0 %v2731
        %v4129 = vpop.f32.mrf.mxu0
        %v4130 = vadd.f32 %v4041, %v4129
        %v4131 = vpop.f32.mrf.mxu0
        %v4132 = vadd.f32 %v4043, %v4131
        %4133 = vmatmul.bf16.gmra.mxu0 %v2732
        %v4134 = vpop.f32.mrf.mxu0
        %v4135 = vadd.f32 %v4046, %v4134
        %v4136 = vpop.f32.mrf.mxu0
        %v4137 = vadd.f32 %v4048, %v4136
        %4138 = vmatmul.bf16.gmra.mxu0 %v2733
        %v4139 = vpop.f32.mrf.mxu0
        %v4140 = vadd.f32 %v4051, %v4139
        %v4141 = vpop.f32.mrf.mxu0
        %v4142 = vadd.f32 %v4053, %v4141
        %4143 = vmatmul.bf16.gmra.mxu0 %v2734
        %v4144 = vpop.f32.mrf.mxu0
        %v4145 = vadd.f32 %v4056, %v4144
        %v4146 = vpop.f32.mrf.mxu0
        %v4147 = vadd.f32 %v4058, %v4146
        %4148 = vmatmul.bf16.gmra.mxu0 %v2735
        %v4149 = vpop.f32.mrf.mxu0
        %v4150 = vadd.f32 %v4061, %v4149
        %v4151 = vpop.f32.mrf.mxu0
        %v4152 = vadd.f32 %v4063, %v4151
        %4153 = vmatmul.bf16.gmra.mxu0 %v2736
        %v4154 = vpop.f32.mrf.mxu0
        %v4155 = vadd.f32 %v4066, %v4154
        %v4156 = vpop.f32.mrf.mxu0
        %v4157 = vadd.f32 %v4068, %v4156
        %4158 = vmatmul.bf16.gmra.mxu0 %v2769
        %v4159 = vpop.f32.mrf.mxu0
        %v4160 = vadd.f32 %v4071, %v4159
        %v4161 = vpop.f32.mrf.mxu0
        %v4162 = vadd.f32 %v4073, %v4161
        %4163 = vmatmul.bf16.gmra.mxu0 %v2787
        %v4164 = vpop.f32.mrf.mxu0
        %v4165 = vadd.f32 %v4076, %v4164
        %v4166 = vpop.f32.mrf.mxu0
        %v4167 = vadd.f32 %v4078, %v4166
        %4168 = vdwg.mxu0
        %v4169 = vadd.f32 %v225, %v4090
        %v4170 = vadd.f32 %v226, %v4092
        %v4171 = vadd.f32 %v227, %v4095
        %v4172 = vadd.f32 %v228, %v4097
        %v4173 = vadd.f32 %v229, %v4100
        %v4174 = vadd.f32 %v230, %v4102
        %v4175 = vadd.f32 %v231, %v4105
        %v4176 = vadd.f32 %v232, %v4107
        %v4177 = vadd.f32 %v233, %v4110
        %v4178 = vadd.f32 %v234, %v4112
        %v4179 = vadd.f32 %v235, %v4115
        %v4180 = vadd.f32 %v236, %v4117
        %v4181 = vadd.f32 %v237, %v4120
        %v4182 = vadd.f32 %v238, %v4122
        %v4183 = vadd.f32 %v239, %v4125
        %v4184 = vadd.f32 %v240, %v4127
        %v4185 = vadd.f32 %v241, %v4130
        %v4186 = vadd.f32 %v242, %v4132
        %v4187 = vadd.f32 %v243, %v4135
        %v4188 = vadd.f32 %v244, %v4137
        %v4189 = vadd.f32 %v245, %v4140
        %v4190 = vadd.f32 %v246, %v4142
        %v4191 = vadd.f32 %v247, %v4145
        %v4192 = vadd.f32 %v248, %v4147
        %v4193 = vadd.f32 %v249, %v4150
        %v4194 = vadd.f32 %v250, %v4152
        %v4195 = vadd.f32 %v251, %v4155
        %v4196 = vadd.f32 %v252, %v4157
        %v4197 = vadd.f32 %v253, %v4160
        %v4198 = vadd.f32 %v254, %v4162
        %v4199 = vadd.f32 %v255, %v4165
        %v4200 = vadd.f32 %v256, %v4167
        %4201 = vst [vmem:[%s217] sm:$0xff] %v4169
        %4202 = vst [vmem:[%s217 + $0x8] sm:$0xff] %v4170
        %4203 = vst [vmem:[%s217 + $0x10] sm:$0xff] %v4171
        %4204 = vst [vmem:[%s217 + $0x18] sm:$0xff] %v4172
        %4205 = vst [vmem:[%s217 + $0x20] sm:$0xff] %v4173
        %4206 = vst [vmem:[%s217 + $0x28] sm:$0xff] %v4174
        %4207 = vst [vmem:[%s217 + $0x30] sm:$0xff] %v4175
        %4208 = vst [vmem:[%s217 + $0x38] sm:$0xff] %v4176
        %4209 = vst [vmem:[%s217 + $0x40] sm:$0xff] %v4177
        %4210 = vst [vmem:[%s217 + $0x48] sm:$0xff] %v4178
        %4211 = vst [vmem:[%s217 + $0x50] sm:$0xff] %v4179
        %4212 = vst [vmem:[%s217 + $0x58] sm:$0xff] %v4180
        %4213 = vst [vmem:[%s217 + $0x60] sm:$0xff] %v4181
        %4214 = vst [vmem:[%s217 + $0x68] sm:$0xff] %v4182
        %4215 = vst [vmem:[%s217 + $0x70] sm:$0xff] %v4183
        %4216 = vst [vmem:[%s217 + $0x78] sm:$0xff] %v4184
        %4217 = vst [vmem:[%s217 + $0x80] sm:$0xff] %v4185
        %4218 = vst [vmem:[%s217 + $0x88] sm:$0xff] %v4186
        %4219 = vst [vmem:[%s217 + $0x90] sm:$0xff] %v4187
        %4220 = vst [vmem:[%s217 + $0x98] sm:$0xff] %v4188
        %4221 = vst [vmem:[%s217 + $0xa0] sm:$0xff] %v4189
        %4222 = vst [vmem:[%s217 + $0xa8] sm:$0xff] %v4190
        %4223 = vst [vmem:[%s217 + $0xb0] sm:$0xff] %v4191
        %4224 = vst [vmem:[%s217 + $0xb8] sm:$0xff] %v4192
        %4225 = vst [vmem:[%s217 + $0xc0] sm:$0xff] %v4193
        %4226 = vst [vmem:[%s217 + $0xc8] sm:$0xff] %v4194
        %4227 = vst [vmem:[%s217 + $0xd0] sm:$0xff] %v4195
        %4228 = vst [vmem:[%s217 + $0xd8] sm:$0xff] %v4196
        %4229 = vst [vmem:[%s217 + $0xe0] sm:$0xff] %v4197
        %4230 = vst [vmem:[%s217 + $0xe8] sm:$0xff] %v4198
        %4231 = vst [vmem:[%s217 + $0xf0] sm:$0xff] %v4199
        %4232 = vst [vmem:[%s217 + $0xf8] sm:$0xff] %v4200
        %s4233 = sand.u32 %s137, 1
        %s4234 = scalar_lea.sflag [#allocation4], %s4233
        %s4235 = sand.u32 %s137, 1
        %s4236 = smul.addr %s4235, 256
        %s4237 = scalar_lea.vmem [#allocation3], %s4236
        // Predicated region
        $region41: #{tpu_custom_call.1} parent=39 // pred_check
          %p4238 = pneg %p147
        $region42: #{tpu_custom_call.1} parent=39 // pred_check_branch
          %4240 = sbr.rel (%p4238) target = $region44
        $region43: #{tpu_custom_call.1} parent=39 // pred_region
          %4242 = vsyncadd %s4234, 0
          %s4243 = smul.addr %s19, 32
          %s4244 = smul.addr %s4243, 8
          %s4245 = scalar_lea.hbm %s5, %s4244
          %s4246 = sshll.u32 %s4237, 4
          %s4247 = int_to_ptr.vmem [resolvable:$true] %s4246
          %s4248 = sshll.u32 %s4245, 4
          %s4249 = int_to_ptr.hbm [resolvable:$true] %s4248
          %4254 = dma.vmem_to_hbm [thread:$0]  %s4247, 4096, %s4249, %s4234, 128, 128, 8
        $region44: #{tpu_custom_call.1} parent=39 // pred_fallthru
          _
      $region40: #{tpu_custom_call.1} parent=5 // pred_fallthru
        _
      %p4255 = scmp.le.s32.totalorder 2, %s14
      // Predicated region
      $region45: #{tpu_custom_call.1} parent=5 // pred_check
        %p4256 = pneg %p4255
      $region46: #{tpu_custom_call.1} parent=5 // pred_check_branch
        %4258 = sbr.rel (%p4256) target = $region48
      $region47: #{tpu_custom_call.1} parent=5 // pred_region
        %s4259 = ssub.s32 %s14, 2
        // Predicated region
        $region49: #{tpu_custom_call.1} parent=47 // pred_check
          %p4260 = pneg %p153
        $region50: #{tpu_custom_call.1} parent=47 // pred_check_branch
          %4262 = sbr.rel (%p4260) target = $region52
        $region51: #{tpu_custom_call.1} parent=47 // pred_region
          %s4263 = sand.u32 %s138, 1
          %s4264 = scalar_lea.sflag [#allocation4], %s4263
          %s4265 = sand.u32 %s138, 1
          %s4266 = smul.addr %s4265, 256
          %s4267 = scalar_lea.vmem [#allocation3], %s4266
          %4269 = dma.done %s4264, 4096
        $region52: #{tpu_custom_call.1} parent=47 // pred_fallthru
          _
      $region48: #{tpu_custom_call.1} parent=5 // pred_fallthru
        _
    $region6: #{tpu_custom_call.1} parent=1 // loop_footer
      %s18 = sadd.s32 1, %s14
    $region7: #{tpu_custom_call.1} parent=1 // loop_footer_branch
      %13 = sbr.rel target = $region3
    $region8: #{tpu_custom_call.1} parent=1 // loop_exit
      _
    %4270 = vsyncpa [#allocation4], 1
    %s4271 = scalar_lea.sflag [#allocation4], 1
    %4272 = vsyncpa %s4271, 1

</llo_original>
